<compile_context>
chip_gen: v6e
topology: v6e:2x2x1
jax: 0.10.0
libtpu: 0.0.40
codegen_flags: <defaults>
</compile_context>

<pallas_src>
import jax
import jax.numpy as jnp
from jax import lax
from jax.experimental import pallas as pl
from jax.experimental.pallas import tpu as pltpu

# conv stages: (H, W, Cin, Cout); each is followed by a 2x2 / stride-2 avg pool.
_LAYERS = ((32, 32, 4, 8), (16, 16, 8, 16), (8, 8, 16, 16))
_H3, _W3, _C3 = 4, 4, 16          # feature map entering the classifier head


# ------------------------------------------------------------- fused kernel --
def _fused_kernel(
    x_ref,
    s1_ref, m1_ref, cb1_ref, ph1_ref, pw1_ref,
    s2_ref, m2_ref, cb2_ref, ph2_ref, pw2_ref,
    s3_ref, m3_ref, cb3_ref, ph3_ref, pw3_ref,
    lsel_ref, w1h_ref, b1_ref, w2_ref, b2_ref,
    o_ref,
):
    def dot(a, b):
        return jnp.dot(a, b, preferred_element_type=jnp.float32)

    def conv_relu_pool(x, s_ref, m_ref, cb_ref, ph_ref, pw_ref):
        # 3x3 SAME conv = sum over the 3 kernel rows of (row-shift @ X) @ band.
        acc = dot(dot(s_ref[0], x), m_ref[0])
        acc = acc + dot(dot(s_ref[1], x), m_ref[1])
        acc = acc + dot(dot(s_ref[2], x), m_ref[2])
        y = jnp.maximum(acc + cb_ref[...], 0.0)            # bias + ReLU
        # DepthwiseConv(k=2, s=2, w=1/4) == 2x2 avg pool == Ph @ y @ Pw
        return dot(ph_ref[...], dot(y, pw_ref[...]))

    x = x_ref[0]                                                        # (32, 128)
    x = conv_relu_pool(x, s1_ref, m1_ref, cb1_ref, ph1_ref, pw1_ref)    # (16, 128)
    x = conv_relu_pool(x, s2_ref, m2_ref, cb2_ref, ph2_ref, pw2_ref)    # ( 8, 128)
    x = conv_relu_pool(x, s3_ref, m3_ref, cb3_ref, ph3_ref, pw3_ref)    # ( 4,  64)

    # NCHW-order flatten + fc1, folded into 4 per-row matmuls against
    # row-permuted fc1 weights (w1h[h] has shape (W3*C3, hidden)).
    h = dot(dot(lsel_ref[0], x), w1h_ref[0])
    h = h + dot(dot(lsel_ref[1], x), w1h_ref[1])
    h = h + dot(dot(lsel_ref[2], x), w1h_ref[2])
    h = h + dot(dot(lsel_ref[3], x), w1h_ref[3])
    h = jnp.maximum(h + b1_ref[...], 0.0)                               # (1, 16)
    o_ref[0] = dot(h, w2_ref[...]) + b2_ref[...]                        # (1, classes)


# ------------------------------------------- constant operand preparation ----
def _shift_mats(H):
    # S_d[h, h'] = 1 if h' == h + d  (d = -1, 0, 1)  -> zero padding at edges.
    i = jnp.arange(H)
    return jnp.stack([(i[None, :] == i[:, None] + d).astype(jnp.float32)
                      for d in (-1, 0, 1)])                             # (3, H, H)


def _band_mats(w_hwio, W):
    # M_kh[(w',ci), (w,co)] = K[kh, w'-w+1, ci, co]   (block tri-diagonal over w)
    i = jnp.arange(W)
    mats = []
    for kh in range(3):
        m = None
        for kw in range(3):
            sel = (i[:, None] == i[None, :] + (kw - 1)).astype(jnp.float32)
            blk = jnp.kron(sel, w_hwio[kh, kw].astype(jnp.float32))
            m = blk if m is None else m + blk
        mats.append(m)
    return jnp.stack(mats)                                              # (3, W*Cin, W*Cout)


def _pool_mats(H, W, C):
    # Ph @ Y @ Pw == 0.25 * sum over each 2x2 spatial window (per channel).
    ph = 0.5 * (jnp.arange(H // 2)[:, None] ==
                jnp.arange(H)[None, :] // 2).astype(jnp.float32)        # (H/2, H)
    selw = (jnp.arange(W)[:, None] // 2 ==
            jnp.arange(W // 2)[None, :]).astype(jnp.float32)            # (W, W/2)
    pw = jnp.kron(selw, 0.5 * jnp.eye(C, dtype=jnp.float32))            # (W*C, W/2*C)
    return ph, pw


def prepare_params(p):
    """Build the constant operand matrices for the fused kernel (run once)."""
    ops = []
    for li, (H, W, cin, cout) in enumerate(_LAYERS, start=1):
        w = p[f'w{li}'].astype(jnp.float32)            # (3,3,cin,cout) HWIO
        b = p[f'b{li}'].astype(jnp.float32)            # (cout,)
        ph, pw = _pool_mats(H, W, cout)
        ops += [
            _shift_mats(H),                            # (3, H, H)
            _band_mats(w, W),                          # (3, W*cin, W*cout)
            jnp.tile(b, W).reshape(1, W * cout),       # conv bias, tiled over w
            ph, pw,
        ]
    # classifier head: fold NCHW-order flatten into fc1's weight layout.
    lsel = jnp.stack([(jnp.arange(_H3) == h).astype(jnp.float32)[None, :]
                      for h in range(_H3)])            # (4, 1, 4)
    wf1 = p['wf1'].astype(jnp.float32).reshape(_C3, _H3, _W3, -1)   # (c, h, w, out)
    w1h = jnp.stack([jnp.transpose(wf1[:, h], (1, 0, 2)).reshape(_W3 * _C3, -1)
                     for h in range(_H3)])             # (4, 64, hidden)
    ops += [
        lsel, w1h,
        p['bf1'].astype(jnp.float32).reshape(1, -1),
        p['wf2'].astype(jnp.float32),
        p['bf2'].astype(jnp.float32).reshape(1, -1),
    ]
    return tuple(ops)


# --------------------------------------------------------------- forward -----
def soli_cnn_taskb1_forward_prepared(x_nchw, ops):
    B, C0, H0, W0 = x_nchw.shape
    assert (C0, H0, W0) == (4, 32, 32), "SoliCNNTaskB1 expects (B, 4, 32, 32) inputs"
    num_classes = ops[-1].shape[-1]
    # NCHW -> lane-dense (B, H, W*Cin) slab; only remaining host-side layout glue.
    x = jnp.transpose(x_nchw.astype(jnp.float32), (0, 2, 3, 1)).reshape(B, H0, W0 * C0)

    def const_spec(a):
        return pl.BlockSpec(a.shape, lambda b, _n=a.ndim: (0,) * _n)

    in_specs = [pl.BlockSpec((1, H0, W0 * C0), lambda b: (b, 0, 0))]
    in_specs += [const_spec(a) for a in ops]

    out = pl.pallas_call(
        _fused_kernel,
        out_shape=jax.ShapeDtypeStruct((B, 1, num_classes), jnp.float32),
        grid=(B,),
        in_specs=in_specs,
        out_specs=pl.BlockSpec((1, 1, num_classes), lambda b: (b, 0, 0)),
        compiler_params=pltpu.CompilerParams(
            dimension_semantics=("parallel",)),
    )(x, *ops)
    return out.reshape(B, num_classes)


def soli_cnn_taskb1_forward(x_nchw, params):
    return soli_cnn_taskb1_forward_prepared(x_nchw, prepare_params(params))


# ------------------------------------------------------------- parameters ----
def init_params(key, num_classes=11):
    ks = jax.random.split(key, 10)

    def cw(k, cin, cout):
        return 0.1 * jax.random.normal(k, (3, 3, cin, cout), jnp.float32)  # HWIO

    return dict(
        w1=cw(ks[0], 4, 8),    b1=0.1 * jax.random.normal(ks[1], (8,), jnp.float32),
        w2=cw(ks[2], 8, 16),   b2=0.1 * jax.random.normal(ks[3], (16,), jnp.float32),
        w3=cw(ks[4], 16, 16),  b3=0.1 * jax.random.normal(ks[5], (16,), jnp.float32),
        wf1=0.1 * jax.random.normal(ks[6], (16 * 4 * 4, 16), jnp.float32),
        bf1=0.1 * jax.random.normal(ks[7], (16,), jnp.float32),
        wf2=0.1 * jax.random.normal(ks[8], (16, num_classes), jnp.float32),
        bf2=0.1 * jax.random.normal(ks[9], (num_classes,), jnp.float32),
    )


# ----------------------------------------------------- pure-JAX reference ----
def ref_forward(x_nchw, p):
    x = jnp.transpose(x_nchw, (0, 2, 3, 1)).astype(jnp.float32)

    def conv(x, w, b):
        y = lax.conv_general_dilated(x, w, (1, 1), 'SAME',
                                     dimension_numbers=('NHWC', 'HWIO', 'NHWC'))
        return jax.nn.relu(y + b)

    def pool(x):
        return 0.25 * (x[:, 0::2, 0::2, :] + x[:, 0::2, 1::2, :] +
                       x[:, 1::2, 0::2, :] + x[:, 1::2, 1::2, :])

    x = pool(conv(x, p['w1'], p['b1']))
    x = pool(conv(x, p['w2'], p['b2']))
    x = pool(conv(x, p['w3'], p['b3']))
    flat = jnp.transpose(x, (0, 3, 1, 2)).reshape(x.shape[0], -1)   # NCHW flatten
    h = jax.nn.relu(flat @ p['wf1'] + p['bf1'])
    return h @ p['wf2'] + p['bf2']


if __name__ == "__main__":
    key = jax.random.PRNGKey(0)
    kx, kp = jax.random.split(key)
    # input shape implied by the module: (B, 4, 32, 32) NCHW (32 -> /2/2/2 -> 4)
    x = jax.random.normal(kx, (2, 4, 32, 32), jnp.float32)
    params = init_params(kp, num_classes=11)

    ops = prepare_params(params)                    # constant prep, off the hot path
    fwd = jax.jit(soli_cnn_taskb1_forward_prepared)
    out = jax.block_until_ready(fwd(x, ops))
    assert out.shape == (2, 11), out.shape

    ref = ref_forward(x, params)
    max_err = float(jnp.max(jnp.abs(out - ref)))
    assert jnp.allclose(out, ref, atol=5e-2, rtol=5e-2), \
        f"mismatch: max abs err {max_err}"
    print("KERNEL_OK")
</pallas_src>

<mosaic_0001>
module attributes {stable_mosaic.version = 11 : i64} {
  func.func @_fused_kernel(%arg0: i32, %arg1: memref<1x32x128xf32, #tpu.memory_space<vmem>>, %arg2: memref<3x32x32xf32, #tpu.memory_space<vmem>>, %arg3: memref<3x128x256xf32, #tpu.memory_space<vmem>>, %arg4: memref<1x256xf32, #tpu.memory_space<vmem>>, %arg5: memref<16x32xf32, #tpu.memory_space<vmem>>, %arg6: memref<256x128xf32, #tpu.memory_space<vmem>>, %arg7: memref<3x16x16xf32, #tpu.memory_space<vmem>>, %arg8: memref<3x128x256xf32, #tpu.memory_space<vmem>>, %arg9: memref<1x256xf32, #tpu.memory_space<vmem>>, %arg10: memref<8x16xf32, #tpu.memory_space<vmem>>, %arg11: memref<256x128xf32, #tpu.memory_space<vmem>>, %arg12: memref<3x8x8xf32, #tpu.memory_space<vmem>>, %arg13: memref<3x128x128xf32, #tpu.memory_space<vmem>>, %arg14: memref<1x128xf32, #tpu.memory_space<vmem>>, %arg15: memref<4x8xf32, #tpu.memory_space<vmem>>, %arg16: memref<128x64xf32, #tpu.memory_space<vmem>>, %arg17: memref<4x1x4xf32, #tpu.memory_space<vmem>>, %arg18: memref<4x64x16xf32, #tpu.memory_space<vmem>>, %arg19: memref<1x16xf32, #tpu.memory_space<vmem>>, %arg20: memref<16x11xf32, #tpu.memory_space<vmem>>, %arg21: memref<1x11xf32, #tpu.memory_space<vmem>>, %arg22: memref<1x1x11xf32, #tpu.memory_space<vmem>>) attributes {dimension_semantics = [#tpu.dimension_semantics<parallel>], iteration_bounds = array<i64: 2>, scalar_prefetch = 0 : i64, scratch_operands = 0 : i64, tpu.core_type = #tpu.core_type<tc>, window_params = [{transform_indices = @transform_0, window_bounds = array<i64: 1, 32, 128>}, {pipeline_mode = #tpu.pipeline_mode<synchronous>, transform_indices = @transform_1, window_bounds = array<i64: 3, 32, 32>}, {pipeline_mode = #tpu.pipeline_mode<synchronous>, transform_indices = @transform_2, window_bounds = array<i64: 3, 128, 256>}, {pipeline_mode = #tpu.pipeline_mode<synchronous>, transform_indices = @transform_3, window_bounds = array<i64: 1, 256>}, {pipeline_mode = #tpu.pipeline_mode<synchronous>, transform_indices = @transform_4, window_bounds = array<i64: 16, 32>}, {pipeline_mode = #tpu.pipeline_mode<synchronous>, transform_indices = @transform_5, window_bounds = array<i64: 256, 128>}, {pipeline_mode = #tpu.pipeline_mode<synchronous>, transform_indices = @transform_6, window_bounds = array<i64: 3, 16, 16>}, {pipeline_mode = #tpu.pipeline_mode<synchronous>, transform_indices = @transform_7, window_bounds = array<i64: 3, 128, 256>}, {pipeline_mode = #tpu.pipeline_mode<synchronous>, transform_indices = @transform_8, window_bounds = array<i64: 1, 256>}, {pipeline_mode = #tpu.pipeline_mode<synchronous>, transform_indices = @transform_9, window_bounds = array<i64: 8, 16>}, {pipeline_mode = #tpu.pipeline_mode<synchronous>, transform_indices = @transform_10, window_bounds = array<i64: 256, 128>}, {pipeline_mode = #tpu.pipeline_mode<synchronous>, transform_indices = @transform_11, window_bounds = array<i64: 3, 8, 8>}, {pipeline_mode = #tpu.pipeline_mode<synchronous>, transform_indices = @transform_12, window_bounds = array<i64: 3, 128, 128>}, {pipeline_mode = #tpu.pipeline_mode<synchronous>, transform_indices = @transform_13, window_bounds = array<i64: 1, 128>}, {pipeline_mode = #tpu.pipeline_mode<synchronous>, transform_indices = @transform_14, window_bounds = array<i64: 4, 8>}, {pipeline_mode = #tpu.pipeline_mode<synchronous>, transform_indices = @transform_15, window_bounds = array<i64: 128, 64>}, {pipeline_mode = #tpu.pipeline_mode<synchronous>, transform_indices = @transform_16, window_bounds = array<i64: 4, 1, 4>}, {pipeline_mode = #tpu.pipeline_mode<synchronous>, transform_indices = @transform_17, window_bounds = array<i64: 4, 64, 16>}, {pipeline_mode = #tpu.pipeline_mode<synchronous>, transform_indices = @transform_18, window_bounds = array<i64: 1, 16>}, {pipeline_mode = #tpu.pipeline_mode<synchronous>, transform_indices = @transform_19, window_bounds = array<i64: 16, 11>}, {pipeline_mode = #tpu.pipeline_mode<synchronous>, transform_indices = @transform_20, window_bounds = array<i64: 1, 11>}, {transform_indices = @transform_21, window_bounds = array<i64: 1, 1, 11>}]} {
    %c0 = arith.constant 0 : index
    %c0_0 = arith.constant 0 : index
    %c0_1 = arith.constant 0 : index
    %0 = vector.load %arg1[%c0, %c0_0, %c0_1] : memref<1x32x128xf32, #tpu.memory_space<vmem>>, vector<1x32x128xf32>
    %1 = vector.shape_cast %0 : vector<1x32x128xf32> to vector<32x128xf32>
    %c0_2 = arith.constant 0 : index
    %c0_3 = arith.constant 0 : index
    %c0_4 = arith.constant 0 : index
    %2 = vector.load %arg2[%c0_2, %c0_3, %c0_4] : memref<3x32x32xf32, #tpu.memory_space<vmem>>, vector<1x32x32xf32>
    %3 = vector.shape_cast %2 : vector<1x32x32xf32> to vector<32x32xf32>
    %cst = arith.constant dense<0.000000e+00> : vector<32x128xf32>
    %4 = tpu.matmul %3, %1, %cst {dimension_numbers = #tpu.dot_dimension_numbers<[1], [0], [0], [1], [0, 0, 1, 1], [], []>} : vector<32x32xf32>, vector<32x128xf32>, vector<32x128xf32> -> vector<32x128xf32>
    %c0_5 = arith.constant 0 : index
    %c0_6 = arith.constant 0 : index
    %c0_7 = arith.constant 0 : index
    %5 = vector.load %arg3[%c0_5, %c0_6, %c0_7] : memref<3x128x256xf32, #tpu.memory_space<vmem>>, vector<1x128x256xf32>
    %6 = vector.shape_cast %5 : vector<1x128x256xf32> to vector<128x256xf32>
    %cst_8 = arith.constant dense<0.000000e+00> : vector<32x256xf32>
    %7 = tpu.matmul %4, %6, %cst_8 {dimension_numbers = #tpu.dot_dimension_numbers<[1], [0], [0], [1], [0, 0, 1, 1], [], []>} : vector<32x128xf32>, vector<128x256xf32>, vector<32x256xf32> -> vector<32x256xf32>
    %c1 = arith.constant 1 : index
    %c0_9 = arith.constant 0 : index
    %c0_10 = arith.constant 0 : index
    %8 = vector.load %arg2[%c1, %c0_9, %c0_10] : memref<3x32x32xf32, #tpu.memory_space<vmem>>, vector<1x32x32xf32>
    %9 = vector.shape_cast %8 : vector<1x32x32xf32> to vector<32x32xf32>
    %cst_11 = arith.constant dense<0.000000e+00> : vector<32x128xf32>
    %10 = tpu.matmul %9, %1, %cst_11 {dimension_numbers = #tpu.dot_dimension_numbers<[1], [0], [0], [1], [0, 0, 1, 1], [], []>} : vector<32x32xf32>, vector<32x128xf32>, vector<32x128xf32> -> vector<32x128xf32>
    %c1_12 = arith.constant 1 : index
    %c0_13 = arith.constant 0 : index
    %c0_14 = arith.constant 0 : index
    %11 = vector.load %arg3[%c1_12, %c0_13, %c0_14] : memref<3x128x256xf32, #tpu.memory_space<vmem>>, vector<1x128x256xf32>
    %12 = vector.shape_cast %11 : vector<1x128x256xf32> to vector<128x256xf32>
    %cst_15 = arith.constant dense<0.000000e+00> : vector<32x256xf32>
    %13 = tpu.matmul %10, %12, %cst_15 {dimension_numbers = #tpu.dot_dimension_numbers<[1], [0], [0], [1], [0, 0, 1, 1], [], []>} : vector<32x128xf32>, vector<128x256xf32>, vector<32x256xf32> -> vector<32x256xf32>
    %14 = arith.addf %7, %13 : vector<32x256xf32>
    %c2 = arith.constant 2 : index
    %c0_16 = arith.constant 0 : index
    %c0_17 = arith.constant 0 : index
    %15 = vector.load %arg2[%c2, %c0_16, %c0_17] : memref<3x32x32xf32, #tpu.memory_space<vmem>>, vector<1x32x32xf32>
    %16 = vector.shape_cast %15 : vector<1x32x32xf32> to vector<32x32xf32>
    %cst_18 = arith.constant dense<0.000000e+00> : vector<32x128xf32>
    %17 = tpu.matmul %16, %1, %cst_18 {dimension_numbers = #tpu.dot_dimension_numbers<[1], [0], [0], [1], [0, 0, 1, 1], [], []>} : vector<32x32xf32>, vector<32x128xf32>, vector<32x128xf32> -> vector<32x128xf32>
    %c2_19 = arith.constant 2 : index
    %c0_20 = arith.constant 0 : index
    %c0_21 = arith.constant 0 : index
    %18 = vector.load %arg3[%c2_19, %c0_20, %c0_21] : memref<3x128x256xf32, #tpu.memory_space<vmem>>, vector<1x128x256xf32>
    %19 = vector.shape_cast %18 : vector<1x128x256xf32> to vector<128x256xf32>
    %cst_22 = arith.constant dense<0.000000e+00> : vector<32x256xf32>
    %20 = tpu.matmul %17, %19, %cst_22 {dimension_numbers = #tpu.dot_dimension_numbers<[1], [0], [0], [1], [0, 0, 1, 1], [], []>} : vector<32x128xf32>, vector<128x256xf32>, vector<32x256xf32> -> vector<32x256xf32>
    %21 = arith.addf %14, %20 : vector<32x256xf32>
    %c0_23 = arith.constant 0 : index
    %c0_24 = arith.constant 0 : index
    %22 = vector.load %arg4[%c0_23, %c0_24] : memref<1x256xf32, #tpu.memory_space<vmem>>, vector<1x256xf32>
    %23 = vector.broadcast %22 : vector<1x256xf32> to vector<32x256xf32>
    %24 = arith.addf %21, %23 : vector<32x256xf32>
    %cst_25 = arith.constant 0.000000e+00 : f32
    %25 = vector.broadcast %cst_25 : f32 to vector<32x256xf32>
    %26 = arith.maximumf %24, %25 : vector<32x256xf32>
    %c0_26 = arith.constant 0 : index
    %c0_27 = arith.constant 0 : index
    %27 = vector.load %arg5[%c0_26, %c0_27] : memref<16x32xf32, #tpu.memory_space<vmem>>, vector<16x32xf32>
    %c0_28 = arith.constant 0 : index
    %c0_29 = arith.constant 0 : index
    %28 = vector.load %arg6[%c0_28, %c0_29] : memref<256x128xf32, #tpu.memory_space<vmem>>, vector<256x128xf32>
    %cst_30 = arith.constant dense<0.000000e+00> : vector<32x128xf32>
    %29 = tpu.matmul %26, %28, %cst_30 {dimension_numbers = #tpu.dot_dimension_numbers<[1], [0], [0], [1], [0, 0, 1, 1], [], []>} : vector<32x256xf32>, vector<256x128xf32>, vector<32x128xf32> -> vector<32x128xf32>
    %cst_31 = arith.constant dense<0.000000e+00> : vector<16x128xf32>
    %30 = tpu.matmul %27, %29, %cst_31 {dimension_numbers = #tpu.dot_dimension_numbers<[1], [0], [0], [1], [0, 0, 1, 1], [], []>} : vector<16x32xf32>, vector<32x128xf32>, vector<16x128xf32> -> vector<16x128xf32>
    %c0_32 = arith.constant 0 : index
    %c0_33 = arith.constant 0 : index
    %c0_34 = arith.constant 0 : index
    %31 = vector.load %arg7[%c0_32, %c0_33, %c0_34] : memref<3x16x16xf32, #tpu.memory_space<vmem>>, vector<1x16x16xf32>
    %32 = vector.shape_cast %31 : vector<1x16x16xf32> to vector<16x16xf32>
    %cst_35 = arith.constant dense<0.000000e+00> : vector<16x128xf32>
    %33 = tpu.matmul %32, %30, %cst_35 {dimension_numbers = #tpu.dot_dimension_numbers<[1], [0], [0], [1], [0, 0, 1, 1], [], []>} : vector<16x16xf32>, vector<16x128xf32>, vector<16x128xf32> -> vector<16x128xf32>
    %c0_36 = arith.constant 0 : index
    %c0_37 = arith.constant 0 : index
    %c0_38 = arith.constant 0 : index
    %34 = vector.load %arg8[%c0_36, %c0_37, %c0_38] : memref<3x128x256xf32, #tpu.memory_space<vmem>>, vector<1x128x256xf32>
    %35 = vector.shape_cast %34 : vector<1x128x256xf32> to vector<128x256xf32>
    %cst_39 = arith.constant dense<0.000000e+00> : vector<16x256xf32>
    %36 = tpu.matmul %33, %35, %cst_39 {dimension_numbers = #tpu.dot_dimension_numbers<[1], [0], [0], [1], [0, 0, 1, 1], [], []>} : vector<16x128xf32>, vector<128x256xf32>, vector<16x256xf32> -> vector<16x256xf32>
    %c1_40 = arith.constant 1 : index
    %c0_41 = arith.constant 0 : index
    %c0_42 = arith.constant 0 : index
    %37 = vector.load %arg7[%c1_40, %c0_41, %c0_42] : memref<3x16x16xf32, #tpu.memory_space<vmem>>, vector<1x16x16xf32>
    %38 = vector.shape_cast %37 : vector<1x16x16xf32> to vector<16x16xf32>
    %cst_43 = arith.constant dense<0.000000e+00> : vector<16x128xf32>
    %39 = tpu.matmul %38, %30, %cst_43 {dimension_numbers = #tpu.dot_dimension_numbers<[1], [0], [0], [1], [0, 0, 1, 1], [], []>} : vector<16x16xf32>, vector<16x128xf32>, vector<16x128xf32> -> vector<16x128xf32>
    %c1_44 = arith.constant 1 : index
    %c0_45 = arith.constant 0 : index
    %c0_46 = arith.constant 0 : index
    %40 = vector.load %arg8[%c1_44, %c0_45, %c0_46] : memref<3x128x256xf32, #tpu.memory_space<vmem>>, vector<1x128x256xf32>
    %41 = vector.shape_cast %40 : vector<1x128x256xf32> to vector<128x256xf32>
    %cst_47 = arith.constant dense<0.000000e+00> : vector<16x256xf32>
    %42 = tpu.matmul %39, %41, %cst_47 {dimension_numbers = #tpu.dot_dimension_numbers<[1], [0], [0], [1], [0, 0, 1, 1], [], []>} : vector<16x128xf32>, vector<128x256xf32>, vector<16x256xf32> -> vector<16x256xf32>
    %43 = arith.addf %36, %42 : vector<16x256xf32>
    %c2_48 = arith.constant 2 : index
    %c0_49 = arith.constant 0 : index
    %c0_50 = arith.constant 0 : index
    %44 = vector.load %arg7[%c2_48, %c0_49, %c0_50] : memref<3x16x16xf32, #tpu.memory_space<vmem>>, vector<1x16x16xf32>
    %45 = vector.shape_cast %44 : vector<1x16x16xf32> to vector<16x16xf32>
    %cst_51 = arith.constant dense<0.000000e+00> : vector<16x128xf32>
    %46 = tpu.matmul %45, %30, %cst_51 {dimension_numbers = #tpu.dot_dimension_numbers<[1], [0], [0], [1], [0, 0, 1, 1], [], []>} : vector<16x16xf32>, vector<16x128xf32>, vector<16x128xf32> -> vector<16x128xf32>
    %c2_52 = arith.constant 2 : index
    %c0_53 = arith.constant 0 : index
    %c0_54 = arith.constant 0 : index
    %47 = vector.load %arg8[%c2_52, %c0_53, %c0_54] : memref<3x128x256xf32, #tpu.memory_space<vmem>>, vector<1x128x256xf32>
    %48 = vector.shape_cast %47 : vector<1x128x256xf32> to vector<128x256xf32>
    %cst_55 = arith.constant dense<0.000000e+00> : vector<16x256xf32>
    %49 = tpu.matmul %46, %48, %cst_55 {dimension_numbers = #tpu.dot_dimension_numbers<[1], [0], [0], [1], [0, 0, 1, 1], [], []>} : vector<16x128xf32>, vector<128x256xf32>, vector<16x256xf32> -> vector<16x256xf32>
    %50 = arith.addf %43, %49 : vector<16x256xf32>
    %c0_56 = arith.constant 0 : index
    %c0_57 = arith.constant 0 : index
    %51 = vector.load %arg9[%c0_56, %c0_57] : memref<1x256xf32, #tpu.memory_space<vmem>>, vector<1x256xf32>
    %52 = vector.broadcast %51 : vector<1x256xf32> to vector<16x256xf32>
    %53 = arith.addf %50, %52 : vector<16x256xf32>
    %cst_58 = arith.constant 0.000000e+00 : f32
    %54 = vector.broadcast %cst_58 : f32 to vector<16x256xf32>
    %55 = arith.maximumf %53, %54 : vector<16x256xf32>
    %c0_59 = arith.constant 0 : index
    %c0_60 = arith.constant 0 : index
    %56 = vector.load %arg10[%c0_59, %c0_60] : memref<8x16xf32, #tpu.memory_space<vmem>>, vector<8x16xf32>
    %c0_61 = arith.constant 0 : index
    %c0_62 = arith.constant 0 : index
    %57 = vector.load %arg11[%c0_61, %c0_62] : memref<256x128xf32, #tpu.memory_space<vmem>>, vector<256x128xf32>
    %cst_63 = arith.constant dense<0.000000e+00> : vector<16x128xf32>
    %58 = tpu.matmul %55, %57, %cst_63 {dimension_numbers = #tpu.dot_dimension_numbers<[1], [0], [0], [1], [0, 0, 1, 1], [], []>} : vector<16x256xf32>, vector<256x128xf32>, vector<16x128xf32> -> vector<16x128xf32>
    %cst_64 = arith.constant dense<0.000000e+00> : vector<8x128xf32>
    %59 = tpu.matmul %56, %58, %cst_64 {dimension_numbers = #tpu.dot_dimension_numbers<[1], [0], [0], [1], [0, 0, 1, 1], [], []>} : vector<8x16xf32>, vector<16x128xf32>, vector<8x128xf32> -> vector<8x128xf32>
    %c0_65 = arith.constant 0 : index
    %c0_66 = arith.constant 0 : index
    %c0_67 = arith.constant 0 : index
    %60 = vector.load %arg12[%c0_65, %c0_66, %c0_67] : memref<3x8x8xf32, #tpu.memory_space<vmem>>, vector<1x8x8xf32>
    %61 = vector.shape_cast %60 : vector<1x8x8xf32> to vector<8x8xf32>
    %cst_68 = arith.constant dense<0.000000e+00> : vector<8x128xf32>
    %62 = tpu.matmul %61, %59, %cst_68 {dimension_numbers = #tpu.dot_dimension_numbers<[1], [0], [0], [1], [0, 0, 1, 1], [], []>} : vector<8x8xf32>, vector<8x128xf32>, vector<8x128xf32> -> vector<8x128xf32>
    %c0_69 = arith.constant 0 : index
    %c0_70 = arith.constant 0 : index
    %c0_71 = arith.constant 0 : index
    %63 = vector.load %arg13[%c0_69, %c0_70, %c0_71] : memref<3x128x128xf32, #tpu.memory_space<vmem>>, vector<1x128x128xf32>
    %64 = vector.shape_cast %63 : vector<1x128x128xf32> to vector<128x128xf32>
    %cst_72 = arith.constant dense<0.000000e+00> : vector<8x128xf32>
    %65 = tpu.matmul %62, %64, %cst_72 {dimension_numbers = #tpu.dot_dimension_numbers<[1], [0], [0], [1], [0, 0, 1, 1], [], []>} : vector<8x128xf32>, vector<128x128xf32>, vector<8x128xf32> -> vector<8x128xf32>
    %c1_73 = arith.constant 1 : index
    %c0_74 = arith.constant 0 : index
    %c0_75 = arith.constant 0 : index
    %66 = vector.load %arg12[%c1_73, %c0_74, %c0_75] : memref<3x8x8xf32, #tpu.memory_space<vmem>>, vector<1x8x8xf32>
    %67 = vector.shape_cast %66 : vector<1x8x8xf32> to vector<8x8xf32>
    %cst_76 = arith.constant dense<0.000000e+00> : vector<8x128xf32>
    %68 = tpu.matmul %67, %59, %cst_76 {dimension_numbers = #tpu.dot_dimension_numbers<[1], [0], [0], [1], [0, 0, 1, 1], [], []>} : vector<8x8xf32>, vector<8x128xf32>, vector<8x128xf32> -> vector<8x128xf32>
    %c1_77 = arith.constant 1 : index
    %c0_78 = arith.constant 0 : index
    %c0_79 = arith.constant 0 : index
    %69 = vector.load %arg13[%c1_77, %c0_78, %c0_79] : memref<3x128x128xf32, #tpu.memory_space<vmem>>, vector<1x128x128xf32>
    %70 = vector.shape_cast %69 : vector<1x128x128xf32> to vector<128x128xf32>
    %cst_80 = arith.constant dense<0.000000e+00> : vector<8x128xf32>
    %71 = tpu.matmul %68, %70, %cst_80 {dimension_numbers = #tpu.dot_dimension_numbers<[1], [0], [0], [1], [0, 0, 1, 1], [], []>} : vector<8x128xf32>, vector<128x128xf32>, vector<8x128xf32> -> vector<8x128xf32>
    %72 = arith.addf %65, %71 : vector<8x128xf32>
    %c2_81 = arith.constant 2 : index
    %c0_82 = arith.constant 0 : index
    %c0_83 = arith.constant 0 : index
    %73 = vector.load %arg12[%c2_81, %c0_82, %c0_83] : memref<3x8x8xf32, #tpu.memory_space<vmem>>, vector<1x8x8xf32>
    %74 = vector.shape_cast %73 : vector<1x8x8xf32> to vector<8x8xf32>
    %cst_84 = arith.constant dense<0.000000e+00> : vector<8x128xf32>
    %75 = tpu.matmul %74, %59, %cst_84 {dimension_numbers = #tpu.dot_dimension_numbers<[1], [0], [0], [1], [0, 0, 1, 1], [], []>} : vector<8x8xf32>, vector<8x128xf32>, vector<8x128xf32> -> vector<8x128xf32>
    %c2_85 = arith.constant 2 : index
    %c0_86 = arith.constant 0 : index
    %c0_87 = arith.constant 0 : index
    %76 = vector.load %arg13[%c2_85, %c0_86, %c0_87] : memref<3x128x128xf32, #tpu.memory_space<vmem>>, vector<1x128x128xf32>
    %77 = vector.shape_cast %76 : vector<1x128x128xf32> to vector<128x128xf32>
    %cst_88 = arith.constant dense<0.000000e+00> : vector<8x128xf32>
    %78 = tpu.matmul %75, %77, %cst_88 {dimension_numbers = #tpu.dot_dimension_numbers<[1], [0], [0], [1], [0, 0, 1, 1], [], []>} : vector<8x128xf32>, vector<128x128xf32>, vector<8x128xf32> -> vector<8x128xf32>
    %79 = arith.addf %72, %78 : vector<8x128xf32>
    %c0_89 = arith.constant 0 : index
    %c0_90 = arith.constant 0 : index
    %80 = vector.load %arg14[%c0_89, %c0_90] : memref<1x128xf32, #tpu.memory_space<vmem>>, vector<1x128xf32>
    %81 = vector.broadcast %80 : vector<1x128xf32> to vector<8x128xf32>
    %82 = arith.addf %79, %81 : vector<8x128xf32>
    %cst_91 = arith.constant 0.000000e+00 : f32
    %83 = vector.broadcast %cst_91 : f32 to vector<8x128xf32>
    %84 = arith.maximumf %82, %83 : vector<8x128xf32>
    %c0_92 = arith.constant 0 : index
    %c0_93 = arith.constant 0 : index
    %85 = vector.load %arg15[%c0_92, %c0_93] : memref<4x8xf32, #tpu.memory_space<vmem>>, vector<4x8xf32>
    %c0_94 = arith.constant 0 : index
    %c0_95 = arith.constant 0 : index
    %86 = vector.load %arg16[%c0_94, %c0_95] : memref<128x64xf32, #tpu.memory_space<vmem>>, vector<128x64xf32>
    %cst_96 = arith.constant dense<0.000000e+00> : vector<8x64xf32>
    %87 = tpu.matmul %84, %86, %cst_96 {dimension_numbers = #tpu.dot_dimension_numbers<[1], [0], [0], [1], [0, 0, 1, 1], [], []>} : vector<8x128xf32>, vector<128x64xf32>, vector<8x64xf32> -> vector<8x64xf32>
    %cst_97 = arith.constant dense<0.000000e+00> : vector<4x64xf32>
    %88 = tpu.matmul %85, %87, %cst_97 {dimension_numbers = #tpu.dot_dimension_numbers<[1], [0], [0], [1], [0, 0, 1, 1], [], []>} : vector<4x8xf32>, vector<8x64xf32>, vector<4x64xf32> -> vector<4x64xf32>
    %c0_98 = arith.constant 0 : index
    %c0_99 = arith.constant 0 : index
    %c0_100 = arith.constant 0 : index
    %89 = vector.load %arg17[%c0_98, %c0_99, %c0_100] : memref<4x1x4xf32, #tpu.memory_space<vmem>>, vector<1x1x4xf32>
    %90 = vector.shape_cast %89 : vector<1x1x4xf32> to vector<1x4xf32>
    %cst_101 = arith.constant dense<0.000000e+00> : vector<1x64xf32>
    %91 = tpu.matmul %90, %88, %cst_101 {dimension_numbers = #tpu.dot_dimension_numbers<[1], [0], [0], [1], [0, 0, 1, 1], [], []>} : vector<1x4xf32>, vector<4x64xf32>, vector<1x64xf32> -> vector<1x64xf32>
    %c0_102 = arith.constant 0 : index
    %c0_103 = arith.constant 0 : index
    %c0_104 = arith.constant 0 : index
    %92 = vector.load %arg18[%c0_102, %c0_103, %c0_104] : memref<4x64x16xf32, #tpu.memory_space<vmem>>, vector<1x64x16xf32>
    %93 = vector.shape_cast %92 : vector<1x64x16xf32> to vector<64x16xf32>
    %cst_105 = arith.constant dense<0.000000e+00> : vector<1x16xf32>
    %94 = tpu.matmul %91, %93, %cst_105 {dimension_numbers = #tpu.dot_dimension_numbers<[1], [0], [0], [1], [0, 0, 1, 1], [], []>} : vector<1x64xf32>, vector<64x16xf32>, vector<1x16xf32> -> vector<1x16xf32>
    %c1_106 = arith.constant 1 : index
    %c0_107 = arith.constant 0 : index
    %c0_108 = arith.constant 0 : index
    %95 = vector.load %arg17[%c1_106, %c0_107, %c0_108] : memref<4x1x4xf32, #tpu.memory_space<vmem>>, vector<1x1x4xf32>
    %96 = vector.shape_cast %95 : vector<1x1x4xf32> to vector<1x4xf32>
    %cst_109 = arith.constant dense<0.000000e+00> : vector<1x64xf32>
    %97 = tpu.matmul %96, %88, %cst_109 {dimension_numbers = #tpu.dot_dimension_numbers<[1], [0], [0], [1], [0, 0, 1, 1], [], []>} : vector<1x4xf32>, vector<4x64xf32>, vector<1x64xf32> -> vector<1x64xf32>
    %c1_110 = arith.constant 1 : index
    %c0_111 = arith.constant 0 : index
    %c0_112 = arith.constant 0 : index
    %98 = vector.load %arg18[%c1_110, %c0_111, %c0_112] : memref<4x64x16xf32, #tpu.memory_space<vmem>>, vector<1x64x16xf32>
    %99 = vector.shape_cast %98 : vector<1x64x16xf32> to vector<64x16xf32>
    %cst_113 = arith.constant dense<0.000000e+00> : vector<1x16xf32>
    %100 = tpu.matmul %97, %99, %cst_113 {dimension_numbers = #tpu.dot_dimension_numbers<[1], [0], [0], [1], [0, 0, 1, 1], [], []>} : vector<1x64xf32>, vector<64x16xf32>, vector<1x16xf32> -> vector<1x16xf32>
    %101 = arith.addf %94, %100 : vector<1x16xf32>
    %c2_114 = arith.constant 2 : index
    %c0_115 = arith.constant 0 : index
    %c0_116 = arith.constant 0 : index
    %102 = vector.load %arg17[%c2_114, %c0_115, %c0_116] : memref<4x1x4xf32, #tpu.memory_space<vmem>>, vector<1x1x4xf32>
    %103 = vector.shape_cast %102 : vector<1x1x4xf32> to vector<1x4xf32>
    %cst_117 = arith.constant dense<0.000000e+00> : vector<1x64xf32>
    %104 = tpu.matmul %103, %88, %cst_117 {dimension_numbers = #tpu.dot_dimension_numbers<[1], [0], [0], [1], [0, 0, 1, 1], [], []>} : vector<1x4xf32>, vector<4x64xf32>, vector<1x64xf32> -> vector<1x64xf32>
    %c2_118 = arith.constant 2 : index
    %c0_119 = arith.constant 0 : index
    %c0_120 = arith.constant 0 : index
    %105 = vector.load %arg18[%c2_118, %c0_119, %c0_120] : memref<4x64x16xf32, #tpu.memory_space<vmem>>, vector<1x64x16xf32>
    %106 = vector.shape_cast %105 : vector<1x64x16xf32> to vector<64x16xf32>
    %cst_121 = arith.constant dense<0.000000e+00> : vector<1x16xf32>
    %107 = tpu.matmul %104, %106, %cst_121 {dimension_numbers = #tpu.dot_dimension_numbers<[1], [0], [0], [1], [0, 0, 1, 1], [], []>} : vector<1x64xf32>, vector<64x16xf32>, vector<1x16xf32> -> vector<1x16xf32>
    %108 = arith.addf %101, %107 : vector<1x16xf32>
    %c3 = arith.constant 3 : index
    %c0_122 = arith.constant 0 : index
    %c0_123 = arith.constant 0 : index
    %109 = vector.load %arg17[%c3, %c0_122, %c0_123] : memref<4x1x4xf32, #tpu.memory_space<vmem>>, vector<1x1x4xf32>
    %110 = vector.shape_cast %109 : vector<1x1x4xf32> to vector<1x4xf32>
    %cst_124 = arith.constant dense<0.000000e+00> : vector<1x64xf32>
    %111 = tpu.matmul %110, %88, %cst_124 {dimension_numbers = #tpu.dot_dimension_numbers<[1], [0], [0], [1], [0, 0, 1, 1], [], []>} : vector<1x4xf32>, vector<4x64xf32>, vector<1x64xf32> -> vector<1x64xf32>
    %c3_125 = arith.constant 3 : index
    %c0_126 = arith.constant 0 : index
    %c0_127 = arith.constant 0 : index
    %112 = vector.load %arg18[%c3_125, %c0_126, %c0_127] : memref<4x64x16xf32, #tpu.memory_space<vmem>>, vector<1x64x16xf32>
    %113 = vector.shape_cast %112 : vector<1x64x16xf32> to vector<64x16xf32>
    %cst_128 = arith.constant dense<0.000000e+00> : vector<1x16xf32>
    %114 = tpu.matmul %111, %113, %cst_128 {dimension_numbers = #tpu.dot_dimension_numbers<[1], [0], [0], [1], [0, 0, 1, 1], [], []>} : vector<1x64xf32>, vector<64x16xf32>, vector<1x16xf32> -> vector<1x16xf32>
    %115 = arith.addf %108, %114 : vector<1x16xf32>
    %c0_129 = arith.constant 0 : index
    %c0_130 = arith.constant 0 : index
    %116 = vector.load %arg19[%c0_129, %c0_130] : memref<1x16xf32, #tpu.memory_space<vmem>>, vector<1x16xf32>
    %117 = arith.addf %115, %116 : vector<1x16xf32>
    %cst_131 = arith.constant 0.000000e+00 : f32
    %118 = vector.broadcast %cst_131 : f32 to vector<1x16xf32>
    %119 = arith.maximumf %117, %118 : vector<1x16xf32>
    %c0_132 = arith.constant 0 : index
    %c0_133 = arith.constant 0 : index
    %120 = vector.load %arg20[%c0_132, %c0_133] : memref<16x11xf32, #tpu.memory_space<vmem>>, vector<16x11xf32>
    %cst_134 = arith.constant dense<0.000000e+00> : vector<1x11xf32>
    %121 = tpu.matmul %119, %120, %cst_134 {dimension_numbers = #tpu.dot_dimension_numbers<[1], [0], [0], [1], [0, 0, 1, 1], [], []>} : vector<1x16xf32>, vector<16x11xf32>, vector<1x11xf32> -> vector<1x11xf32>
    %c0_135 = arith.constant 0 : index
    %c0_136 = arith.constant 0 : index
    %122 = vector.load %arg21[%c0_135, %c0_136] : memref<1x11xf32, #tpu.memory_space<vmem>>, vector<1x11xf32>
    %123 = arith.addf %121, %122 : vector<1x11xf32>
    %c0_137 = arith.constant 0 : index
    %c0_138 = arith.constant 0 : index
    %c0_139 = arith.constant 0 : index
    %124 = vector.load %arg22[%c0_137, %c0_138, %c0_139] : memref<1x1x11xf32, #tpu.memory_space<vmem>>, vector<1x1x11xf32>
    %125 = vector.shape_cast %124 : vector<1x1x11xf32> to vector<1x11xf32>
    %126 = vector.shape_cast %123 : vector<1x11xf32> to vector<1x1x11xf32>
    tpu.vector_store %arg22[%c0_137, %c0_138, %c0_139], %126 {strides = array<i32>} : memref<1x1x11xf32, #tpu.memory_space<vmem>>, vector<1x1x11xf32>,
    return
  }
  func.func @transform_0(%arg0: i32) -> (i32, i32, i32) {
    %c0_i32 = arith.constant 0 : i32
    %c0_i32_0 = arith.constant 0 : i32
    %c0_i32_1 = arith.constant 0 : i32
    return %arg0, %c0_i32, %c0_i32_0 : i32, i32, i32
  }
  func.func @transform_1(%arg0: i32) -> (i32, i32, i32) {
    %c0_i32 = arith.constant 0 : i32
    %c0_i32_0 = arith.constant 0 : i32
    %c0_i32_1 = arith.constant 0 : i32
    %c0_i32_2 = arith.constant 0 : i32
    return %c0_i32, %c0_i32_0, %c0_i32_1 : i32, i32, i32
  }
  func.func @transform_2(%arg0: i32) -> (i32, i32, i32) {
    %c0_i32 = arith.constant 0 : i32
    %c0_i32_0 = arith.constant 0 : i32
    %c0_i32_1 = arith.constant 0 : i32
    %c0_i32_2 = arith.constant 0 : i32
    return %c0_i32, %c0_i32_0, %c0_i32_1 : i32, i32, i32
  }
  func.func @transform_3(%arg0: i32) -> (i32, i32) {
    %c0_i32 = arith.constant 0 : i32
    %c0_i32_0 = arith.constant 0 : i32
    %c0_i32_1 = arith.constant 0 : i32
    return %c0_i32, %c0_i32_0 : i32, i32
  }
  func.func @transform_4(%arg0: i32) -> (i32, i32) {
    %c0_i32 = arith.constant 0 : i32
    %c0_i32_0 = arith.constant 0 : i32
    %c0_i32_1 = arith.constant 0 : i32
    return %c0_i32, %c0_i32_0 : i32, i32
  }
  func.func @transform_5(%arg0: i32) -> (i32, i32) {
    %c0_i32 = arith.constant 0 : i32
    %c0_i32_0 = arith.constant 0 : i32
    %c0_i32_1 = arith.constant 0 : i32
    return %c0_i32, %c0_i32_0 : i32, i32
  }
  func.func @transform_6(%arg0: i32) -> (i32, i32, i32) {
    %c0_i32 = arith.constant 0 : i32
    %c0_i32_0 = arith.constant 0 : i32
    %c0_i32_1 = arith.constant 0 : i32
    %c0_i32_2 = arith.constant 0 : i32
    return %c0_i32, %c0_i32_0, %c0_i32_1 : i32, i32, i32
  }
  func.func @transform_7(%arg0: i32) -> (i32, i32, i32) {
    %c0_i32 = arith.constant 0 : i32
    %c0_i32_0 = arith.constant 0 : i32
    %c0_i32_1 = arith.constant 0 : i32
    %c0_i32_2 = arith.constant 0 : i32
    return %c0_i32, %c0_i32_0, %c0_i32_1 : i32, i32, i32
  }
  func.func @transform_8(%arg0: i32) -> (i32, i32) {
    %c0_i32 = arith.constant 0 : i32
    %c0_i32_0 = arith.constant 0 : i32
    %c0_i32_1 = arith.constant 0 : i32
    return %c0_i32, %c0_i32_0 : i32, i32
  }
  func.func @transform_9(%arg0: i32) -> (i32, i32) {
    %c0_i32 = arith.constant 0 : i32
    %c0_i32_0 = arith.constant 0 : i32
    %c0_i32_1 = arith.constant 0 : i32
    return %c0_i32, %c0_i32_0 : i32, i32
  }
  func.func @transform_10(%arg0: i32) -> (i32, i32) {
    %c0_i32 = arith.constant 0 : i32
    %c0_i32_0 = arith.constant 0 : i32
    %c0_i32_1 = arith.constant 0 : i32
    return %c0_i32, %c0_i32_0 : i32, i32
  }
  func.func @transform_11(%arg0: i32) -> (i32, i32, i32) {
    %c0_i32 = arith.constant 0 : i32
    %c0_i32_0 = arith.constant 0 : i32
    %c0_i32_1 = arith.constant 0 : i32
    %c0_i32_2 = arith.constant 0 : i32
    return %c0_i32, %c0_i32_0, %c0_i32_1 : i32, i32, i32
  }
  func.func @transform_12(%arg0: i32) -> (i32, i32, i32) {
    %c0_i32 = arith.constant 0 : i32
    %c0_i32_0 = arith.constant 0 : i32
    %c0_i32_1 = arith.constant 0 : i32
    %c0_i32_2 = arith.constant 0 : i32
    return %c0_i32, %c0_i32_0, %c0_i32_1 : i32, i32, i32
  }
  func.func @transform_13(%arg0: i32) -> (i32, i32) {
    %c0_i32 = arith.constant 0 : i32
    %c0_i32_0 = arith.constant 0 : i32
    %c0_i32_1 = arith.constant 0 : i32
    return %c0_i32, %c0_i32_0 : i32, i32
  }
  func.func @transform_14(%arg0: i32) -> (i32, i32) {
    %c0_i32 = arith.constant 0 : i32
    %c0_i32_0 = arith.constant 0 : i32
    %c0_i32_1 = arith.constant 0 : i32
    return %c0_i32, %c0_i32_0 : i32, i32
  }
  func.func @transform_15(%arg0: i32) -> (i32, i32) {
    %c0_i32 = arith.constant 0 : i32
    %c0_i32_0 = arith.constant 0 : i32
    %c0_i32_1 = arith.constant 0 : i32
    return %c0_i32, %c0_i32_0 : i32, i32
  }
  func.func @transform_16(%arg0: i32) -> (i32, i32, i32) {
    %c0_i32 = arith.constant 0 : i32
    %c0_i32_0 = arith.constant 0 : i32
    %c0_i32_1 = arith.constant 0 : i32
    %c0_i32_2 = arith.constant 0 : i32
    return %c0_i32, %c0_i32_0, %c0_i32_1 : i32, i32, i32
  }
  func.func @transform_17(%arg0: i32) -> (i32, i32, i32) {
    %c0_i32 = arith.constant 0 : i32
    %c0_i32_0 = arith.constant 0 : i32
    %c0_i32_1 = arith.constant 0 : i32
    %c0_i32_2 = arith.constant 0 : i32
    return %c0_i32, %c0_i32_0, %c0_i32_1 : i32, i32, i32
  }
  func.func @transform_18(%arg0: i32) -> (i32, i32) {
    %c0_i32 = arith.constant 0 : i32
    %c0_i32_0 = arith.constant 0 : i32
    %c0_i32_1 = arith.constant 0 : i32
    return %c0_i32, %c0_i32_0 : i32, i32
  }
  func.func @transform_19(%arg0: i32) -> (i32, i32) {
    %c0_i32 = arith.constant 0 : i32
    %c0_i32_0 = arith.constant 0 : i32
    %c0_i32_1 = arith.constant 0 : i32
    return %c0_i32, %c0_i32_0 : i32, i32
  }
  func.func @transform_20(%arg0: i32) -> (i32, i32) {
    %c0_i32 = arith.constant 0 : i32
    %c0_i32_0 = arith.constant 0 : i32
    %c0_i32_1 = arith.constant 0 : i32
    return %c0_i32, %c0_i32_0 : i32, i32
  }
  func.func @transform_21(%arg0: i32) -> (i32, i32, i32) {
    %c0_i32 = arith.constant 0 : i32
    %c0_i32_0 = arith.constant 0 : i32
    %c0_i32_1 = arith.constant 0 : i32
    return %arg0, %c0_i32, %c0_i32_0 : i32, i32, i32
  }
}

</mosaic_0001>

<llo_original>
// kernel: soli_cnn_taskb1_forward_prepared.1
$region0: #{soli_cnn_taskb1_forward_prepared.1}
  #allocation0 [shape = 'u32[]', space=smem, size = 0x4, offset = 0x4, fixed_abs, tag = 'smem constant byte address 0x4 - core index']
  #allocation1 [shape = 'u32[144,128]{1,0:T(1,128)}', space=vmem, size = 0x12000, scoped, tag = 'internal scratch']
  %s0 = inlined_call_operand.vmem [shape: f32[2,32,128], index: 0, kind: input, shape index: {}]
  %s1 = inlined_call_operand.vmem [shape: f32[3,32,32], index: 1, kind: input, shape index: {}]
  %s2 = inlined_call_operand.vmem [shape: f32[3,128,256], index: 2, kind: input, shape index: {}]
  %s3 = inlined_call_operand.hbm [shape: f32[1,256], index: 3, kind: input, shape index: {}]
  %s4 = inlined_call_operand.hbm [shape: f32[16,32], index: 4, kind: input, shape index: {}]
  %s5 = inlined_call_operand.hbm [shape: f32[256,128], index: 5, kind: input, shape index: {}]
  %s6 = inlined_call_operand.hbm [shape: f32[3,16,16], index: 6, kind: input, shape index: {}]
  %s7 = inlined_call_operand.hbm [shape: f32[3,128,256], index: 7, kind: input, shape index: {}]
  %s8 = inlined_call_operand.hbm [shape: f32[1,256], index: 8, kind: input, shape index: {}]
  %s9 = inlined_call_operand.vmem [shape: f32[8,16], index: 9, kind: input, shape index: {}]
  %s10 = inlined_call_operand.hbm [shape: f32[256,128], index: 10, kind: input, shape index: {}]
  %s11 = inlined_call_operand.vmem [shape: f32[3,8,8], index: 11, kind: input, shape index: {}]
  %s12 = inlined_call_operand.vmem [shape: f32[3,128,128], index: 12, kind: input, shape index: {}]
  %s13 = inlined_call_operand.hbm [shape: f32[1,128], index: 13, kind: input, shape index: {}]
  %s14 = inlined_call_operand.hbm [shape: f32[4,8], index: 14, kind: input, shape index: {}]
  %s15 = inlined_call_operand.vmem [shape: f32[128,64], index: 15, kind: input, shape index: {}]
  %s16 = inlined_call_operand.vmem [shape: f32[4,1,4], index: 16, kind: input, shape index: {}]
  %s17 = inlined_call_operand.vmem [shape: f32[4,64,16], index: 17, kind: input, shape index: {}]
  %s18 = inlined_call_operand.vmem [shape: f32[1,16], index: 18, kind: input, shape index: {}]
  %s19 = inlined_call_operand.vmem [shape: f32[16,11], index: 19, kind: input, shape index: {}]
  %s20 = inlined_call_operand.vmem [shape: f32[1,11], index: 20, kind: input, shape index: {}]
  %s21 = inlined_call_operand.hbm [shape: f32[2,1,11], index: 21, kind: output, shape index: {}]
  %s22 = sld [smem:[#allocation0]]
  $region153: #{soli_cnn_taskb1_forward_prepared.1} parent=0
    _
  %s24 = ssub.s32 1, %s22
  %s25 = scalar_select 0, %s24, %s22
  $region1: #{soli_cnn_taskb1_forward_prepared.1} parent=0
    #allocation2 [shape = 'u8[1024]{0}', space=vmem, size = 0x400, scoped, tag = 'input window, operand 3, single buffered']
    #allocation3 [shape = 's32[2]{0}', space=sflag, size = 0x8, scoped, tag = 'scoped memory for soli_cnn_taskb1_forward_prepared.1']
    #allocation4 [shape = 's32[2]{0}', space=sflag, size = 0x8, scoped, tag = 'scoped memory for soli_cnn_taskb1_forward_prepared.1']
    #allocation5 [shape = 'u8[8192]{0}', space=vmem, size = 0x2000, scoped, tag = 'input window, operand 4, single buffered']
    #allocation6 [shape = 's32[1]{0}', space=sflag, size = 0x4, scoped, tag = 'scoped memory for soli_cnn_taskb1_forward_prepared.1']
    #allocation7 [shape = 'u8[131072]{0}', space=vmem, size = 0x20000, scoped, tag = 'input window, operand 5, single buffered']
    #allocation8 [shape = 'u8[24576]{0}', space=vmem, size = 0x6000, scoped, tag = 'input window, operand 6, single buffered']
    #allocation9 [shape = 's32[1]{0}', space=sflag, size = 0x4, scoped, tag = 'scoped memory for soli_cnn_taskb1_forward_prepared.1']
    #allocation10 [shape = 'u8[393216]{0}', space=vmem, size = 0x60000, scoped, tag = 'input window, operand 7, single buffered']
    #allocation11 [shape = 'u8[1024]{0}', space=vmem, size = 0x400, scoped, tag = 'input window, operand 8, single buffered']
    #allocation12 [shape = 's32[1]{0}', space=sflag, size = 0x4, scoped, tag = 'scoped memory for soli_cnn_taskb1_forward_prepared.1']
    #allocation13 [shape = 'u8[131072]{0}', space=vmem, size = 0x20000, scoped, tag = 'input window, operand 10, single buffered']
    #allocation14 [shape = 'u8[512]{0}', space=vmem, size = 0x400, scoped, tag = 'input window, operand 13, single buffered']
    #allocation15 [shape = 's32[1]{0}', space=sflag, size = 0x4, scoped, tag = 'scoped memory for soli_cnn_taskb1_forward_prepared.1']
    #allocation16 [shape = 'u8[2048]{0}', space=vmem, size = 0x800, scoped, tag = 'input window, operand 14, single buffered']
    #allocation17 [shape = 'u8[1024]{0}', space=vmem, size = 0x400, scoped, tag = 'output window, operand 0']
    %26 = vsyncpa [#allocation3], 0
    %27 = vsyncpa [#allocation6], 0
    %28 = vsyncpa [#allocation9], 0
    %29 = vsyncpa [#allocation12], 0
    %30 = vsyncpa [#allocation15], 0
    %31 = vsyncpa [#allocation4], 0
    %s32 = scalar_lea.sflag [#allocation4], 1
    %33 = vsyncpa %s32, 0
    loop: start=0, step=1, limit=4
    $region2: #{soli_cnn_taskb1_forward_prepared.1} parent=1 // loop_pre_header
      _
    $region3: #{soli_cnn_taskb1_forward_prepared.1} parent=1 // loop_header
      %s35 = sphi 0, %s39
      %p36 = scmp.ge.s32.totalorder %s35, 4
      %s45 = sphi 0, %s47
      %s48 = sphi 0, %s45
      %s49 = sphi 0, %s48
      %s65 = sphi 0, %s49
      %s69 = sphi 0, %s69
      %s71 = sphi 0, %s69
      %s72 = sphi 0, %s71
      %s86 = sphi 0, %s72
      %s90 = sphi 0, %s90
      %s92 = sphi 0, %s90
      %s93 = sphi 0, %s92
      %s107 = sphi 0, %s93
      %s111 = sphi 0, %s111
      %s113 = sphi 0, %s111
      %s114 = sphi 0, %s113
      %s128 = sphi 0, %s114
      %s132 = sphi 0, %s132
      %s134 = sphi 0, %s132
      %s135 = sphi 0, %s134
      %s149 = sphi 0, %s135
      %s153 = sphi 0, %s153
      %s155 = sphi 0, %s153
      %s156 = sphi 0, %s155
      %s170 = sphi 0, %s156
      %s174 = sphi 0, %s174
      %s176 = sphi 0, %s174
      %s177 = sphi 0, %s176
      %s191 = sphi 0, %s177
      %s195 = sphi 0, %s195
      %s197 = sphi 0, %s195
      %s198 = sphi 0, %s197
      %s212 = sphi 0, %s198
      %s216 = sphi 0, %s216
      %s218 = sphi 0, %s216
      %s219 = sphi 0, %s218
      %s233 = sphi 0, %s219
      %s237 = sphi 0, %s237
      %s239 = sphi 0, %s237
      %s240 = sphi 0, %s239
      %s254 = sphi 0, %s240
      %s258 = sphi 0, %s258
      %s260 = sphi 0, %s258
      %s261 = sphi 0, %s260
      %s275 = sphi 0, %s261
      %s279 = sphi 0, %s279
      %s281 = sphi 0, %s279
      %s282 = sphi 0, %s281
      %s296 = sphi 0, %s282
      %s300 = sphi 0, %s300
      %s302 = sphi 0, %s300
      %s303 = sphi 0, %s302
      %s317 = sphi 0, %s303
      %s321 = sphi 0, %s321
      %s323 = sphi 0, %s321
      %s324 = sphi 0, %s323
      %s338 = sphi 0, %s324
      %s342 = sphi 0, %s342
      %s344 = sphi 0, %s342
      %s345 = sphi 0, %s344
      %s359 = sphi 0, %s345
      %s363 = sphi 0, %s363
      %s365 = sphi 0, %s363
      %s366 = sphi 0, %s365
      %s380 = sphi 0, %s366
      %s384 = sphi 0, %s384
      %s386 = sphi 0, %s384
      %s387 = sphi 0, %s386
      %s401 = sphi 0, %s387
      %s405 = sphi 0, %s405
      %s407 = sphi 0, %s405
      %s408 = sphi 0, %s407
      %s422 = sphi 0, %s408
      %s426 = sphi 0, %s426
      %s428 = sphi 0, %s426
      %s429 = sphi 0, %s428
      %s443 = sphi 0, %s429
      %s447 = sphi 0, %s447
      %s449 = sphi 0, %s447
      %s450 = sphi 0, %s449
      %s464 = sphi 0, %s450
      %s468 = sphi 0, %s468
      %s470 = sphi 0, %s468
      %s471 = sphi 0, %s470
      %s485 = sphi 0, %s471
      %s491 = sphi 0, %s493
      %s494 = sphi 0, %s491
      %s495 = sphi 0, %s494
      %s511 = sphi 0, %s495
    $region4: #{soli_cnn_taskb1_forward_prepared.1} parent=1 // loop_header_branch
      %38 = sbr.rel (%p36) target = $region8
    $region5: #{soli_cnn_taskb1_forward_prepared.1} parent=1 // loop_body
      %s40 = ssub.s32 %s35, 1
      %s41 = ssub.s32 %s35, 2
      %s42 = sadd.s32 %s35, 1
      %s43 = ssub.s32 %s35, %s42
      %p44 = scmp.eq.s32.totalorder %s43, 0
      %s46 = sadd.s32 %s45, 1
      %s47 = scalar_select %p44, %s45, %s46
      %p50 = pneg %p44
      %p51 = scmp.eq.s32.totalorder %s35, 1
      %p52 = por %p50, %p51
      %p53 = scmp.ne.s32.totalorder %s45, %s48
      %p54 = scmp.eq.s32.totalorder %s35, 0
      %p55 = por %p53, %p54
      %p56 = scmp.ne.s32.totalorder %s45, %s48
      %p57 = scmp.eq.s32.totalorder %s40, 1
      %p58 = por %p56, %p57
      %p59 = scmp.ne.s32.totalorder %s48, %s49
      %p60 = scmp.eq.s32.totalorder %s40, 0
      %p61 = por %p59, %p60
      %p62 = scmp.ne.s32.totalorder %s48, %s49
      %p63 = scmp.eq.s32.totalorder %s41, 1
      %p64 = por %p62, %p63
      %p66 = scmp.ne.s32.totalorder %s49, %s65
      %p67 = scmp.eq.s32.totalorder %s41, 0
      %p68 = por %p66, %p67
      %s70 = sadd.s32 %s69, 1
      %p73 = scmp.eq.s32.totalorder %s35, 1
      %p74 = scmp.ne.s32.totalorder %s69, %s71
      %p75 = scmp.eq.s32.totalorder %s35, 0
      %p76 = por %p74, %p75
      %p77 = scmp.ne.s32.totalorder %s69, %s71
      %p78 = scmp.eq.s32.totalorder %s40, 1
      %p79 = por %p77, %p78
      %p80 = scmp.ne.s32.totalorder %s71, %s72
      %p81 = scmp.eq.s32.totalorder %s40, 0
      %p82 = por %p80, %p81
      %p83 = scmp.ne.s32.totalorder %s71, %s72
      %p84 = scmp.eq.s32.totalorder %s41, 1
      %p85 = por %p83, %p84
      %p87 = scmp.ne.s32.totalorder %s72, %s86
      %p88 = scmp.eq.s32.totalorder %s41, 0
      %p89 = por %p87, %p88
      %s91 = sadd.s32 %s90, 1
      %p94 = scmp.eq.s32.totalorder %s35, 1
      %p95 = scmp.ne.s32.totalorder %s90, %s92
      %p96 = scmp.eq.s32.totalorder %s35, 0
      %p97 = por %p95, %p96
      %p98 = scmp.ne.s32.totalorder %s90, %s92
      %p99 = scmp.eq.s32.totalorder %s40, 1
      %p100 = por %p98, %p99
      %p101 = scmp.ne.s32.totalorder %s92, %s93
      %p102 = scmp.eq.s32.totalorder %s40, 0
      %p103 = por %p101, %p102
      %p104 = scmp.ne.s32.totalorder %s92, %s93
      %p105 = scmp.eq.s32.totalorder %s41, 1
      %p106 = por %p104, %p105
      %p108 = scmp.ne.s32.totalorder %s93, %s107
      %p109 = scmp.eq.s32.totalorder %s41, 0
      %p110 = por %p108, %p109
      %s112 = sadd.s32 %s111, 1
      %p115 = scmp.eq.s32.totalorder %s35, 1
      %p116 = scmp.ne.s32.totalorder %s111, %s113
      %p117 = scmp.eq.s32.totalorder %s35, 0
      %p118 = por %p116, %p117
      %p119 = scmp.ne.s32.totalorder %s111, %s113
      %p120 = scmp.eq.s32.totalorder %s40, 1
      %p121 = por %p119, %p120
      %p122 = scmp.ne.s32.totalorder %s113, %s114
      %p123 = scmp.eq.s32.totalorder %s40, 0
      %p124 = por %p122, %p123
      %p125 = scmp.ne.s32.totalorder %s113, %s114
      %p126 = scmp.eq.s32.totalorder %s41, 1
      %p127 = por %p125, %p126
      %p129 = scmp.ne.s32.totalorder %s114, %s128
      %p130 = scmp.eq.s32.totalorder %s41, 0
      %p131 = por %p129, %p130
      %s133 = sadd.s32 %s132, 1
      %p136 = scmp.eq.s32.totalorder %s35, 1
      %p137 = scmp.ne.s32.totalorder %s132, %s134
      %p138 = scmp.eq.s32.totalorder %s35, 0
      %p139 = por %p137, %p138
      %p140 = scmp.ne.s32.totalorder %s132, %s134
      %p141 = scmp.eq.s32.totalorder %s40, 1
      %p142 = por %p140, %p141
      %p143 = scmp.ne.s32.totalorder %s134, %s135
      %p144 = scmp.eq.s32.totalorder %s40, 0
      %p145 = por %p143, %p144
      %p146 = scmp.ne.s32.totalorder %s134, %s135
      %p147 = scmp.eq.s32.totalorder %s41, 1
      %p148 = por %p146, %p147
      %p150 = scmp.ne.s32.totalorder %s135, %s149
      %p151 = scmp.eq.s32.totalorder %s41, 0
      %p152 = por %p150, %p151
      %s154 = sadd.s32 %s153, 1
      %p157 = scmp.eq.s32.totalorder %s35, 1
      %p158 = scmp.ne.s32.totalorder %s153, %s155
      %p159 = scmp.eq.s32.totalorder %s35, 0
      %p160 = por %p158, %p159
      %p161 = scmp.ne.s32.totalorder %s153, %s155
      %p162 = scmp.eq.s32.totalorder %s40, 1
      %p163 = por %p161, %p162
      %p164 = scmp.ne.s32.totalorder %s155, %s156
      %p165 = scmp.eq.s32.totalorder %s40, 0
      %p166 = por %p164, %p165
      %p167 = scmp.ne.s32.totalorder %s155, %s156
      %p168 = scmp.eq.s32.totalorder %s41, 1
      %p169 = por %p167, %p168
      %p171 = scmp.ne.s32.totalorder %s156, %s170
      %p172 = scmp.eq.s32.totalorder %s41, 0
      %p173 = por %p171, %p172
      %s175 = sadd.s32 %s174, 1
      %p178 = scmp.eq.s32.totalorder %s35, 1
      %p179 = scmp.ne.s32.totalorder %s174, %s176
      %p180 = scmp.eq.s32.totalorder %s35, 0
      %p181 = por %p179, %p180
      %p182 = scmp.ne.s32.totalorder %s174, %s176
      %p183 = scmp.eq.s32.totalorder %s40, 1
      %p184 = por %p182, %p183
      %p185 = scmp.ne.s32.totalorder %s176, %s177
      %p186 = scmp.eq.s32.totalorder %s40, 0
      %p187 = por %p185, %p186
      %p188 = scmp.ne.s32.totalorder %s176, %s177
      %p189 = scmp.eq.s32.totalorder %s41, 1
      %p190 = por %p188, %p189
      %p192 = scmp.ne.s32.totalorder %s177, %s191
      %p193 = scmp.eq.s32.totalorder %s41, 0
      %p194 = por %p192, %p193
      %s196 = sadd.s32 %s195, 1
      %p199 = scmp.eq.s32.totalorder %s35, 1
      %p200 = scmp.ne.s32.totalorder %s195, %s197
      %p201 = scmp.eq.s32.totalorder %s35, 0
      %p202 = por %p200, %p201
      %p203 = scmp.ne.s32.totalorder %s195, %s197
      %p204 = scmp.eq.s32.totalorder %s40, 1
      %p205 = por %p203, %p204
      %p206 = scmp.ne.s32.totalorder %s197, %s198
      %p207 = scmp.eq.s32.totalorder %s40, 0
      %p208 = por %p206, %p207
      %p209 = scmp.ne.s32.totalorder %s197, %s198
      %p210 = scmp.eq.s32.totalorder %s41, 1
      %p211 = por %p209, %p210
      %p213 = scmp.ne.s32.totalorder %s198, %s212
      %p214 = scmp.eq.s32.totalorder %s41, 0
      %p215 = por %p213, %p214
      %s217 = sadd.s32 %s216, 1
      %p220 = scmp.eq.s32.totalorder %s35, 1
      %p221 = scmp.ne.s32.totalorder %s216, %s218
      %p222 = scmp.eq.s32.totalorder %s35, 0
      %p223 = por %p221, %p222
      %p224 = scmp.ne.s32.totalorder %s216, %s218
      %p225 = scmp.eq.s32.totalorder %s40, 1
      %p226 = por %p224, %p225
      %p227 = scmp.ne.s32.totalorder %s218, %s219
      %p228 = scmp.eq.s32.totalorder %s40, 0
      %p229 = por %p227, %p228
      %p230 = scmp.ne.s32.totalorder %s218, %s219
      %p231 = scmp.eq.s32.totalorder %s41, 1
      %p232 = por %p230, %p231
      %p234 = scmp.ne.s32.totalorder %s219, %s233
      %p235 = scmp.eq.s32.totalorder %s41, 0
      %p236 = por %p234, %p235
      %s238 = sadd.s32 %s237, 1
      %p241 = scmp.eq.s32.totalorder %s35, 1
      %p242 = scmp.ne.s32.totalorder %s237, %s239
      %p243 = scmp.eq.s32.totalorder %s35, 0
      %p244 = por %p242, %p243
      %p245 = scmp.ne.s32.totalorder %s237, %s239
      %p246 = scmp.eq.s32.totalorder %s40, 1
      %p247 = por %p245, %p246
      %p248 = scmp.ne.s32.totalorder %s239, %s240
      %p249 = scmp.eq.s32.totalorder %s40, 0
      %p250 = por %p248, %p249
      %p251 = scmp.ne.s32.totalorder %s239, %s240
      %p252 = scmp.eq.s32.totalorder %s41, 1
      %p253 = por %p251, %p252
      %p255 = scmp.ne.s32.totalorder %s240, %s254
      %p256 = scmp.eq.s32.totalorder %s41, 0
      %p257 = por %p255, %p256
      %s259 = sadd.s32 %s258, 1
      %p262 = scmp.eq.s32.totalorder %s35, 1
      %p263 = scmp.ne.s32.totalorder %s258, %s260
      %p264 = scmp.eq.s32.totalorder %s35, 0
      %p265 = por %p263, %p264
      %p266 = scmp.ne.s32.totalorder %s258, %s260
      %p267 = scmp.eq.s32.totalorder %s40, 1
      %p268 = por %p266, %p267
      %p269 = scmp.ne.s32.totalorder %s260, %s261
      %p270 = scmp.eq.s32.totalorder %s40, 0
      %p271 = por %p269, %p270
      %p272 = scmp.ne.s32.totalorder %s260, %s261
      %p273 = scmp.eq.s32.totalorder %s41, 1
      %p274 = por %p272, %p273
      %p276 = scmp.ne.s32.totalorder %s261, %s275
      %p277 = scmp.eq.s32.totalorder %s41, 0
      %p278 = por %p276, %p277
      %s280 = sadd.s32 %s279, 1
      %p283 = scmp.eq.s32.totalorder %s35, 1
      %p284 = scmp.ne.s32.totalorder %s279, %s281
      %p285 = scmp.eq.s32.totalorder %s35, 0
      %p286 = por %p284, %p285
      %p287 = scmp.ne.s32.totalorder %s279, %s281
      %p288 = scmp.eq.s32.totalorder %s40, 1
      %p289 = por %p287, %p288
      %p290 = scmp.ne.s32.totalorder %s281, %s282
      %p291 = scmp.eq.s32.totalorder %s40, 0
      %p292 = por %p290, %p291
      %p293 = scmp.ne.s32.totalorder %s281, %s282
      %p294 = scmp.eq.s32.totalorder %s41, 1
      %p295 = por %p293, %p294
      %p297 = scmp.ne.s32.totalorder %s282, %s296
      %p298 = scmp.eq.s32.totalorder %s41, 0
      %p299 = por %p297, %p298
      %s301 = sadd.s32 %s300, 1
      %p304 = scmp.eq.s32.totalorder %s35, 1
      %p305 = scmp.ne.s32.totalorder %s300, %s302
      %p306 = scmp.eq.s32.totalorder %s35, 0
      %p307 = por %p305, %p306
      %p308 = scmp.ne.s32.totalorder %s300, %s302
      %p309 = scmp.eq.s32.totalorder %s40, 1
      %p310 = por %p308, %p309
      %p311 = scmp.ne.s32.totalorder %s302, %s303
      %p312 = scmp.eq.s32.totalorder %s40, 0
      %p313 = por %p311, %p312
      %p314 = scmp.ne.s32.totalorder %s302, %s303
      %p315 = scmp.eq.s32.totalorder %s41, 1
      %p316 = por %p314, %p315
      %p318 = scmp.ne.s32.totalorder %s303, %s317
      %p319 = scmp.eq.s32.totalorder %s41, 0
      %p320 = por %p318, %p319
      %s322 = sadd.s32 %s321, 1
      %p325 = scmp.eq.s32.totalorder %s35, 1
      %p326 = scmp.ne.s32.totalorder %s321, %s323
      %p327 = scmp.eq.s32.totalorder %s35, 0
      %p328 = por %p326, %p327
      %p329 = scmp.ne.s32.totalorder %s321, %s323
      %p330 = scmp.eq.s32.totalorder %s40, 1
      %p331 = por %p329, %p330
      %p332 = scmp.ne.s32.totalorder %s323, %s324
      %p333 = scmp.eq.s32.totalorder %s40, 0
      %p334 = por %p332, %p333
      %p335 = scmp.ne.s32.totalorder %s323, %s324
      %p336 = scmp.eq.s32.totalorder %s41, 1
      %p337 = por %p335, %p336
      %p339 = scmp.ne.s32.totalorder %s324, %s338
      %p340 = scmp.eq.s32.totalorder %s41, 0
      %p341 = por %p339, %p340
      %s343 = sadd.s32 %s342, 1
      %p346 = scmp.eq.s32.totalorder %s35, 1
      %p347 = scmp.ne.s32.totalorder %s342, %s344
      %p348 = scmp.eq.s32.totalorder %s35, 0
      %p349 = por %p347, %p348
      %p350 = scmp.ne.s32.totalorder %s342, %s344
      %p351 = scmp.eq.s32.totalorder %s40, 1
      %p352 = por %p350, %p351
      %p353 = scmp.ne.s32.totalorder %s344, %s345
      %p354 = scmp.eq.s32.totalorder %s40, 0
      %p355 = por %p353, %p354
      %p356 = scmp.ne.s32.totalorder %s344, %s345
      %p357 = scmp.eq.s32.totalorder %s41, 1
      %p358 = por %p356, %p357
      %p360 = scmp.ne.s32.totalorder %s345, %s359
      %p361 = scmp.eq.s32.totalorder %s41, 0
      %p362 = por %p360, %p361
      %s364 = sadd.s32 %s363, 1
      %p367 = scmp.eq.s32.totalorder %s35, 1
      %p368 = scmp.ne.s32.totalorder %s363, %s365
      %p369 = scmp.eq.s32.totalorder %s35, 0
      %p370 = por %p368, %p369
      %p371 = scmp.ne.s32.totalorder %s363, %s365
      %p372 = scmp.eq.s32.totalorder %s40, 1
      %p373 = por %p371, %p372
      %p374 = scmp.ne.s32.totalorder %s365, %s366
      %p375 = scmp.eq.s32.totalorder %s40, 0
      %p376 = por %p374, %p375
      %p377 = scmp.ne.s32.totalorder %s365, %s366
      %p378 = scmp.eq.s32.totalorder %s41, 1
      %p379 = por %p377, %p378
      %p381 = scmp.ne.s32.totalorder %s366, %s380
      %p382 = scmp.eq.s32.totalorder %s41, 0
      %p383 = por %p381, %p382
      %s385 = sadd.s32 %s384, 1
      %p388 = scmp.eq.s32.totalorder %s35, 1
      %p389 = scmp.ne.s32.totalorder %s384, %s386
      %p390 = scmp.eq.s32.totalorder %s35, 0
      %p391 = por %p389, %p390
      %p392 = scmp.ne.s32.totalorder %s384, %s386
      %p393 = scmp.eq.s32.totalorder %s40, 1
      %p394 = por %p392, %p393
      %p395 = scmp.ne.s32.totalorder %s386, %s387
      %p396 = scmp.eq.s32.totalorder %s40, 0
      %p397 = por %p395, %p396
      %p398 = scmp.ne.s32.totalorder %s386, %s387
      %p399 = scmp.eq.s32.totalorder %s41, 1
      %p400 = por %p398, %p399
      %p402 = scmp.ne.s32.totalorder %s387, %s401
      %p403 = scmp.eq.s32.totalorder %s41, 0
      %p404 = por %p402, %p403
      %s406 = sadd.s32 %s405, 1
      %p409 = scmp.eq.s32.totalorder %s35, 1
      %p410 = scmp.ne.s32.totalorder %s405, %s407
      %p411 = scmp.eq.s32.totalorder %s35, 0
      %p412 = por %p410, %p411
      %p413 = scmp.ne.s32.totalorder %s405, %s407
      %p414 = scmp.eq.s32.totalorder %s40, 1
      %p415 = por %p413, %p414
      %p416 = scmp.ne.s32.totalorder %s407, %s408
      %p417 = scmp.eq.s32.totalorder %s40, 0
      %p418 = por %p416, %p417
      %p419 = scmp.ne.s32.totalorder %s407, %s408
      %p420 = scmp.eq.s32.totalorder %s41, 1
      %p421 = por %p419, %p420
      %p423 = scmp.ne.s32.totalorder %s408, %s422
      %p424 = scmp.eq.s32.totalorder %s41, 0
      %p425 = por %p423, %p424
      %s427 = sadd.s32 %s426, 1
      %p430 = scmp.eq.s32.totalorder %s35, 1
      %p431 = scmp.ne.s32.totalorder %s426, %s428
      %p432 = scmp.eq.s32.totalorder %s35, 0
      %p433 = por %p431, %p432
      %p434 = scmp.ne.s32.totalorder %s426, %s428
      %p435 = scmp.eq.s32.totalorder %s40, 1
      %p436 = por %p434, %p435
      %p437 = scmp.ne.s32.totalorder %s428, %s429
      %p438 = scmp.eq.s32.totalorder %s40, 0
      %p439 = por %p437, %p438
      %p440 = scmp.ne.s32.totalorder %s428, %s429
      %p441 = scmp.eq.s32.totalorder %s41, 1
      %p442 = por %p440, %p441
      %p444 = scmp.ne.s32.totalorder %s429, %s443
      %p445 = scmp.eq.s32.totalorder %s41, 0
      %p446 = por %p444, %p445
      %s448 = sadd.s32 %s447, 1
      %p451 = scmp.eq.s32.totalorder %s35, 1
      %p452 = scmp.ne.s32.totalorder %s447, %s449
      %p453 = scmp.eq.s32.totalorder %s35, 0
      %p454 = por %p452, %p453
      %p455 = scmp.ne.s32.totalorder %s447, %s449
      %p456 = scmp.eq.s32.totalorder %s40, 1
      %p457 = por %p455, %p456
      %p458 = scmp.ne.s32.totalorder %s449, %s450
      %p459 = scmp.eq.s32.totalorder %s40, 0
      %p460 = por %p458, %p459
      %p461 = scmp.ne.s32.totalorder %s449, %s450
      %p462 = scmp.eq.s32.totalorder %s41, 1
      %p463 = por %p461, %p462
      %p465 = scmp.ne.s32.totalorder %s450, %s464
      %p466 = scmp.eq.s32.totalorder %s41, 0
      %p467 = por %p465, %p466
      %s469 = sadd.s32 %s468, 1
      %p472 = scmp.eq.s32.totalorder %s35, 1
      %p473 = scmp.ne.s32.totalorder %s468, %s470
      %p474 = scmp.eq.s32.totalorder %s35, 0
      %p475 = por %p473, %p474
      %p476 = scmp.ne.s32.totalorder %s468, %s470
      %p477 = scmp.eq.s32.totalorder %s40, 1
      %p478 = por %p476, %p477
      %p479 = scmp.ne.s32.totalorder %s470, %s471
      %p480 = scmp.eq.s32.totalorder %s40, 0
      %p481 = por %p479, %p480
      %p482 = scmp.ne.s32.totalorder %s470, %s471
      %p483 = scmp.eq.s32.totalorder %s41, 1
      %p484 = por %p482, %p483
      %p486 = scmp.ne.s32.totalorder %s471, %s485
      %p487 = scmp.eq.s32.totalorder %s41, 0
      %p488 = por %p486, %p487
      %s489 = ssub.s32 %s35, %s42
      %p490 = scmp.eq.s32.totalorder %s489, 0
      %s492 = sadd.s32 %s491, 1
      %s493 = scalar_select %p490, %s491, %s492
      %p496 = pneg %p490
      %p497 = scmp.eq.s32.totalorder %s35, 1
      %p498 = por %p496, %p497
      %p499 = scmp.ne.s32.totalorder %s491, %s494
      %p500 = scmp.eq.s32.totalorder %s35, 0
      %p501 = por %p499, %p500
      %p502 = scmp.ne.s32.totalorder %s491, %s494
      %p503 = scmp.eq.s32.totalorder %s40, 1
      %p504 = por %p502, %p503
      %p505 = scmp.ne.s32.totalorder %s494, %s495
      %p506 = scmp.eq.s32.totalorder %s40, 0
      %p507 = por %p505, %p506
      %p508 = scmp.ne.s32.totalorder %s494, %s495
      %p509 = scmp.eq.s32.totalorder %s41, 1
      %p510 = por %p508, %p509
      %p512 = scmp.ne.s32.totalorder %s495, %s511
      %p513 = scmp.eq.s32.totalorder %s41, 0
      %p514 = por %p512, %p513
      %p515 = scmp.le.s32.totalorder 1, %s35
      %p516 = scmp.lt.s32.totalorder %s35, 3
      %p517 = pnand %p515, %p516
      %p518 = pneg %p517
      // Predicated region
      $region9: #{soli_cnn_taskb1_forward_prepared.1} parent=5 // pred_check
        _
      $region10: #{soli_cnn_taskb1_forward_prepared.1} parent=5 // pred_check_branch
        %520 = sbr.rel (%p517) target = $region12
      $region11: #{soli_cnn_taskb1_forward_prepared.1} parent=5 // pred_region
        %s521 = ssub.s32 %s35, 1
        // Predicated region
        $region13: #{soli_cnn_taskb1_forward_prepared.1} parent=11 // pred_check
          %p522 = pneg %p82
        $region14: #{soli_cnn_taskb1_forward_prepared.1} parent=11 // pred_check_branch
          %524 = sbr.rel (%p522) target = $region16
        $region15: #{soli_cnn_taskb1_forward_prepared.1} parent=11 // pred_region
          _
        $region16: #{soli_cnn_taskb1_forward_prepared.1} parent=11 // pred_fallthru
          _
        // Predicated region
        $region17: #{soli_cnn_taskb1_forward_prepared.1} parent=11 // pred_check
          %p525 = pneg %p103
        $region18: #{soli_cnn_taskb1_forward_prepared.1} parent=11 // pred_check_branch
          %527 = sbr.rel (%p525) target = $region20
        $region19: #{soli_cnn_taskb1_forward_prepared.1} parent=11 // pred_region
          _
        $region20: #{soli_cnn_taskb1_forward_prepared.1} parent=11 // pred_fallthru
          _
        // Predicated region
        $region21: #{soli_cnn_taskb1_forward_prepared.1} parent=11 // pred_check
          %p528 = pneg %p124
        $region22: #{soli_cnn_taskb1_forward_prepared.1} parent=11 // pred_check_branch
          %530 = sbr.rel (%p528) target = $region24
        $region23: #{soli_cnn_taskb1_forward_prepared.1} parent=11 // pred_region
          %s532 = ssub.s32 32, 32
          %533 = vsyncadd [#allocation3], %s532
          %s535 = sshll.u32 [#allocation2], 4
          %s536 = int_to_ptr.vmem [resolvable:$true] %s535
          %538 = dma.hbm_to_vmem [thread:$0]  %s3, 32, %s536, [#allocation3]
        $region24: #{soli_cnn_taskb1_forward_prepared.1} parent=11 // pred_fallthru
          _
        // Predicated region
        $region25: #{soli_cnn_taskb1_forward_prepared.1} parent=11 // pred_check
          %p539 = pneg %p145
        $region26: #{soli_cnn_taskb1_forward_prepared.1} parent=11 // pred_check_branch
          %541 = sbr.rel (%p539) target = $region28
        $region27: #{soli_cnn_taskb1_forward_prepared.1} parent=11 // pred_region
          %s543 = ssub.s32 256, 256
          %544 = vsyncadd [#allocation6], %s543
          %s545 = sshll.u32 [#allocation5], 4
          %s546 = int_to_ptr.vmem [resolvable:$true] %s545
          %551 = dma.hbm_to_vmem [thread:$0]  %s4, 256, %s546, [#allocation6], 128, 128, 8
        $region28: #{soli_cnn_taskb1_forward_prepared.1} parent=11 // pred_fallthru
          _
        // Predicated region
        $region29: #{soli_cnn_taskb1_forward_prepared.1} parent=11 // pred_check
          %p552 = pneg %p166
        $region30: #{soli_cnn_taskb1_forward_prepared.1} parent=11 // pred_check_branch
          %554 = sbr.rel (%p552) target = $region32
        $region31: #{soli_cnn_taskb1_forward_prepared.1} parent=11 // pred_region
          %s556 = ssub.s32 4096, 4096
          %557 = vsyncadd [#allocation6], %s556
          %s558 = sshll.u32 [#allocation7], 4
          %s559 = int_to_ptr.vmem [resolvable:$true] %s558
          %564 = dma.hbm_to_vmem [thread:$0]  %s5, 4096, %s559, [#allocation6], 128, 128, 8
        $region32: #{soli_cnn_taskb1_forward_prepared.1} parent=11 // pred_fallthru
          _
        // Predicated region
        $region33: #{soli_cnn_taskb1_forward_prepared.1} parent=11 // pred_check
          %p565 = pneg %p187
        $region34: #{soli_cnn_taskb1_forward_prepared.1} parent=11 // pred_check_branch
          %567 = sbr.rel (%p565) target = $region36
        $region35: #{soli_cnn_taskb1_forward_prepared.1} parent=11 // pred_region
          %s569 = ssub.s32 768, 768
          %570 = vsyncadd [#allocation9], %s569
          %s571 = sshll.u32 [#allocation8], 4
          %s572 = int_to_ptr.vmem [resolvable:$true] %s571
          %577 = dma.hbm_to_vmem [thread:$0]  %s6, 768, %s572, [#allocation9], 128, 128, 8
        $region36: #{soli_cnn_taskb1_forward_prepared.1} parent=11 // pred_fallthru
          _
        // Predicated region
        $region37: #{soli_cnn_taskb1_forward_prepared.1} parent=11 // pred_check
          %p578 = pneg %p208
        $region38: #{soli_cnn_taskb1_forward_prepared.1} parent=11 // pred_check_branch
          %580 = sbr.rel (%p578) target = $region40
        $region39: #{soli_cnn_taskb1_forward_prepared.1} parent=11 // pred_region
          %s582 = ssub.s32 12288, 12288
          %583 = vsyncadd [#allocation9], %s582
          %s584 = sshll.u32 [#allocation10], 4
          %s585 = int_to_ptr.vmem [resolvable:$true] %s584
          %590 = dma.hbm_to_vmem [thread:$0]  %s7, 12288, %s585, [#allocation9], 256, 256, 16
        $region40: #{soli_cnn_taskb1_forward_prepared.1} parent=11 // pred_fallthru
          _
        // Predicated region
        $region41: #{soli_cnn_taskb1_forward_prepared.1} parent=11 // pred_check
          %p591 = pneg %p229
        $region42: #{soli_cnn_taskb1_forward_prepared.1} parent=11 // pred_check_branch
          %593 = sbr.rel (%p591) target = $region44
        $region43: #{soli_cnn_taskb1_forward_prepared.1} parent=11 // pred_region
          %s595 = ssub.s32 32, 32
          %596 = vsyncadd [#allocation12], %s595
          %s598 = sshll.u32 [#allocation11], 4
          %s599 = int_to_ptr.vmem [resolvable:$true] %s598
          %601 = dma.hbm_to_vmem [thread:$0]  %s8, 32, %s599, [#allocation12]
        $region44: #{soli_cnn_taskb1_forward_prepared.1} parent=11 // pred_fallthru
          _
        // Predicated region
        $region45: #{soli_cnn_taskb1_forward_prepared.1} parent=11 // pred_check
          %p602 = pneg %p250
        $region46: #{soli_cnn_taskb1_forward_prepared.1} parent=11 // pred_check_branch
          %604 = sbr.rel (%p602) target = $region48
        $region47: #{soli_cnn_taskb1_forward_prepared.1} parent=11 // pred_region
          _
        $region48: #{soli_cnn_taskb1_forward_prepared.1} parent=11 // pred_fallthru
          _
        // Predicated region
        $region49: #{soli_cnn_taskb1_forward_prepared.1} parent=11 // pred_check
          %p605 = pneg %p271
        $region50: #{soli_cnn_taskb1_forward_prepared.1} parent=11 // pred_check_branch
          %607 = sbr.rel (%p605) target = $region52
        $region51: #{soli_cnn_taskb1_forward_prepared.1} parent=11 // pred_region
          %s609 = ssub.s32 4096, 4096
          %610 = vsyncadd [#allocation12], %s609
          %s611 = sshll.u32 [#allocation13], 4
          %s612 = int_to_ptr.vmem [resolvable:$true] %s611
          %617 = dma.hbm_to_vmem [thread:$0]  %s10, 4096, %s612, [#allocation12], 128, 128, 8
        $region52: #{soli_cnn_taskb1_forward_prepared.1} parent=11 // pred_fallthru
          _
        // Predicated region
        $region53: #{soli_cnn_taskb1_forward_prepared.1} parent=11 // pred_check
          %p618 = pneg %p292
        $region54: #{soli_cnn_taskb1_forward_prepared.1} parent=11 // pred_check_branch
          %620 = sbr.rel (%p618) target = $region56
        $region55: #{soli_cnn_taskb1_forward_prepared.1} parent=11 // pred_region
          _
        $region56: #{soli_cnn_taskb1_forward_prepared.1} parent=11 // pred_fallthru
          _
        // Predicated region
        $region57: #{soli_cnn_taskb1_forward_prepared.1} parent=11 // pred_check
          %p621 = pneg %p313
        $region58: #{soli_cnn_taskb1_forward_prepared.1} parent=11 // pred_check_branch
          %623 = sbr.rel (%p621) target = $region60
        $region59: #{soli_cnn_taskb1_forward_prepared.1} parent=11 // pred_region
          _
        $region60: #{soli_cnn_taskb1_forward_prepared.1} parent=11 // pred_fallthru
          _
        // Predicated region
        $region61: #{soli_cnn_taskb1_forward_prepared.1} parent=11 // pred_check
          %p624 = pneg %p334
        $region62: #{soli_cnn_taskb1_forward_prepared.1} parent=11 // pred_check_branch
          %626 = sbr.rel (%p624) target = $region64
        $region63: #{soli_cnn_taskb1_forward_prepared.1} parent=11 // pred_region
          %s628 = ssub.s32 16, 16
          %629 = vsyncadd [#allocation15], %s628
          %s631 = sshll.u32 [#allocation14], 4
          %s632 = int_to_ptr.vmem [resolvable:$true] %s631
          %634 = dma.hbm_to_vmem [thread:$0]  %s13, 16, %s632, [#allocation15]
        $region64: #{soli_cnn_taskb1_forward_prepared.1} parent=11 // pred_fallthru
          _
        // Predicated region
        $region65: #{soli_cnn_taskb1_forward_prepared.1} parent=11 // pred_check
          %p635 = pneg %p355
        $region66: #{soli_cnn_taskb1_forward_prepared.1} parent=11 // pred_check_branch
          %637 = sbr.rel (%p635) target = $region68
        $region67: #{soli_cnn_taskb1_forward_prepared.1} parent=11 // pred_region
          %s639 = ssub.s32 64, 64
          %640 = vsyncadd [#allocation15], %s639
          %s642 = sshll.u32 [#allocation16], 4
          %s643 = int_to_ptr.vmem [resolvable:$true] %s642
          %645 = dma.hbm_to_vmem [thread:$0]  %s14, 64, %s643, [#allocation15]
        $region68: #{soli_cnn_taskb1_forward_prepared.1} parent=11 // pred_fallthru
          _
        // Predicated region
        $region69: #{soli_cnn_taskb1_forward_prepared.1} parent=11 // pred_check
          %p646 = pneg %p376
        $region70: #{soli_cnn_taskb1_forward_prepared.1} parent=11 // pred_check_branch
          %648 = sbr.rel (%p646) target = $region72
        $region71: #{soli_cnn_taskb1_forward_prepared.1} parent=11 // pred_region
          _
        $region72: #{soli_cnn_taskb1_forward_prepared.1} parent=11 // pred_fallthru
          _
        // Predicated region
        $region73: #{soli_cnn_taskb1_forward_prepared.1} parent=11 // pred_check
          %p649 = pneg %p397
        $region74: #{soli_cnn_taskb1_forward_prepared.1} parent=11 // pred_check_branch
          %651 = sbr.rel (%p649) target = $region76
        $region75: #{soli_cnn_taskb1_forward_prepared.1} parent=11 // pred_region
          _
        $region76: #{soli_cnn_taskb1_forward_prepared.1} parent=11 // pred_fallthru
          _
        // Predicated region
        $region77: #{soli_cnn_taskb1_forward_prepared.1} parent=11 // pred_check
          %p652 = pneg %p418
        $region78: #{soli_cnn_taskb1_forward_prepared.1} parent=11 // pred_check_branch
          %654 = sbr.rel (%p652) target = $region80
        $region79: #{soli_cnn_taskb1_forward_prepared.1} parent=11 // pred_region
          _
        $region80: #{soli_cnn_taskb1_forward_prepared.1} parent=11 // pred_fallthru
          _
        // Predicated region
        $region81: #{soli_cnn_taskb1_forward_prepared.1} parent=11 // pred_check
          %p655 = pneg %p439
        $region82: #{soli_cnn_taskb1_forward_prepared.1} parent=11 // pred_check_branch
          %657 = sbr.rel (%p655) target = $region84
        $region83: #{soli_cnn_taskb1_forward_prepared.1} parent=11 // pred_region
          _
        $region84: #{soli_cnn_taskb1_forward_prepared.1} parent=11 // pred_fallthru
          _
        // Predicated region
        $region85: #{soli_cnn_taskb1_forward_prepared.1} parent=11 // pred_check
          %p658 = pneg %p460
        $region86: #{soli_cnn_taskb1_forward_prepared.1} parent=11 // pred_check_branch
          %660 = sbr.rel (%p658) target = $region88
        $region87: #{soli_cnn_taskb1_forward_prepared.1} parent=11 // pred_region
          _
        $region88: #{soli_cnn_taskb1_forward_prepared.1} parent=11 // pred_fallthru
          _
        // Predicated region
        $region89: #{soli_cnn_taskb1_forward_prepared.1} parent=11 // pred_check
          %p661 = pneg %p481
        $region90: #{soli_cnn_taskb1_forward_prepared.1} parent=11 // pred_check_branch
          %663 = sbr.rel (%p661) target = $region92
        $region91: #{soli_cnn_taskb1_forward_prepared.1} parent=11 // pred_region
          _
        $region92: #{soli_cnn_taskb1_forward_prepared.1} parent=11 // pred_fallthru
          _
      $region12: #{soli_cnn_taskb1_forward_prepared.1} parent=5 // pred_fallthru
        _
      %p664 = scmp.lt.s32.totalorder %s35, 2
      // Predicated region
      $region93: #{soli_cnn_taskb1_forward_prepared.1} parent=5 // pred_check
        %p665 = pneg %p664
      $region94: #{soli_cnn_taskb1_forward_prepared.1} parent=5 // pred_check_branch
        %667 = sbr.rel (%p665) target = $region96
      $region95: #{soli_cnn_taskb1_forward_prepared.1} parent=5 // pred_region
        // Predicated region
        $region97: #{soli_cnn_taskb1_forward_prepared.1} parent=95 // pred_check
          %p668 = pneg %p55
        $region98: #{soli_cnn_taskb1_forward_prepared.1} parent=95 // pred_check_branch
          %670 = sbr.rel (%p668) target = $region100
        $region99: #{soli_cnn_taskb1_forward_prepared.1} parent=95 // pred_region
          %p671 = scmp.lt.s32.totalorder %s35, 1
          %s672 = scalar_select %p671, %s35, 1
          %s673 = smul.addr %s672, 4
          %s674 = smul.addr %s673, 8
          %s675 = scalar_lea.vmem %s0, %s674
        $region100: #{soli_cnn_taskb1_forward_prepared.1} parent=95 // pred_fallthru
          _
      $region96: #{soli_cnn_taskb1_forward_prepared.1} parent=5 // pred_fallthru
        _
      %p676 = scmp.le.s32.totalorder 1, %s35
      %p677 = scmp.lt.s32.totalorder %s35, 3
      %p678 = pnand %p676, %p677
      %p679 = pneg %p678
      // Predicated region
      $region101: #{soli_cnn_taskb1_forward_prepared.1} parent=5 // pred_check
        _
      $region102: #{soli_cnn_taskb1_forward_prepared.1} parent=5 // pred_check_branch
        %681 = sbr.rel (%p678) target = $region104
      $region103: #{soli_cnn_taskb1_forward_prepared.1} parent=5 // pred_region
        %s682 = ssub.s32 %s35, 1
        // Predicated region
        $region105: #{soli_cnn_taskb1_forward_prepared.1} parent=103 // pred_check
          %p683 = pneg %p124
        $region106: #{soli_cnn_taskb1_forward_prepared.1} parent=103 // pred_check_branch
          %685 = sbr.rel (%p683) target = $region108
        $region107: #{soli_cnn_taskb1_forward_prepared.1} parent=103 // pred_region
          %686 = dma.done [#allocation3], 32
        $region108: #{soli_cnn_taskb1_forward_prepared.1} parent=103 // pred_fallthru
          _
        // Predicated region
        $region109: #{soli_cnn_taskb1_forward_prepared.1} parent=103 // pred_check
          %p687 = pneg %p145
        $region110: #{soli_cnn_taskb1_forward_prepared.1} parent=103 // pred_check_branch
          %689 = sbr.rel (%p687) target = $region112
        $region111: #{soli_cnn_taskb1_forward_prepared.1} parent=103 // pred_region
          %690 = dma.done [#allocation6], 256
        $region112: #{soli_cnn_taskb1_forward_prepared.1} parent=103 // pred_fallthru
          _
        // Predicated region
        $region113: #{soli_cnn_taskb1_forward_prepared.1} parent=103 // pred_check
          %p691 = pneg %p166
        $region114: #{soli_cnn_taskb1_forward_prepared.1} parent=103 // pred_check_branch
          %693 = sbr.rel (%p691) target = $region116
        $region115: #{soli_cnn_taskb1_forward_prepared.1} parent=103 // pred_region
          %694 = dma.done [#allocation6], 4096
        $region116: #{soli_cnn_taskb1_forward_prepared.1} parent=103 // pred_fallthru
          _
        // Predicated region
        $region117: #{soli_cnn_taskb1_forward_prepared.1} parent=103 // pred_check
          %p695 = pneg %p187
        $region118: #{soli_cnn_taskb1_forward_prepared.1} parent=103 // pred_check_branch
          %697 = sbr.rel (%p695) target = $region120
        $region119: #{soli_cnn_taskb1_forward_prepared.1} parent=103 // pred_region
          %698 = dma.done [#allocation9], 768
        $region120: #{soli_cnn_taskb1_forward_prepared.1} parent=103 // pred_fallthru
          _
        // Predicated region
        $region121: #{soli_cnn_taskb1_forward_prepared.1} parent=103 // pred_check
          %p699 = pneg %p208
        $region122: #{soli_cnn_taskb1_forward_prepared.1} parent=103 // pred_check_branch
          %701 = sbr.rel (%p699) target = $region124
        $region123: #{soli_cnn_taskb1_forward_prepared.1} parent=103 // pred_region
          %702 = dma.done [#allocation9], 12288
        $region124: #{soli_cnn_taskb1_forward_prepared.1} parent=103 // pred_fallthru
          _
        // Predicated region
        $region125: #{soli_cnn_taskb1_forward_prepared.1} parent=103 // pred_check
          %p703 = pneg %p229
        $region126: #{soli_cnn_taskb1_forward_prepared.1} parent=103 // pred_check_branch
          %705 = sbr.rel (%p703) target = $region128
        $region127: #{soli_cnn_taskb1_forward_prepared.1} parent=103 // pred_region
          %706 = dma.done [#allocation12], 32
        $region128: #{soli_cnn_taskb1_forward_prepared.1} parent=103 // pred_fallthru
          _
        // Predicated region
        $region129: #{soli_cnn_taskb1_forward_prepared.1} parent=103 // pred_check
          %p707 = pneg %p271
        $region130: #{soli_cnn_taskb1_forward_prepared.1} parent=103 // pred_check_branch
          %709 = sbr.rel (%p707) target = $region132
        $region131: #{soli_cnn_taskb1_forward_prepared.1} parent=103 // pred_region
          %710 = dma.done [#allocation12], 4096
        $region132: #{soli_cnn_taskb1_forward_prepared.1} parent=103 // pred_fallthru
          _
        // Predicated region
        $region133: #{soli_cnn_taskb1_forward_prepared.1} parent=103 // pred_check
          %p711 = pneg %p334
        $region134: #{soli_cnn_taskb1_forward_prepared.1} parent=103 // pred_check_branch
          %713 = sbr.rel (%p711) target = $region136
        $region135: #{soli_cnn_taskb1_forward_prepared.1} parent=103 // pred_region
          %714 = dma.done [#allocation15], 16
        $region136: #{soli_cnn_taskb1_forward_prepared.1} parent=103 // pred_fallthru
          _
        // Predicated region
        $region137: #{soli_cnn_taskb1_forward_prepared.1} parent=103 // pred_check
          %p715 = pneg %p355
        $region138: #{soli_cnn_taskb1_forward_prepared.1} parent=103 // pred_check_branch
          %717 = sbr.rel (%p715) target = $region140
        $region139: #{soli_cnn_taskb1_forward_prepared.1} parent=103 // pred_region
          %718 = dma.done [#allocation15], 64
        $region140: #{soli_cnn_taskb1_forward_prepared.1} parent=103 // pred_fallthru
          _
        %p719 = scmp.lt.s32.totalorder %s40, 1
        %s720 = scalar_select %p719, %s40, 1
        %s721 = smul.addr %s720, 4
        %s722 = smul.addr %s721, 8
        %s723 = scalar_lea.vmem %s0, %s722
        %p724 = pneg %p61
        %p725 = pneg %p58
        %p726 = pneg %p82
        %p727 = pneg %p79
        %p728 = pneg %p103
        %p729 = pneg %p100
        %p730 = pneg %p124
        %p731 = pneg %p121
        %p732 = pneg %p145
        %p733 = pneg %p142
        %p734 = pneg %p166
        %p735 = pneg %p163
        %p736 = pneg %p187
        %p737 = pneg %p184
        %p738 = pneg %p208
        %p739 = pneg %p205
        %p740 = pneg %p229
        %p741 = pneg %p226
        %p742 = pneg %p250
        %p743 = pneg %p247
        %p744 = pneg %p271
        %p745 = pneg %p268
        %p746 = pneg %p292
        %p747 = pneg %p289
        %p748 = pneg %p313
        %p749 = pneg %p310
        %p750 = pneg %p334
        %p751 = pneg %p331
        %p752 = pneg %p355
        %p753 = pneg %p352
        %p754 = pneg %p376
        %p755 = pneg %p373
        %p756 = pneg %p397
        %p757 = pneg %p394
        %p758 = pneg %p418
        %p759 = pneg %p415
        %p760 = pneg %p439
        %p761 = pneg %p436
        %p762 = pneg %p460
        %p763 = pneg %p457
        %p764 = pneg %p481
        %p765 = pneg %p478
        %p766 = pneg %p507
        %p767 = pneg %p504
        %s768 = sand.u32 %s494, 1
        %s769 = scalar_lea.sflag [#allocation4], %s768
        %s770 = sand.u32 %s494, 1
        %s771 = scalar_lea.vmem [#allocation17], %s770
        %p772 = scmp.lt.s32.totalorder %s40, 1
        %s773 = scalar_select %p772, %s40, 1
        %s774 = smul.addr %s773, 4
        %s775 = smul.addr %s774, 8
        %s776 = scalar_lea.vmem %s0, %s775
        %v777 = vld [vmem:[%s776] sm:$0xff]
        %v778 = vld [vmem:[%s776 + $0x8] sm:$0xff]
        %v779 = vld [vmem:[%s776 + $0x10] sm:$0xff]
        %v780 = vld [vmem:[%s776 + $0x18] sm:$0xff]
        %v781 = vld [vmem:[%s1] sm:$0xff]
        %v782 = vld [vmem:[%s1 + $0x8] sm:$0xff]
        %v783 = vld [vmem:[%s1 + $0x10] sm:$0xff]
        %v784 = vld [vmem:[%s1 + $0x18] sm:$0xff]
        %vm785 = vcmask 261120
        %v787 = vsel %vm785, %v781, 0
        %v790 = vsel %vm785, %v782, 0
        %v793 = vsel %vm785, %v783, 0
        %v796 = vsel %vm785, %v784, 0
        %798 = vmatprep.subr.mxu0 0.0
        %799 = vmatpush1.msra.mxu0 0.0
        %800 = vmatprep.subr.mxu0 0.0
        %801 = vmatpush1.msra.mxu0 0.0
        %802 = vmatprep.subr.mxu0 0.0
        %803 = vmatpush1.msra.mxu0 0.0
        %804 = vmatprep.subr.mxu0 0.0
        %805 = vmatpush1.msra.mxu0 0.0
        %806 = vmatprep.subr.mxu0 0.0
        %807 = vmatpush1.msra.mxu0 0.0
        %808 = vmatprep.subr.mxu0 0.0
        %809 = vmatpush1.msra.mxu0 0.0
        %810 = vmatprep.subr.mxu0 0.0
        %811 = vmatpush1.msra.mxu0 0.0
        %812 = vmatprep.subr.mxu0 0.0
        %813 = vmatpush1.msra.mxu0 0.0
        %814 = vmatprep.subr.mxu0 0.0
        %815 = vmatpush1.msra.mxu0 0.0
        %816 = vmatprep.subr.mxu0 0.0
        %817 = vmatpush1.msra.mxu0 0.0
        %818 = vmatprep.subr.mxu0 0.0
        %819 = vmatpush1.msra.mxu0 0.0
        %820 = vmatprep.subr.mxu0 0.0
        %821 = vmatpush1.msra.mxu0 0.0
        %822 = vmatprep.subr.mxu0 0.0
        %823 = vmatpush1.msra.mxu0 %v780
        %824 = vmatprep.subr.mxu0 0.0
        %825 = vmatpush1.msra.mxu0 %v779
        %826 = vmatprep.subr.mxu0 0.0
        %827 = vmatpush1.msra.mxu0 %v778
        %828 = vmatprep.subr.mxu0 0.0
        %829 = vmatpush1.msra.mxu0 %v777
        %830 = vmatprep.subr.mxu0 0.0
        %831 = vmatpush2.msra.mxu0 0.0
        %832 = vmatprep.subr.mxu0 0.0
        %833 = vmatpush2.msra.mxu0 0.0
        %834 = vmatprep.subr.mxu0 0.0
        %835 = vmatpush2.msra.mxu0 0.0
        %836 = vmatprep.subr.mxu0 0.0
        %837 = vmatpush2.msra.mxu0 0.0
        %838 = vmatprep.subr.mxu0 0.0
        %839 = vmatpush2.msra.mxu0 0.0
        %840 = vmatprep.subr.mxu0 0.0
        %841 = vmatpush2.msra.mxu0 0.0
        %842 = vmatprep.subr.mxu0 0.0
        %843 = vmatpush2.msra.mxu0 0.0
        %844 = vmatprep.subr.mxu0 0.0
        %845 = vmatpush2.msra.mxu0 0.0
        %846 = vmatprep.subr.mxu0 0.0
        %847 = vmatpush2.msra.mxu0 0.0
        %848 = vmatprep.subr.mxu0 0.0
        %849 = vmatpush2.msra.mxu0 0.0
        %850 = vmatprep.subr.mxu0 0.0
        %851 = vmatpush2.msra.mxu0 0.0
        %852 = vmatprep.subr.mxu0 0.0
        %853 = vmatpush2.msra.mxu0 0.0
        %854 = vmatprep.subr.mxu0 0.0
        %855 = vmatpush2.msra.mxu0 0.0
        %856 = vmatprep.subr.mxu0 0.0
        %857 = vmatpush2.msra.mxu0 0.0
        %858 = vmatprep.subr.mxu0 0.0
        %859 = vmatpush2.msra.mxu0 0.0
        %860 = vmatprep.subr.mxu0 0.0
        %861 = vmatpush2.msra.mxu0 0.0
        %862 = vmatprep.mubr.f32.mxu0 0.0
        %863 = vmatmul.mubr.f32.gmra.mxu0 %v787
        %v864 = vpop.f32.mrf.mxu0
        %v865 = vadd.f32 0.0, %v864
        %v866 = vpop.f32.mrf.mxu0
        %867 = vmatprep.mubr.f32.mxu0 0.0
        %868 = vmatmul.mubr.f32.gmra.mxu0 %v790
        %v869 = vpop.f32.mrf.mxu0
        %v870 = vadd.f32 0.0, %v869
        %v871 = vpop.f32.mrf.mxu0
        %872 = vmatprep.mubr.f32.mxu0 0.0
        %873 = vmatmul.mubr.f32.gmra.mxu0 %v793
        %v874 = vpop.f32.mrf.mxu0
        %v875 = vadd.f32 0.0, %v874
        %v876 = vpop.f32.mrf.mxu0
        %877 = vmatprep.mubr.f32.mxu0 0.0
        %878 = vmatmul.mubr.f32.gmra.mxu0 %v796
        %v879 = vpop.f32.mrf.mxu0
        %v880 = vadd.f32 0.0, %v879
        %v881 = vpop.f32.mrf.mxu0
        %882 = vdwg.mxu0
        %v883 = vld [vmem:[%s2] sm:$0xff]
        %v884 = vld [vmem:[%s2 + $0x8] sm:$0xff]
        %v885 = vld [vmem:[%s2 + $0x10] sm:$0xff]
        %v886 = vld [vmem:[%s2 + $0x18] sm:$0xff]
        %v887 = vld [vmem:[%s2 + $0x20] sm:$0xff]
        %v888 = vld [vmem:[%s2 + $0x28] sm:$0xff]
        %v889 = vld [vmem:[%s2 + $0x30] sm:$0xff]
        %v890 = vld [vmem:[%s2 + $0x38] sm:$0xff]
        %v891 = vld [vmem:[%s2 + $0x40] sm:$0xff]
        %v892 = vld [vmem:[%s2 + $0x48] sm:$0xff]
        %v893 = vld [vmem:[%s2 + $0x50] sm:$0xff]
        %v894 = vld [vmem:[%s2 + $0x58] sm:$0xff]
        %v895 = vld [vmem:[%s2 + $0x60] sm:$0xff]
        %v896 = vld [vmem:[%s2 + $0x68] sm:$0xff]
        %v897 = vld [vmem:[%s2 + $0x70] sm:$0xff]
        %v898 = vld [vmem:[%s2 + $0x78] sm:$0xff]
        %v899 = vld [vmem:[%s2 + $0x80] sm:$0xff]
        %v900 = vld [vmem:[%s2 + $0x88] sm:$0xff]
        %v901 = vld [vmem:[%s2 + $0x90] sm:$0xff]
        %v902 = vld [vmem:[%s2 + $0x98] sm:$0xff]
        %v903 = vld [vmem:[%s2 + $0xa0] sm:$0xff]
        %v904 = vld [vmem:[%s2 + $0xa8] sm:$0xff]
        %v905 = vld [vmem:[%s2 + $0xb0] sm:$0xff]
        %v906 = vld [vmem:[%s2 + $0xb8] sm:$0xff]
        %v907 = vld [vmem:[%s2 + $0xc0] sm:$0xff]
        %v908 = vld [vmem:[%s2 + $0xc8] sm:$0xff]
        %v909 = vld [vmem:[%s2 + $0xd0] sm:$0xff]
        %v910 = vld [vmem:[%s2 + $0xd8] sm:$0xff]
        %v911 = vld [vmem:[%s2 + $0xe0] sm:$0xff]
        %v912 = vld [vmem:[%s2 + $0xe8] sm:$0xff]
        %v913 = vld [vmem:[%s2 + $0xf0] sm:$0xff]
        %v914 = vld [vmem:[%s2 + $0xf8] sm:$0xff]
        %s915 = scalar_lea.vmem %s1, 32
        %v916 = vld [vmem:[%s915] sm:$0xff]
        %v917 = vld [vmem:[%s915 + $0x8] sm:$0xff]
        %v918 = vld [vmem:[%s915 + $0x10] sm:$0xff]
        %v919 = vld [vmem:[%s915 + $0x18] sm:$0xff]
        %v921 = vsel %vm785, %v916, 0
        %v924 = vsel %vm785, %v917, 0
        %v927 = vsel %vm785, %v918, 0
        %v930 = vsel %vm785, %v919, 0
        %932 = vmatprep.subr.mxu0 0.0
        %933 = vmatpush1.msra.mxu0 0.0
        %934 = vmatprep.subr.mxu0 0.0
        %935 = vmatpush1.msra.mxu0 0.0
        %936 = vmatprep.subr.mxu0 0.0
        %937 = vmatpush1.msra.mxu0 0.0
        %938 = vmatprep.subr.mxu0 0.0
        %939 = vmatpush1.msra.mxu0 0.0
        %940 = vmatprep.subr.mxu0 0.0
        %941 = vmatpush1.msra.mxu0 0.0
        %942 = vmatprep.subr.mxu0 0.0
        %943 = vmatpush1.msra.mxu0 0.0
        %944 = vmatprep.subr.mxu0 0.0
        %945 = vmatpush1.msra.mxu0 0.0
        %946 = vmatprep.subr.mxu0 0.0
        %947 = vmatpush1.msra.mxu0 0.0
        %948 = vmatprep.subr.mxu0 0.0
        %949 = vmatpush1.msra.mxu0 0.0
        %950 = vmatprep.subr.mxu0 0.0
        %951 = vmatpush1.msra.mxu0 0.0
        %952 = vmatprep.subr.mxu0 0.0
        %953 = vmatpush1.msra.mxu0 0.0
        %954 = vmatprep.subr.mxu0 0.0
        %955 = vmatpush1.msra.mxu0 0.0
        %956 = vmatprep.subr.mxu0 0.0
        %957 = vmatpush1.msra.mxu0 %v780
        %958 = vmatprep.subr.mxu0 0.0
        %959 = vmatpush1.msra.mxu0 %v779
        %960 = vmatprep.subr.mxu0 0.0
        %961 = vmatpush1.msra.mxu0 %v778
        %962 = vmatprep.subr.mxu0 0.0
        %963 = vmatpush1.msra.mxu0 %v777
        %964 = vmatprep.subr.mxu0 0.0
        %965 = vmatpush2.msra.mxu0 0.0
        %966 = vmatprep.subr.mxu0 0.0
        %967 = vmatpush2.msra.mxu0 0.0
        %968 = vmatprep.subr.mxu0 0.0
        %969 = vmatpush2.msra.mxu0 0.0
        %970 = vmatprep.subr.mxu0 0.0
        %971 = vmatpush2.msra.mxu0 0.0
        %972 = vmatprep.subr.mxu0 0.0
        %973 = vmatpush2.msra.mxu0 0.0
        %974 = vmatprep.subr.mxu0 0.0
        %975 = vmatpush2.msra.mxu0 0.0
        %976 = vmatprep.subr.mxu0 0.0
        %977 = vmatpush2.msra.mxu0 0.0
        %978 = vmatprep.subr.mxu0 0.0
        %979 = vmatpush2.msra.mxu0 0.0
        %980 = vmatprep.subr.mxu0 0.0
        %981 = vmatpush2.msra.mxu0 0.0
        %982 = vmatprep.subr.mxu0 0.0
        %983 = vmatpush2.msra.mxu0 0.0
        %984 = vmatprep.subr.mxu0 0.0
        %985 = vmatpush2.msra.mxu0 0.0
        %986 = vmatprep.subr.mxu0 0.0
        %987 = vmatpush2.msra.mxu0 0.0
        %988 = vmatprep.subr.mxu0 0.0
        %989 = vmatpush2.msra.mxu0 0.0
        %990 = vmatprep.subr.mxu0 0.0
        %991 = vmatpush2.msra.mxu0 0.0
        %992 = vmatprep.subr.mxu0 0.0
        %993 = vmatpush2.msra.mxu0 0.0
        %994 = vmatprep.subr.mxu0 0.0
        %995 = vmatpush2.msra.mxu0 0.0
        %996 = vmatprep.mubr.f32.mxu0 0.0
        %997 = vmatmul.mubr.f32.gmra.mxu0 %v921
        %v998 = vpop.f32.mrf.mxu0
        %v999 = vadd.f32 0.0, %v998
        %v1000 = vpop.f32.mrf.mxu0
        %1001 = vmatprep.mubr.f32.mxu0 0.0
        %1002 = vmatmul.mubr.f32.gmra.mxu0 %v924
        %v1003 = vpop.f32.mrf.mxu0
        %v1004 = vadd.f32 0.0, %v1003
        %v1005 = vpop.f32.mrf.mxu0
        %1006 = vmatprep.mubr.f32.mxu0 0.0
        %1007 = vmatmul.mubr.f32.gmra.mxu0 %v927
        %v1008 = vpop.f32.mrf.mxu0
        %v1009 = vadd.f32 0.0, %v1008
        %v1010 = vpop.f32.mrf.mxu0
        %1011 = vmatprep.mubr.f32.mxu0 0.0
        %1012 = vmatmul.mubr.f32.gmra.mxu0 %v930
        %v1013 = vpop.f32.mrf.mxu0
        %v1014 = vadd.f32 0.0, %v1013
        %v1015 = vpop.f32.mrf.mxu0
        %1016 = vdwg.mxu0
        %s1017 = scalar_lea.vmem %s2, 256
        %v1018 = vld [vmem:[%s1017] sm:$0xff]
        %v1019 = vld [vmem:[%s1017 + $0x8] sm:$0xff]
        %v1020 = vld [vmem:[%s1017 + $0x10] sm:$0xff]
        %v1021 = vld [vmem:[%s1017 + $0x18] sm:$0xff]
        %v1022 = vld [vmem:[%s1017 + $0x20] sm:$0xff]
        %v1023 = vld [vmem:[%s1017 + $0x28] sm:$0xff]
        %v1024 = vld [vmem:[%s1017 + $0x30] sm:$0xff]
        %v1025 = vld [vmem:[%s1017 + $0x38] sm:$0xff]
        %v1026 = vld [vmem:[%s1017 + $0x40] sm:$0xff]
        %v1027 = vld [vmem:[%s1017 + $0x48] sm:$0xff]
        %v1028 = vld [vmem:[%s1017 + $0x50] sm:$0xff]
        %v1029 = vld [vmem:[%s1017 + $0x58] sm:$0xff]
        %v1030 = vld [vmem:[%s1017 + $0x60] sm:$0xff]
        %v1031 = vld [vmem:[%s1017 + $0x68] sm:$0xff]
        %v1032 = vld [vmem:[%s1017 + $0x70] sm:$0xff]
        %v1033 = vld [vmem:[%s1017 + $0x78] sm:$0xff]
        %v1034 = vld [vmem:[%s1017 + $0x80] sm:$0xff]
        %v1035 = vld [vmem:[%s1017 + $0x88] sm:$0xff]
        %v1036 = vld [vmem:[%s1017 + $0x90] sm:$0xff]
        %v1037 = vld [vmem:[%s1017 + $0x98] sm:$0xff]
        %v1038 = vld [vmem:[%s1017 + $0xa0] sm:$0xff]
        %v1039 = vld [vmem:[%s1017 + $0xa8] sm:$0xff]
        %v1040 = vld [vmem:[%s1017 + $0xb0] sm:$0xff]
        %v1041 = vld [vmem:[%s1017 + $0xb8] sm:$0xff]
        %v1042 = vld [vmem:[%s1017 + $0xc0] sm:$0xff]
        %v1043 = vld [vmem:[%s1017 + $0xc8] sm:$0xff]
        %v1044 = vld [vmem:[%s1017 + $0xd0] sm:$0xff]
        %v1045 = vld [vmem:[%s1017 + $0xd8] sm:$0xff]
        %v1046 = vld [vmem:[%s1017 + $0xe0] sm:$0xff]
        %v1047 = vld [vmem:[%s1017 + $0xe8] sm:$0xff]
        %v1048 = vld [vmem:[%s1017 + $0xf0] sm:$0xff]
        %v1049 = vld [vmem:[%s1017 + $0xf8] sm:$0xff]
        %1050 = vmatprep.subr.mxu0 %v1049
        %1051 = vmatpush1.msra.mxu0 %v1048
        %1052 = vmatprep.subr.mxu0 %v1047
        %1053 = vmatpush1.msra.mxu0 %v1046
        %1054 = vmatprep.subr.mxu0 %v1045
        %1055 = vmatpush1.msra.mxu0 %v1044
        %1056 = vmatprep.subr.mxu0 %v1043
        %1057 = vmatpush1.msra.mxu0 %v1042
        %1058 = vmatprep.subr.mxu0 %v1041
        %1059 = vmatpush1.msra.mxu0 %v1040
        %1060 = vmatprep.subr.mxu0 %v1039
        %1061 = vmatpush1.msra.mxu0 %v1038
        %1062 = vmatprep.subr.mxu0 %v1037
        %1063 = vmatpush1.msra.mxu0 %v1036
        %1064 = vmatprep.subr.mxu0 %v1035
        %1065 = vmatpush1.msra.mxu0 %v1034
        %1066 = vmatprep.subr.mxu0 %v1033
        %1067 = vmatpush1.msra.mxu0 %v1032
        %1068 = vmatprep.subr.mxu0 %v1031
        %1069 = vmatpush1.msra.mxu0 %v1030
        %1070 = vmatprep.subr.mxu0 %v1029
        %1071 = vmatpush1.msra.mxu0 %v1028
        %1072 = vmatprep.subr.mxu0 %v1027
        %1073 = vmatpush1.msra.mxu0 %v1026
        %1074 = vmatprep.subr.mxu0 %v1025
        %1075 = vmatpush1.msra.mxu0 %v1024
        %1076 = vmatprep.subr.mxu0 %v1023
        %1077 = vmatpush1.msra.mxu0 %v1022
        %1078 = vmatprep.subr.mxu0 %v1021
        %1079 = vmatpush1.msra.mxu0 %v1020
        %1080 = vmatprep.subr.mxu0 %v1019
        %1081 = vmatpush1.msra.mxu0 %v1018
        %1082 = vmatprep.subr.mxu0 0.0
        %1083 = vmatpush2.msra.mxu0 0.0
        %1084 = vmatprep.subr.mxu0 0.0
        %1085 = vmatpush2.msra.mxu0 0.0
        %1086 = vmatprep.subr.mxu0 0.0
        %1087 = vmatpush2.msra.mxu0 0.0
        %1088 = vmatprep.subr.mxu0 0.0
        %1089 = vmatpush2.msra.mxu0 0.0
        %1090 = vmatprep.subr.mxu0 0.0
        %1091 = vmatpush2.msra.mxu0 0.0
        %1092 = vmatprep.subr.mxu0 0.0
        %1093 = vmatpush2.msra.mxu0 0.0
        %1094 = vmatprep.subr.mxu0 0.0
        %1095 = vmatpush2.msra.mxu0 0.0
        %1096 = vmatprep.subr.mxu0 0.0
        %1097 = vmatpush2.msra.mxu0 0.0
        %1098 = vmatprep.subr.mxu0 0.0
        %1099 = vmatpush2.msra.mxu0 0.0
        %1100 = vmatprep.subr.mxu0 0.0
        %1101 = vmatpush2.msra.mxu0 0.0
        %1102 = vmatprep.subr.mxu0 0.0
        %1103 = vmatpush2.msra.mxu0 0.0
        %1104 = vmatprep.subr.mxu0 0.0
        %1105 = vmatpush2.msra.mxu0 0.0
        %1106 = vmatprep.subr.mxu0 0.0
        %1107 = vmatpush2.msra.mxu0 0.0
        %1108 = vmatprep.subr.mxu0 0.0
        %1109 = vmatpush2.msra.mxu0 0.0
        %1110 = vmatprep.subr.mxu0 0.0
        %1111 = vmatpush2.msra.mxu0 0.0
        %1112 = vmatprep.subr.mxu0 0.0
        %1113 = vmatpush2.msra.mxu0 0.0
        %1114 = vmatprep.mubr.f32.mxu0 0.0
        %1115 = vmatmul.mubr.f32.gmra.mxu0 %v999
        %v1116 = vpop.f32.mrf.mxu0
        %v1117 = vadd.f32 0.0, %v1116
        %v1118 = vpop.f32.mrf.mxu0
        %v1119 = vadd.f32 0.0, %v1118
        %1120 = vmatprep.mubr.f32.mxu0 0.0
        %1121 = vmatmul.mubr.f32.gmra.mxu0 %v1004
        %v1122 = vpop.f32.mrf.mxu0
        %v1123 = vadd.f32 0.0, %v1122
        %v1124 = vpop.f32.mrf.mxu0
        %v1125 = vadd.f32 0.0, %v1124
        %1126 = vmatprep.mubr.f32.mxu0 0.0
        %1127 = vmatmul.mubr.f32.gmra.mxu0 %v1009
        %v1128 = vpop.f32.mrf.mxu0
        %v1129 = vadd.f32 0.0, %v1128
        %v1130 = vpop.f32.mrf.mxu0
        %v1131 = vadd.f32 0.0, %v1130
        %1132 = vmatprep.mubr.f32.mxu0 0.0
        %1133 = vmatmul.mubr.f32.gmra.mxu0 %v1014
        %v1134 = vpop.f32.mrf.mxu0
        %v1135 = vadd.f32 0.0, %v1134
        %v1136 = vpop.f32.mrf.mxu0
        %v1137 = vadd.f32 0.0, %v1136
        %1138 = vdwg.mxu0
        %1139 = vmatprep.subr.mxu0 %v914
        %1140 = vmatpush1.msra.mxu0 %v913
        %1141 = vmatprep.subr.mxu0 %v912
        %1142 = vmatpush1.msra.mxu0 %v911
        %1143 = vmatprep.subr.mxu0 %v910
        %1144 = vmatpush1.msra.mxu0 %v909
        %1145 = vmatprep.subr.mxu0 %v908
        %1146 = vmatpush1.msra.mxu0 %v907
        %1147 = vmatprep.subr.mxu0 %v906
        %1148 = vmatpush1.msra.mxu0 %v905
        %1149 = vmatprep.subr.mxu0 %v904
        %1150 = vmatpush1.msra.mxu0 %v903
        %1151 = vmatprep.subr.mxu0 %v902
        %1152 = vmatpush1.msra.mxu0 %v901
        %1153 = vmatprep.subr.mxu0 %v900
        %1154 = vmatpush1.msra.mxu0 %v899
        %1155 = vmatprep.subr.mxu0 %v898
        %1156 = vmatpush1.msra.mxu0 %v897
        %1157 = vmatprep.subr.mxu0 %v896
        %1158 = vmatpush1.msra.mxu0 %v895
        %1159 = vmatprep.subr.mxu0 %v894
        %1160 = vmatpush1.msra.mxu0 %v893
        %1161 = vmatprep.subr.mxu0 %v892
        %1162 = vmatpush1.msra.mxu0 %v891
        %1163 = vmatprep.subr.mxu0 %v890
        %1164 = vmatpush1.msra.mxu0 %v889
        %1165 = vmatprep.subr.mxu0 %v888
        %1166 = vmatpush1.msra.mxu0 %v887
        %1167 = vmatprep.subr.mxu0 %v886
        %1168 = vmatpush1.msra.mxu0 %v885
        %1169 = vmatprep.subr.mxu0 %v884
        %1170 = vmatpush1.msra.mxu0 %v883
        %1171 = vmatprep.subr.mxu0 0.0
        %1172 = vmatpush2.msra.mxu0 0.0
        %1173 = vmatprep.subr.mxu0 0.0
        %1174 = vmatpush2.msra.mxu0 0.0
        %1175 = vmatprep.subr.mxu0 0.0
        %1176 = vmatpush2.msra.mxu0 0.0
        %1177 = vmatprep.subr.mxu0 0.0
        %1178 = vmatpush2.msra.mxu0 0.0
        %1179 = vmatprep.subr.mxu0 0.0
        %1180 = vmatpush2.msra.mxu0 0.0
        %1181 = vmatprep.subr.mxu0 0.0
        %1182 = vmatpush2.msra.mxu0 0.0
        %1183 = vmatprep.subr.mxu0 0.0
        %1184 = vmatpush2.msra.mxu0 0.0
        %1185 = vmatprep.subr.mxu0 0.0
        %1186 = vmatpush2.msra.mxu0 0.0
        %1187 = vmatprep.subr.mxu0 0.0
        %1188 = vmatpush2.msra.mxu0 0.0
        %1189 = vmatprep.subr.mxu0 0.0
        %1190 = vmatpush2.msra.mxu0 0.0
        %1191 = vmatprep.subr.mxu0 0.0
        %1192 = vmatpush2.msra.mxu0 0.0
        %1193 = vmatprep.subr.mxu0 0.0
        %1194 = vmatpush2.msra.mxu0 0.0
        %1195 = vmatprep.subr.mxu0 0.0
        %1196 = vmatpush2.msra.mxu0 0.0
        %1197 = vmatprep.subr.mxu0 0.0
        %1198 = vmatpush2.msra.mxu0 0.0
        %1199 = vmatprep.subr.mxu0 0.0
        %1200 = vmatpush2.msra.mxu0 0.0
        %1201 = vmatprep.subr.mxu0 0.0
        %1202 = vmatpush2.msra.mxu0 0.0
        %1203 = vmatprep.mubr.f32.mxu0 0.0
        %1204 = vmatmul.mubr.f32.gmra.mxu0 %v865
        %v1205 = vpop.f32.mrf.mxu0
        %v1206 = vadd.f32 %v1117, %v1205
        %v1207 = vpop.f32.mrf.mxu0
        %v1208 = vadd.f32 %v1119, %v1207
        %1209 = vmatprep.mubr.f32.mxu0 0.0
        %1210 = vmatmul.mubr.f32.gmra.mxu0 %v870
        %v1211 = vpop.f32.mrf.mxu0
        %v1212 = vadd.f32 %v1123, %v1211
        %v1213 = vpop.f32.mrf.mxu0
        %v1214 = vadd.f32 %v1125, %v1213
        %1215 = vmatprep.mubr.f32.mxu0 0.0
        %1216 = vmatmul.mubr.f32.gmra.mxu0 %v875
        %v1217 = vpop.f32.mrf.mxu0
        %v1218 = vadd.f32 %v1129, %v1217
        %v1219 = vpop.f32.mrf.mxu0
        %v1220 = vadd.f32 %v1131, %v1219
        %1221 = vmatprep.mubr.f32.mxu0 0.0
        %1222 = vmatmul.mubr.f32.gmra.mxu0 %v880
        %v1223 = vpop.f32.mrf.mxu0
        %v1224 = vadd.f32 %v1135, %v1223
        %v1225 = vpop.f32.mrf.mxu0
        %v1226 = vadd.f32 %v1137, %v1225
        %1227 = vdwg.mxu0
        %s1228 = scalar_lea.vmem %s1, 64
        %v1229 = vld [vmem:[%s1228] sm:$0xff]
        %v1230 = vld [vmem:[%s1228 + $0x8] sm:$0xff]
        %v1231 = vld [vmem:[%s1228 + $0x10] sm:$0xff]
        %v1232 = vld [vmem:[%s1228 + $0x18] sm:$0xff]
        %v1234 = vsel %vm785, %v1229, 0
        %v1237 = vsel %vm785, %v1230, 0
        %v1240 = vsel %vm785, %v1231, 0
        %v1243 = vsel %vm785, %v1232, 0
        %1245 = vmatprep.subr.mxu0 0.0
        %1246 = vmatpush1.msra.mxu0 0.0
        %1247 = vmatprep.subr.mxu0 0.0
        %1248 = vmatpush1.msra.mxu0 0.0
        %1249 = vmatprep.subr.mxu0 0.0
        %1250 = vmatpush1.msra.mxu0 0.0
        %1251 = vmatprep.subr.mxu0 0.0
        %1252 = vmatpush1.msra.mxu0 0.0
        %1253 = vmatprep.subr.mxu0 0.0
        %1254 = vmatpush1.msra.mxu0 0.0
        %1255 = vmatprep.subr.mxu0 0.0
        %1256 = vmatpush1.msra.mxu0 0.0
        %1257 = vmatprep.subr.mxu0 0.0
        %1258 = vmatpush1.msra.mxu0 0.0
        %1259 = vmatprep.subr.mxu0 0.0
        %1260 = vmatpush1.msra.mxu0 0.0
        %1261 = vmatprep.subr.mxu0 0.0
        %1262 = vmatpush1.msra.mxu0 0.0
        %1263 = vmatprep.subr.mxu0 0.0
        %1264 = vmatpush1.msra.mxu0 0.0
        %1265 = vmatprep.subr.mxu0 0.0
        %1266 = vmatpush1.msra.mxu0 0.0
        %1267 = vmatprep.subr.mxu0 0.0
        %1268 = vmatpush1.msra.mxu0 0.0
        %1269 = vmatprep.subr.mxu0 0.0
        %1270 = vmatpush1.msra.mxu0 %v780
        %1271 = vmatprep.subr.mxu0 0.0
        %1272 = vmatpush1.msra.mxu0 %v779
        %1273 = vmatprep.subr.mxu0 0.0
        %1274 = vmatpush1.msra.mxu0 %v778
        %1275 = vmatprep.subr.mxu0 0.0
        %1276 = vmatpush1.msra.mxu0 %v777
        %1277 = vmatprep.subr.mxu0 0.0
        %1278 = vmatpush2.msra.mxu0 0.0
        %1279 = vmatprep.subr.mxu0 0.0
        %1280 = vmatpush2.msra.mxu0 0.0
        %1281 = vmatprep.subr.mxu0 0.0
        %1282 = vmatpush2.msra.mxu0 0.0
        %1283 = vmatprep.subr.mxu0 0.0
        %1284 = vmatpush2.msra.mxu0 0.0
        %1285 = vmatprep.subr.mxu0 0.0
        %1286 = vmatpush2.msra.mxu0 0.0
        %1287 = vmatprep.subr.mxu0 0.0
        %1288 = vmatpush2.msra.mxu0 0.0
        %1289 = vmatprep.subr.mxu0 0.0
        %1290 = vmatpush2.msra.mxu0 0.0
        %1291 = vmatprep.subr.mxu0 0.0
        %1292 = vmatpush2.msra.mxu0 0.0
        %1293 = vmatprep.subr.mxu0 0.0
        %1294 = vmatpush2.msra.mxu0 0.0
        %1295 = vmatprep.subr.mxu0 0.0
        %1296 = vmatpush2.msra.mxu0 0.0
        %1297 = vmatprep.subr.mxu0 0.0
        %1298 = vmatpush2.msra.mxu0 0.0
        %1299 = vmatprep.subr.mxu0 0.0
        %1300 = vmatpush2.msra.mxu0 0.0
        %1301 = vmatprep.subr.mxu0 0.0
        %1302 = vmatpush2.msra.mxu0 0.0
        %1303 = vmatprep.subr.mxu0 0.0
        %1304 = vmatpush2.msra.mxu0 0.0
        %1305 = vmatprep.subr.mxu0 0.0
        %1306 = vmatpush2.msra.mxu0 0.0
        %1307 = vmatprep.subr.mxu0 0.0
        %1308 = vmatpush2.msra.mxu0 0.0
        %1309 = vmatprep.mubr.f32.mxu0 0.0
        %1310 = vmatmul.mubr.f32.gmra.mxu0 %v1234
        %v1311 = vpop.f32.mrf.mxu0
        %v1312 = vadd.f32 0.0, %v1311
        %v1313 = vpop.f32.mrf.mxu0
        %1314 = vmatprep.mubr.f32.mxu0 0.0
        %1315 = vmatmul.mubr.f32.gmra.mxu0 %v1237
        %v1316 = vpop.f32.mrf.mxu0
        %v1317 = vadd.f32 0.0, %v1316
        %v1318 = vpop.f32.mrf.mxu0
        %1319 = vmatprep.mubr.f32.mxu0 0.0
        %1320 = vmatmul.mubr.f32.gmra.mxu0 %v1240
        %v1321 = vpop.f32.mrf.mxu0
        %v1322 = vadd.f32 0.0, %v1321
        %v1323 = vpop.f32.mrf.mxu0
        %1324 = vmatprep.mubr.f32.mxu0 0.0
        %1325 = vmatmul.mubr.f32.gmra.mxu0 %v1243
        %v1326 = vpop.f32.mrf.mxu0
        %v1327 = vadd.f32 0.0, %v1326
        %v1328 = vpop.f32.mrf.mxu0
        %1329 = vdwg.mxu0
        %s1330 = scalar_lea.vmem %s2, 512
        %v1331 = vld [vmem:[%s1330] sm:$0xff]
        %v1332 = vld [vmem:[%s1330 + $0x8] sm:$0xff]
        %v1333 = vld [vmem:[%s1330 + $0x10] sm:$0xff]
        %v1334 = vld [vmem:[%s1330 + $0x18] sm:$0xff]
        %v1335 = vld [vmem:[%s1330 + $0x20] sm:$0xff]
        %v1336 = vld [vmem:[%s1330 + $0x28] sm:$0xff]
        %v1337 = vld [vmem:[%s1330 + $0x30] sm:$0xff]
        %v1338 = vld [vmem:[%s1330 + $0x38] sm:$0xff]
        %v1339 = vld [vmem:[%s1330 + $0x40] sm:$0xff]
        %v1340 = vld [vmem:[%s1330 + $0x48] sm:$0xff]
        %v1341 = vld [vmem:[%s1330 + $0x50] sm:$0xff]
        %v1342 = vld [vmem:[%s1330 + $0x58] sm:$0xff]
        %v1343 = vld [vmem:[%s1330 + $0x60] sm:$0xff]
        %v1344 = vld [vmem:[%s1330 + $0x68] sm:$0xff]
        %v1345 = vld [vmem:[%s1330 + $0x70] sm:$0xff]
        %v1346 = vld [vmem:[%s1330 + $0x78] sm:$0xff]
        %v1347 = vld [vmem:[%s1330 + $0x80] sm:$0xff]
        %v1348 = vld [vmem:[%s1330 + $0x88] sm:$0xff]
        %v1349 = vld [vmem:[%s1330 + $0x90] sm:$0xff]
        %v1350 = vld [vmem:[%s1330 + $0x98] sm:$0xff]
        %v1351 = vld [vmem:[%s1330 + $0xa0] sm:$0xff]
        %v1352 = vld [vmem:[%s1330 + $0xa8] sm:$0xff]
        %v1353 = vld [vmem:[%s1330 + $0xb0] sm:$0xff]
        %v1354 = vld [vmem:[%s1330 + $0xb8] sm:$0xff]
        %v1355 = vld [vmem:[%s1330 + $0xc0] sm:$0xff]
        %v1356 = vld [vmem:[%s1330 + $0xc8] sm:$0xff]
        %v1357 = vld [vmem:[%s1330 + $0xd0] sm:$0xff]
        %v1358 = vld [vmem:[%s1330 + $0xd8] sm:$0xff]
        %v1359 = vld [vmem:[%s1330 + $0xe0] sm:$0xff]
        %v1360 = vld [vmem:[%s1330 + $0xe8] sm:$0xff]
        %v1361 = vld [vmem:[%s1330 + $0xf0] sm:$0xff]
        %v1362 = vld [vmem:[%s1330 + $0xf8] sm:$0xff]
        %1363 = vmatprep.subr.mxu0 %v1362
        %1364 = vmatpush1.msra.mxu0 %v1361
        %1365 = vmatprep.subr.mxu0 %v1360
        %1366 = vmatpush1.msra.mxu0 %v1359
        %1367 = vmatprep.subr.mxu0 %v1358
        %1368 = vmatpush1.msra.mxu0 %v1357
        %1369 = vmatprep.subr.mxu0 %v1356
        %1370 = vmatpush1.msra.mxu0 %v1355
        %1371 = vmatprep.subr.mxu0 %v1354
        %1372 = vmatpush1.msra.mxu0 %v1353
        %1373 = vmatprep.subr.mxu0 %v1352
        %1374 = vmatpush1.msra.mxu0 %v1351
        %1375 = vmatprep.subr.mxu0 %v1350
        %1376 = vmatpush1.msra.mxu0 %v1349
        %1377 = vmatprep.subr.mxu0 %v1348
        %1378 = vmatpush1.msra.mxu0 %v1347
        %1379 = vmatprep.subr.mxu0 %v1346
        %1380 = vmatpush1.msra.mxu0 %v1345
        %1381 = vmatprep.subr.mxu0 %v1344
        %1382 = vmatpush1.msra.mxu0 %v1343
        %1383 = vmatprep.subr.mxu0 %v1342
        %1384 = vmatpush1.msra.mxu0 %v1341
        %1385 = vmatprep.subr.mxu0 %v1340
        %1386 = vmatpush1.msra.mxu0 %v1339
        %1387 = vmatprep.subr.mxu0 %v1338
        %1388 = vmatpush1.msra.mxu0 %v1337
        %1389 = vmatprep.subr.mxu0 %v1336
        %1390 = vmatpush1.msra.mxu0 %v1335
        %1391 = vmatprep.subr.mxu0 %v1334
        %1392 = vmatpush1.msra.mxu0 %v1333
        %1393 = vmatprep.subr.mxu0 %v1332
        %1394 = vmatpush1.msra.mxu0 %v1331
        %1395 = vmatprep.subr.mxu0 0.0
        %1396 = vmatpush2.msra.mxu0 0.0
        %1397 = vmatprep.subr.mxu0 0.0
        %1398 = vmatpush2.msra.mxu0 0.0
        %1399 = vmatprep.subr.mxu0 0.0
        %1400 = vmatpush2.msra.mxu0 0.0
        %1401 = vmatprep.subr.mxu0 0.0
        %1402 = vmatpush2.msra.mxu0 0.0
        %1403 = vmatprep.subr.mxu0 0.0
        %1404 = vmatpush2.msra.mxu0 0.0
        %1405 = vmatprep.subr.mxu0 0.0
        %1406 = vmatpush2.msra.mxu0 0.0
        %1407 = vmatprep.subr.mxu0 0.0
        %1408 = vmatpush2.msra.mxu0 0.0
        %1409 = vmatprep.subr.mxu0 0.0
        %1410 = vmatpush2.msra.mxu0 0.0
        %1411 = vmatprep.subr.mxu0 0.0
        %1412 = vmatpush2.msra.mxu0 0.0
        %1413 = vmatprep.subr.mxu0 0.0
        %1414 = vmatpush2.msra.mxu0 0.0
        %1415 = vmatprep.subr.mxu0 0.0
        %1416 = vmatpush2.msra.mxu0 0.0
        %1417 = vmatprep.subr.mxu0 0.0
        %1418 = vmatpush2.msra.mxu0 0.0
        %1419 = vmatprep.subr.mxu0 0.0
        %1420 = vmatpush2.msra.mxu0 0.0
        %1421 = vmatprep.subr.mxu0 0.0
        %1422 = vmatpush2.msra.mxu0 0.0
        %1423 = vmatprep.subr.mxu0 0.0
        %1424 = vmatpush2.msra.mxu0 0.0
        %1425 = vmatprep.subr.mxu0 0.0
        %1426 = vmatpush2.msra.mxu0 0.0
        %1427 = vmatprep.mubr.f32.mxu0 0.0
        %1428 = vmatmul.mubr.f32.gmra.mxu0 %v1312
        %v1429 = vpop.f32.mrf.mxu0
        %v1430 = vadd.f32 0.0, %v1429
        %v1431 = vpop.f32.mrf.mxu0
        %v1432 = vadd.f32 0.0, %v1431
        %1433 = vmatprep.mubr.f32.mxu0 0.0
        %1434 = vmatmul.mubr.f32.gmra.mxu0 %v1317
        %v1435 = vpop.f32.mrf.mxu0
        %v1436 = vadd.f32 0.0, %v1435
        %v1437 = vpop.f32.mrf.mxu0
        %v1438 = vadd.f32 0.0, %v1437
        %1439 = vmatprep.mubr.f32.mxu0 0.0
        %1440 = vmatmul.mubr.f32.gmra.mxu0 %v1322
        %v1441 = vpop.f32.mrf.mxu0
        %v1442 = vadd.f32 0.0, %v1441
        %v1443 = vpop.f32.mrf.mxu0
        %v1444 = vadd.f32 0.0, %v1443
        %1445 = vmatprep.mubr.f32.mxu0 0.0
        %1446 = vmatmul.mubr.f32.gmra.mxu0 %v1327
        %v1447 = vpop.f32.mrf.mxu0
        %v1448 = vadd.f32 0.0, %v1447
        %v1449 = vpop.f32.mrf.mxu0
        %v1450 = vadd.f32 0.0, %v1449
        %1451 = vdwg.mxu0
        %v1452 = vadd.f32 %v1206, %v1430
        %v1453 = vadd.f32 %v1208, %v1432
        %v1454 = vadd.f32 %v1212, %v1436
        %v1455 = vadd.f32 %v1214, %v1438
        %v1456 = vadd.f32 %v1218, %v1442
        %v1457 = vadd.f32 %v1220, %v1444
        %v1458 = vadd.f32 %v1224, %v1448
        %v1459 = vadd.f32 %v1226, %v1450
        %v1460 = vld [vmem:[#allocation2] sm:$0x3]
        %v1462 = vlaneseq
        %v1463 = vshrl.u32 %v1462, 7
        %v1464 = vsub.s32 0, %v1463
        %v1465 = vrot.slane %v1460, %v1464
        %v1466 = vlaneseq
        %v1467 = vshrl.u32 %v1466, 7
        %v1468 = vsub.s32 1, %v1467
        %v1469 = vrot.slane %v1460, %v1468
        %v1472 = vadd.f32 %v1452, %v1465
        %v1473 = vadd.f32 %v1453, %v1469
        %v1474 = vadd.f32 %v1454, %v1465
        %v1475 = vadd.f32 %v1455, %v1469
        %v1476 = vadd.f32 %v1456, %v1465
        %v1477 = vadd.f32 %v1457, %v1469
        %v1478 = vadd.f32 %v1458, %v1465
        %v1479 = vadd.f32 %v1459, %v1469
        %v1480 = vmax.f32 %v1472, 0.0
        %v1481 = vmax.f32 %v1473, 0.0
        %v1482 = vmax.f32 %v1474, 0.0
        %v1483 = vmax.f32 %v1475, 0.0
        %v1484 = vmax.f32 %v1476, 0.0
        %v1485 = vmax.f32 %v1477, 0.0
        %v1486 = vmax.f32 %v1478, 0.0
        %v1487 = vmax.f32 %v1479, 0.0
        %v1488 = vld [vmem:[#allocation5] sm:$0xff]
        %v1489 = vld [vmem:[#allocation5 + $0x8] sm:$0xff]
        %v1490 = vld [vmem:[#allocation7] sm:$0xff]
        %v1491 = vld [vmem:[#allocation7 + $0x8] sm:$0xff]
        %v1492 = vld [vmem:[#allocation7 + $0x10] sm:$0xff]
        %v1493 = vld [vmem:[#allocation7 + $0x18] sm:$0xff]
        %v1494 = vld [vmem:[#allocation7 + $0x20] sm:$0xff]
        %v1495 = vld [vmem:[#allocation7 + $0x28] sm:$0xff]
        %v1496 = vld [vmem:[#allocation7 + $0x30] sm:$0xff]
        %v1497 = vld [vmem:[#allocation7 + $0x38] sm:$0xff]
        %v1498 = vld [vmem:[#allocation7 + $0x40] sm:$0xff]
        %v1499 = vld [vmem:[#allocation7 + $0x48] sm:$0xff]
        %v1500 = vld [vmem:[#allocation7 + $0x50] sm:$0xff]
        %v1501 = vld [vmem:[#allocation7 + $0x58] sm:$0xff]
        %v1502 = vld [vmem:[#allocation7 + $0x60] sm:$0xff]
        %v1503 = vld [vmem:[#allocation7 + $0x68] sm:$0xff]
        %v1504 = vld [vmem:[#allocation7 + $0x70] sm:$0xff]
        %v1505 = vld [vmem:[#allocation7 + $0x78] sm:$0xff]
        %v1506 = vld [vmem:[#allocation7 + $0x80] sm:$0xff]
        %v1507 = vld [vmem:[#allocation7 + $0x88] sm:$0xff]
        %v1508 = vld [vmem:[#allocation7 + $0x90] sm:$0xff]
        %v1509 = vld [vmem:[#allocation7 + $0x98] sm:$0xff]
        %v1510 = vld [vmem:[#allocation7 + $0xa0] sm:$0xff]
        %v1511 = vld [vmem:[#allocation7 + $0xa8] sm:$0xff]
        %v1512 = vld [vmem:[#allocation7 + $0xb0] sm:$0xff]
        %v1513 = vld [vmem:[#allocation7 + $0xb8] sm:$0xff]
        %v1514 = vld [vmem:[#allocation7 + $0xc0] sm:$0xff]
        %v1515 = vld [vmem:[#allocation7 + $0xc8] sm:$0xff]
        %v1516 = vld [vmem:[#allocation7 + $0xd0] sm:$0xff]
        %v1517 = vld [vmem:[#allocation7 + $0xd8] sm:$0xff]
        %v1518 = vld [vmem:[#allocation7 + $0xe0] sm:$0xff]
        %v1519 = vld [vmem:[#allocation7 + $0xe8] sm:$0xff]
        %v1520 = vld [vmem:[#allocation7 + $0xf0] sm:$0xff]
        %v1521 = vld [vmem:[#allocation7 + $0xf8] sm:$0xff]
        %1522 = vmatprep.subr.mxu0 0.0
        %1523 = vmatpush1.msra.mxu0 %v1505
        %1524 = vmatprep.subr.mxu0 0.0
        %1525 = vmatpush1.msra.mxu0 %v1504
        %1526 = vmatprep.subr.mxu0 0.0
        %1527 = vmatpush1.msra.mxu0 %v1503
        %1528 = vmatprep.subr.mxu0 0.0
        %1529 = vmatpush1.msra.mxu0 %v1502
        %1530 = vmatprep.subr.mxu0 0.0
        %1531 = vmatpush1.msra.mxu0 %v1501
        %1532 = vmatprep.subr.mxu0 0.0
        %1533 = vmatpush1.msra.mxu0 %v1500
        %1534 = vmatprep.subr.mxu0 0.0
        %1535 = vmatpush1.msra.mxu0 %v1499
        %1536 = vmatprep.subr.mxu0 0.0
        %1537 = vmatpush1.msra.mxu0 %v1498
        %1538 = vmatprep.subr.mxu0 0.0
        %1539 = vmatpush1.msra.mxu0 %v1497
        %1540 = vmatprep.subr.mxu0 0.0
        %1541 = vmatpush1.msra.mxu0 %v1496
        %1542 = vmatprep.subr.mxu0 0.0
        %1543 = vmatpush1.msra.mxu0 %v1495
        %1544 = vmatprep.subr.mxu0 0.0
        %1545 = vmatpush1.msra.mxu0 %v1494
        %1546 = vmatprep.subr.mxu0 0.0
        %1547 = vmatpush1.msra.mxu0 %v1493
        %1548 = vmatprep.subr.mxu0 0.0
        %1549 = vmatpush1.msra.mxu0 %v1492
        %1550 = vmatprep.subr.mxu0 0.0
        %1551 = vmatpush1.msra.mxu0 %v1491
        %1552 = vmatprep.subr.mxu0 0.0
        %1553 = vmatpush1.msra.mxu0 %v1490
        %1554 = vmatprep.subr.mxu0 0.0
        %1555 = vmatpush2.msra.mxu0 %v1521
        %1556 = vmatprep.subr.mxu0 0.0
        %1557 = vmatpush2.msra.mxu0 %v1520
        %1558 = vmatprep.subr.mxu0 0.0
        %1559 = vmatpush2.msra.mxu0 %v1519
        %1560 = vmatprep.subr.mxu0 0.0
        %1561 = vmatpush2.msra.mxu0 %v1518
        %1562 = vmatprep.subr.mxu0 0.0
        %1563 = vmatpush2.msra.mxu0 %v1517
        %1564 = vmatprep.subr.mxu0 0.0
        %1565 = vmatpush2.msra.mxu0 %v1516
        %1566 = vmatprep.subr.mxu0 0.0
        %1567 = vmatpush2.msra.mxu0 %v1515
        %1568 = vmatprep.subr.mxu0 0.0
        %1569 = vmatpush2.msra.mxu0 %v1514
        %1570 = vmatprep.subr.mxu0 0.0
        %1571 = vmatpush2.msra.mxu0 %v1513
        %1572 = vmatprep.subr.mxu0 0.0
        %1573 = vmatpush2.msra.mxu0 %v1512
        %1574 = vmatprep.subr.mxu0 0.0
        %1575 = vmatpush2.msra.mxu0 %v1511
        %1576 = vmatprep.subr.mxu0 0.0
        %1577 = vmatpush2.msra.mxu0 %v1510
        %1578 = vmatprep.subr.mxu0 0.0
        %1579 = vmatpush2.msra.mxu0 %v1509
        %1580 = vmatprep.subr.mxu0 0.0
        %1581 = vmatpush2.msra.mxu0 %v1508
        %1582 = vmatprep.subr.mxu0 0.0
        %1583 = vmatpush2.msra.mxu0 %v1507
        %1584 = vmatprep.subr.mxu0 0.0
        %1585 = vmatpush2.msra.mxu0 %v1506
        %1586 = vmatprep.mubr.f32.mxu0 %v1481
        %1587 = vmatmul.mubr.f32.gmra.mxu0 %v1480
        %v1588 = vpop.f32.mrf.mxu0
        %v1589 = vadd.f32 0.0, %v1588
        %v1590 = vpop.f32.mrf.mxu0
        %1591 = vmatprep.mubr.f32.mxu0 %v1483
        %1592 = vmatmul.mubr.f32.gmra.mxu0 %v1482
        %v1593 = vpop.f32.mrf.mxu0
        %v1594 = vadd.f32 0.0, %v1593
        %v1595 = vpop.f32.mrf.mxu0
        %1596 = vmatprep.mubr.f32.mxu0 %v1485
        %1597 = vmatmul.mubr.f32.gmra.mxu0 %v1484
        %v1598 = vpop.f32.mrf.mxu0
        %v1599 = vadd.f32 0.0, %v1598
        %v1600 = vpop.f32.mrf.mxu0
        %1601 = vmatprep.mubr.f32.mxu0 %v1487
        %1602 = vmatmul.mubr.f32.gmra.mxu0 %v1486
        %v1603 = vpop.f32.mrf.mxu0
        %v1604 = vadd.f32 0.0, %v1603
        %v1605 = vpop.f32.mrf.mxu0
        %1606 = vdwg.mxu0
        %v1608 = vsel %vm785, %v1488, 0
        %v1611 = vsel %vm785, %v1489, 0
        %1613 = vmatprep.subr.mxu0 0.0
        %1614 = vmatpush1.msra.mxu0 0.0
        %1615 = vmatprep.subr.mxu0 0.0
        %1616 = vmatpush1.msra.mxu0 0.0
        %1617 = vmatprep.subr.mxu0 0.0
        %1618 = vmatpush1.msra.mxu0 0.0
        %1619 = vmatprep.subr.mxu0 0.0
        %1620 = vmatpush1.msra.mxu0 0.0
        %1621 = vmatprep.subr.mxu0 0.0
        %1622 = vmatpush1.msra.mxu0 0.0
        %1623 = vmatprep.subr.mxu0 0.0
        %1624 = vmatpush1.msra.mxu0 0.0
        %1625 = vmatprep.subr.mxu0 0.0
        %1626 = vmatpush1.msra.mxu0 0.0
        %1627 = vmatprep.subr.mxu0 0.0
        %1628 = vmatpush1.msra.mxu0 0.0
        %1629 = vmatprep.subr.mxu0 0.0
        %1630 = vmatpush1.msra.mxu0 0.0
        %1631 = vmatprep.subr.mxu0 0.0
        %1632 = vmatpush1.msra.mxu0 0.0
        %1633 = vmatprep.subr.mxu0 0.0
        %1634 = vmatpush1.msra.mxu0 0.0
        %1635 = vmatprep.subr.mxu0 0.0
        %1636 = vmatpush1.msra.mxu0 0.0
        %1637 = vmatprep.subr.mxu0 0.0
        %1638 = vmatpush1.msra.mxu0 %v1604
        %1639 = vmatprep.subr.mxu0 0.0
        %1640 = vmatpush1.msra.mxu0 %v1599
        %1641 = vmatprep.subr.mxu0 0.0
        %1642 = vmatpush1.msra.mxu0 %v1594
        %1643 = vmatprep.subr.mxu0 0.0
        %1644 = vmatpush1.msra.mxu0 %v1589
        %1645 = vmatprep.subr.mxu0 0.0
        %1646 = vmatpush2.msra.mxu0 0.0
        %1647 = vmatprep.subr.mxu0 0.0
        %1648 = vmatpush2.msra.mxu0 0.0
        %1649 = vmatprep.subr.mxu0 0.0
        %1650 = vmatpush2.msra.mxu0 0.0
        %1651 = vmatprep.subr.mxu0 0.0
        %1652 = vmatpush2.msra.mxu0 0.0
        %1653 = vmatprep.subr.mxu0 0.0
        %1654 = vmatpush2.msra.mxu0 0.0
        %1655 = vmatprep.subr.mxu0 0.0
        %1656 = vmatpush2.msra.mxu0 0.0
        %1657 = vmatprep.subr.mxu0 0.0
        %1658 = vmatpush2.msra.mxu0 0.0
        %1659 = vmatprep.subr.mxu0 0.0
        %1660 = vmatpush2.msra.mxu0 0.0
        %1661 = vmatprep.subr.mxu0 0.0
        %1662 = vmatpush2.msra.mxu0 0.0
        %1663 = vmatprep.subr.mxu0 0.0
        %1664 = vmatpush2.msra.mxu0 0.0
        %1665 = vmatprep.subr.mxu0 0.0
        %1666 = vmatpush2.msra.mxu0 0.0
        %1667 = vmatprep.subr.mxu0 0.0
        %1668 = vmatpush2.msra.mxu0 0.0
        %1669 = vmatprep.subr.mxu0 0.0
        %1670 = vmatpush2.msra.mxu0 0.0
        %1671 = vmatprep.subr.mxu0 0.0
        %1672 = vmatpush2.msra.mxu0 0.0
        %1673 = vmatprep.subr.mxu0 0.0
        %1674 = vmatpush2.msra.mxu0 0.0
        %1675 = vmatprep.subr.mxu0 0.0
        %1676 = vmatpush2.msra.mxu0 0.0
        %1677 = vmatprep.mubr.f32.mxu0 0.0
        %1678 = vmatmul.mubr.f32.gmra.mxu0 %v1608
        %v1679 = vpop.f32.mrf.mxu0
        %v1680 = vadd.f32 0.0, %v1679
        %v1681 = vpop.f32.mrf.mxu0
        %1682 = vmatprep.mubr.f32.mxu0 0.0
        %1683 = vmatmul.mubr.f32.gmra.mxu0 %v1611
        %v1684 = vpop.f32.mrf.mxu0
        %v1685 = vadd.f32 0.0, %v1684
        %v1686 = vpop.f32.mrf.mxu0
        %1687 = vdwg.mxu0
        %v1688 = vld [vmem:[#allocation8] sm:$0xff]
        %v1689 = vld [vmem:[#allocation8 + $0x8] sm:$0xff]
        %vm1690 = vcmask 130048
        %v1692 = vsel %vm1690, %v1688, 0
        %v1695 = vsel %vm1690, %v1689, 0
        %1697 = vmatprep.subr.mxu0 0.0
        %1698 = vmatpush1.msra.mxu0 0.0
        %1699 = vmatprep.subr.mxu0 0.0
        %1700 = vmatpush1.msra.mxu0 0.0
        %1701 = vmatprep.subr.mxu0 0.0
        %1702 = vmatpush1.msra.mxu0 0.0
        %1703 = vmatprep.subr.mxu0 0.0
        %1704 = vmatpush1.msra.mxu0 0.0
        %1705 = vmatprep.subr.mxu0 0.0
        %1706 = vmatpush1.msra.mxu0 0.0
        %1707 = vmatprep.subr.mxu0 0.0
        %1708 = vmatpush1.msra.mxu0 0.0
        %1709 = vmatprep.subr.mxu0 0.0
        %1710 = vmatpush1.msra.mxu0 0.0
        %1711 = vmatprep.subr.mxu0 0.0
        %1712 = vmatpush1.msra.mxu0 0.0
        %1713 = vmatprep.subr.mxu0 0.0
        %1714 = vmatpush1.msra.mxu0 0.0
        %1715 = vmatprep.subr.mxu0 0.0
        %1716 = vmatpush1.msra.mxu0 0.0
        %1717 = vmatprep.subr.mxu0 0.0
        %1718 = vmatpush1.msra.mxu0 0.0
        %1719 = vmatprep.subr.mxu0 0.0
        %1720 = vmatpush1.msra.mxu0 0.0
        %1721 = vmatprep.subr.mxu0 0.0
        %1722 = vmatpush1.msra.mxu0 0.0
        %1723 = vmatprep.subr.mxu0 0.0
        %1724 = vmatpush1.msra.mxu0 0.0
        %1725 = vmatprep.subr.mxu0 0.0
        %1726 = vmatpush1.msra.mxu0 %v1685
        %1727 = vmatprep.subr.mxu0 0.0
        %1728 = vmatpush1.msra.mxu0 %v1680
        %1729 = vmatprep.subr.mxu0 0.0
        %1730 = vmatpush2.msra.mxu0 0.0
        %1731 = vmatprep.subr.mxu0 0.0
        %1732 = vmatpush2.msra.mxu0 0.0
        %1733 = vmatprep.subr.mxu0 0.0
        %1734 = vmatpush2.msra.mxu0 0.0
        %1735 = vmatprep.subr.mxu0 0.0
        %1736 = vmatpush2.msra.mxu0 0.0
        %1737 = vmatprep.subr.mxu0 0.0
        %1738 = vmatpush2.msra.mxu0 0.0
        %1739 = vmatprep.subr.mxu0 0.0
        %1740 = vmatpush2.msra.mxu0 0.0
        %1741 = vmatprep.subr.mxu0 0.0
        %1742 = vmatpush2.msra.mxu0 0.0
        %1743 = vmatprep.subr.mxu0 0.0
        %1744 = vmatpush2.msra.mxu0 0.0
        %1745 = vmatprep.subr.mxu0 0.0
        %1746 = vmatpush2.msra.mxu0 0.0
        %1747 = vmatprep.subr.mxu0 0.0
        %1748 = vmatpush2.msra.mxu0 0.0
        %1749 = vmatprep.subr.mxu0 0.0
        %1750 = vmatpush2.msra.mxu0 0.0
        %1751 = vmatprep.subr.mxu0 0.0
        %1752 = vmatpush2.msra.mxu0 0.0
        %1753 = vmatprep.subr.mxu0 0.0
        %1754 = vmatpush2.msra.mxu0 0.0
        %1755 = vmatprep.subr.mxu0 0.0
        %1756 = vmatpush2.msra.mxu0 0.0
        %1757 = vmatprep.subr.mxu0 0.0
        %1758 = vmatpush2.msra.mxu0 0.0
        %1759 = vmatprep.subr.mxu0 0.0
        %1760 = vmatpush2.msra.mxu0 0.0
        %1761 = vmatprep.mubr.f32.mxu0 0.0
        %1762 = vmatmul.mubr.f32.gmra.mxu0 %v1692
        %v1763 = vpop.f32.mrf.mxu0
        %v1764 = vadd.f32 0.0, %v1763
        %v1765 = vpop.f32.mrf.mxu0
        %1766 = vmatprep.mubr.f32.mxu0 0.0
        %1767 = vmatmul.mubr.f32.gmra.mxu0 %v1695
        %v1768 = vpop.f32.mrf.mxu0
        %v1769 = vadd.f32 0.0, %v1768
        %v1770 = vpop.f32.mrf.mxu0
        %1771 = vdwg.mxu0
        %v1772 = vld [vmem:[#allocation10] sm:$0xff]
        %v1773 = vld [vmem:[#allocation10 + $0x8] sm:$0xff]
        %v1774 = vld [vmem:[#allocation10 + $0x10] sm:$0xff]
        %v1775 = vld [vmem:[#allocation10 + $0x18] sm:$0xff]
        %v1776 = vld [vmem:[#allocation10 + $0x20] sm:$0xff]
        %v1777 = vld [vmem:[#allocation10 + $0x28] sm:$0xff]
        %v1778 = vld [vmem:[#allocation10 + $0x30] sm:$0xff]
        %v1779 = vld [vmem:[#allocation10 + $0x38] sm:$0xff]
        %v1780 = vld [vmem:[#allocation10 + $0x40] sm:$0xff]
        %v1781 = vld [vmem:[#allocation10 + $0x48] sm:$0xff]
        %v1782 = vld [vmem:[#allocation10 + $0x50] sm:$0xff]
        %v1783 = vld [vmem:[#allocation10 + $0x58] sm:$0xff]
        %v1784 = vld [vmem:[#allocation10 + $0x60] sm:$0xff]
        %v1785 = vld [vmem:[#allocation10 + $0x68] sm:$0xff]
        %v1786 = vld [vmem:[#allocation10 + $0x70] sm:$0xff]
        %v1787 = vld [vmem:[#allocation10 + $0x78] sm:$0xff]
        %v1788 = vld [vmem:[#allocation10 + $0x80] sm:$0xff]
        %v1789 = vld [vmem:[#allocation10 + $0x88] sm:$0xff]
        %v1790 = vld [vmem:[#allocation10 + $0x90] sm:$0xff]
        %v1791 = vld [vmem:[#allocation10 + $0x98] sm:$0xff]
        %v1792 = vld [vmem:[#allocation10 + $0xa0] sm:$0xff]
        %v1793 = vld [vmem:[#allocation10 + $0xa8] sm:$0xff]
        %v1794 = vld [vmem:[#allocation10 + $0xb0] sm:$0xff]
        %v1795 = vld [vmem:[#allocation10 + $0xb8] sm:$0xff]
        %v1796 = vld [vmem:[#allocation10 + $0xc0] sm:$0xff]
        %v1797 = vld [vmem:[#allocation10 + $0xc8] sm:$0xff]
        %v1798 = vld [vmem:[#allocation10 + $0xd0] sm:$0xff]
        %v1799 = vld [vmem:[#allocation10 + $0xd8] sm:$0xff]
        %v1800 = vld [vmem:[#allocation10 + $0xe0] sm:$0xff]
        %v1801 = vld [vmem:[#allocation10 + $0xe8] sm:$0xff]
        %v1802 = vld [vmem:[#allocation10 + $0xf0] sm:$0xff]
        %v1803 = vld [vmem:[#allocation10 + $0xf8] sm:$0xff]
        %s1804 = scalar_lea.vmem [#allocation8], 16
        %v1805 = vld [vmem:[%s1804] sm:$0xff]
        %v1806 = vld [vmem:[%s1804 + $0x8] sm:$0xff]
        %v1808 = vsel %vm1690, %v1805, 0
        %v1811 = vsel %vm1690, %v1806, 0
        %1813 = vmatprep.subr.mxu0 0.0
        %1814 = vmatpush1.msra.mxu0 0.0
        %1815 = vmatprep.subr.mxu0 0.0
        %1816 = vmatpush1.msra.mxu0 0.0
        %1817 = vmatprep.subr.mxu0 0.0
        %1818 = vmatpush1.msra.mxu0 0.0
        %1819 = vmatprep.subr.mxu0 0.0
        %1820 = vmatpush1.msra.mxu0 0.0
        %1821 = vmatprep.subr.mxu0 0.0
        %1822 = vmatpush1.msra.mxu0 0.0
        %1823 = vmatprep.subr.mxu0 0.0
        %1824 = vmatpush1.msra.mxu0 0.0
        %1825 = vmatprep.subr.mxu0 0.0
        %1826 = vmatpush1.msra.mxu0 0.0
        %1827 = vmatprep.subr.mxu0 0.0
        %1828 = vmatpush1.msra.mxu0 0.0
        %1829 = vmatprep.subr.mxu0 0.0
        %1830 = vmatpush1.msra.mxu0 0.0
        %1831 = vmatprep.subr.mxu0 0.0
        %1832 = vmatpush1.msra.mxu0 0.0
        %1833 = vmatprep.subr.mxu0 0.0
        %1834 = vmatpush1.msra.mxu0 0.0
        %1835 = vmatprep.subr.mxu0 0.0
        %1836 = vmatpush1.msra.mxu0 0.0
        %1837 = vmatprep.subr.mxu0 0.0
        %1838 = vmatpush1.msra.mxu0 0.0
        %1839 = vmatprep.subr.mxu0 0.0
        %1840 = vmatpush1.msra.mxu0 0.0
        %1841 = vmatprep.subr.mxu0 0.0
        %1842 = vmatpush1.msra.mxu0 %v1685
        %1843 = vmatprep.subr.mxu0 0.0
        %1844 = vmatpush1.msra.mxu0 %v1680
        %1845 = vmatprep.subr.mxu0 0.0
        %1846 = vmatpush2.msra.mxu0 0.0
        %1847 = vmatprep.subr.mxu0 0.0
        %1848 = vmatpush2.msra.mxu0 0.0
        %1849 = vmatprep.subr.mxu0 0.0
        %1850 = vmatpush2.msra.mxu0 0.0
        %1851 = vmatprep.subr.mxu0 0.0
        %1852 = vmatpush2.msra.mxu0 0.0
        %1853 = vmatprep.subr.mxu0 0.0
        %1854 = vmatpush2.msra.mxu0 0.0
        %1855 = vmatprep.subr.mxu0 0.0
        %1856 = vmatpush2.msra.mxu0 0.0
        %1857 = vmatprep.subr.mxu0 0.0
        %1858 = vmatpush2.msra.mxu0 0.0
        %1859 = vmatprep.subr.mxu0 0.0
        %1860 = vmatpush2.msra.mxu0 0.0
        %1861 = vmatprep.subr.mxu0 0.0
        %1862 = vmatpush2.msra.mxu0 0.0
        %1863 = vmatprep.subr.mxu0 0.0
        %1864 = vmatpush2.msra.mxu0 0.0
        %1865 = vmatprep.subr.mxu0 0.0
        %1866 = vmatpush2.msra.mxu0 0.0
        %1867 = vmatprep.subr.mxu0 0.0
        %1868 = vmatpush2.msra.mxu0 0.0
        %1869 = vmatprep.subr.mxu0 0.0
        %1870 = vmatpush2.msra.mxu0 0.0
        %1871 = vmatprep.subr.mxu0 0.0
        %1872 = vmatpush2.msra.mxu0 0.0
        %1873 = vmatprep.subr.mxu0 0.0
        %1874 = vmatpush2.msra.mxu0 0.0
        %1875 = vmatprep.subr.mxu0 0.0
        %1876 = vmatpush2.msra.mxu0 0.0
        %1877 = vmatprep.mubr.f32.mxu0 0.0
        %1878 = vmatmul.mubr.f32.gmra.mxu0 %v1808
        %v1879 = vpop.f32.mrf.mxu0
        %v1880 = vadd.f32 0.0, %v1879
        %v1881 = vpop.f32.mrf.mxu0
        %1882 = vmatprep.mubr.f32.mxu0 0.0
        %1883 = vmatmul.mubr.f32.gmra.mxu0 %v1811
        %v1884 = vpop.f32.mrf.mxu0
        %v1885 = vadd.f32 0.0, %v1884
        %v1886 = vpop.f32.mrf.mxu0
        %1887 = vdwg.mxu0
        %s1888 = scalar_lea.vmem [#allocation10], 256
        %v1889 = vld [vmem:[%s1888] sm:$0xff]
        %v1890 = vld [vmem:[%s1888 + $0x8] sm:$0xff]
        %v1891 = vld [vmem:[%s1888 + $0x10] sm:$0xff]
        %v1892 = vld [vmem:[%s1888 + $0x18] sm:$0xff]
        %v1893 = vld [vmem:[%s1888 + $0x20] sm:$0xff]
        %v1894 = vld [vmem:[%s1888 + $0x28] sm:$0xff]
        %v1895 = vld [vmem:[%s1888 + $0x30] sm:$0xff]
        %v1896 = vld [vmem:[%s1888 + $0x38] sm:$0xff]
        %v1897 = vld [vmem:[%s1888 + $0x40] sm:$0xff]
        %v1898 = vld [vmem:[%s1888 + $0x48] sm:$0xff]
        %v1899 = vld [vmem:[%s1888 + $0x50] sm:$0xff]
        %v1900 = vld [vmem:[%s1888 + $0x58] sm:$0xff]
        %v1901 = vld [vmem:[%s1888 + $0x60] sm:$0xff]
        %v1902 = vld [vmem:[%s1888 + $0x68] sm:$0xff]
        %v1903 = vld [vmem:[%s1888 + $0x70] sm:$0xff]
        %v1904 = vld [vmem:[%s1888 + $0x78] sm:$0xff]
        %v1905 = vld [vmem:[%s1888 + $0x80] sm:$0xff]
        %v1906 = vld [vmem:[%s1888 + $0x88] sm:$0xff]
        %v1907 = vld [vmem:[%s1888 + $0x90] sm:$0xff]
        %v1908 = vld [vmem:[%s1888 + $0x98] sm:$0xff]
        %v1909 = vld [vmem:[%s1888 + $0xa0] sm:$0xff]
        %v1910 = vld [vmem:[%s1888 + $0xa8] sm:$0xff]
        %v1911 = vld [vmem:[%s1888 + $0xb0] sm:$0xff]
        %v1912 = vld [vmem:[%s1888 + $0xb8] sm:$0xff]
        %v1913 = vld [vmem:[%s1888 + $0xc0] sm:$0xff]
        %v1914 = vld [vmem:[%s1888 + $0xc8] sm:$0xff]
        %v1915 = vld [vmem:[%s1888 + $0xd0] sm:$0xff]
        %v1916 = vld [vmem:[%s1888 + $0xd8] sm:$0xff]
        %v1917 = vld [vmem:[%s1888 + $0xe0] sm:$0xff]
        %v1918 = vld [vmem:[%s1888 + $0xe8] sm:$0xff]
        %v1919 = vld [vmem:[%s1888 + $0xf0] sm:$0xff]
        %v1920 = vld [vmem:[%s1888 + $0xf8] sm:$0xff]
        %1921 = vmatprep.subr.mxu0 %v1920
        %1922 = vmatpush1.msra.mxu0 %v1919
        %1923 = vmatprep.subr.mxu0 %v1918
        %1924 = vmatpush1.msra.mxu0 %v1917
        %1925 = vmatprep.subr.mxu0 %v1916
        %1926 = vmatpush1.msra.mxu0 %v1915
        %1927 = vmatprep.subr.mxu0 %v1914
        %1928 = vmatpush1.msra.mxu0 %v1913
        %1929 = vmatprep.subr.mxu0 %v1912
        %1930 = vmatpush1.msra.mxu0 %v1911
        %1931 = vmatprep.subr.mxu0 %v1910
        %1932 = vmatpush1.msra.mxu0 %v1909
        %1933 = vmatprep.subr.mxu0 %v1908
        %1934 = vmatpush1.msra.mxu0 %v1907
        %1935 = vmatprep.subr.mxu0 %v1906
        %1936 = vmatpush1.msra.mxu0 %v1905
        %1937 = vmatprep.subr.mxu0 %v1904
        %1938 = vmatpush1.msra.mxu0 %v1903
        %1939 = vmatprep.subr.mxu0 %v1902
        %1940 = vmatpush1.msra.mxu0 %v1901
        %1941 = vmatprep.subr.mxu0 %v1900
        %1942 = vmatpush1.msra.mxu0 %v1899
        %1943 = vmatprep.subr.mxu0 %v1898
        %1944 = vmatpush1.msra.mxu0 %v1897
        %1945 = vmatprep.subr.mxu0 %v1896
        %1946 = vmatpush1.msra.mxu0 %v1895
        %1947 = vmatprep.subr.mxu0 %v1894
        %1948 = vmatpush1.msra.mxu0 %v1893
        %1949 = vmatprep.subr.mxu0 %v1892
        %1950 = vmatpush1.msra.mxu0 %v1891
        %1951 = vmatprep.subr.mxu0 %v1890
        %1952 = vmatpush1.msra.mxu0 %v1889
        %1953 = vmatprep.subr.mxu0 0.0
        %1954 = vmatpush2.msra.mxu0 0.0
        %1955 = vmatprep.subr.mxu0 0.0
        %1956 = vmatpush2.msra.mxu0 0.0
        %1957 = vmatprep.subr.mxu0 0.0
        %1958 = vmatpush2.msra.mxu0 0.0
        %1959 = vmatprep.subr.mxu0 0.0
        %1960 = vmatpush2.msra.mxu0 0.0
        %1961 = vmatprep.subr.mxu0 0.0
        %1962 = vmatpush2.msra.mxu0 0.0
        %1963 = vmatprep.subr.mxu0 0.0
        %1964 = vmatpush2.msra.mxu0 0.0
        %1965 = vmatprep.subr.mxu0 0.0
        %1966 = vmatpush2.msra.mxu0 0.0
        %1967 = vmatprep.subr.mxu0 0.0
        %1968 = vmatpush2.msra.mxu0 0.0
        %1969 = vmatprep.subr.mxu0 0.0
        %1970 = vmatpush2.msra.mxu0 0.0
        %1971 = vmatprep.subr.mxu0 0.0
        %1972 = vmatpush2.msra.mxu0 0.0
        %1973 = vmatprep.subr.mxu0 0.0
        %1974 = vmatpush2.msra.mxu0 0.0
        %1975 = vmatprep.subr.mxu0 0.0
        %1976 = vmatpush2.msra.mxu0 0.0
        %1977 = vmatprep.subr.mxu0 0.0
        %1978 = vmatpush2.msra.mxu0 0.0
        %1979 = vmatprep.subr.mxu0 0.0
        %1980 = vmatpush2.msra.mxu0 0.0
        %1981 = vmatprep.subr.mxu0 0.0
        %1982 = vmatpush2.msra.mxu0 0.0
        %1983 = vmatprep.subr.mxu0 0.0
        %1984 = vmatpush2.msra.mxu0 0.0
        %1985 = vmatprep.mubr.f32.mxu0 0.0
        %1986 = vmatmul.mubr.f32.gmra.mxu0 %v1880
        %v1987 = vpop.f32.mrf.mxu0
        %v1988 = vadd.f32 0.0, %v1987
        %v1989 = vpop.f32.mrf.mxu0
        %v1990 = vadd.f32 0.0, %v1989
        %1991 = vmatprep.mubr.f32.mxu0 0.0
        %1992 = vmatmul.mubr.f32.gmra.mxu0 %v1885
        %v1993 = vpop.f32.mrf.mxu0
        %v1994 = vadd.f32 0.0, %v1993
        %v1995 = vpop.f32.mrf.mxu0
        %v1996 = vadd.f32 0.0, %v1995
        %1997 = vdwg.mxu0
        %1998 = vmatprep.subr.mxu0 %v1803
        %1999 = vmatpush1.msra.mxu0 %v1802
        %2000 = vmatprep.subr.mxu0 %v1801
        %2001 = vmatpush1.msra.mxu0 %v1800
        %2002 = vmatprep.subr.mxu0 %v1799
        %2003 = vmatpush1.msra.mxu0 %v1798
        %2004 = vmatprep.subr.mxu0 %v1797
        %2005 = vmatpush1.msra.mxu0 %v1796
        %2006 = vmatprep.subr.mxu0 %v1795
        %2007 = vmatpush1.msra.mxu0 %v1794
        %2008 = vmatprep.subr.mxu0 %v1793
        %2009 = vmatpush1.msra.mxu0 %v1792
        %2010 = vmatprep.subr.mxu0 %v1791
        %2011 = vmatpush1.msra.mxu0 %v1790
        %2012 = vmatprep.subr.mxu0 %v1789
        %2013 = vmatpush1.msra.mxu0 %v1788
        %2014 = vmatprep.subr.mxu0 %v1787
        %2015 = vmatpush1.msra.mxu0 %v1786
        %2016 = vmatprep.subr.mxu0 %v1785
        %2017 = vmatpush1.msra.mxu0 %v1784
        %2018 = vmatprep.subr.mxu0 %v1783
        %2019 = vmatpush1.msra.mxu0 %v1782
        %2020 = vmatprep.subr.mxu0 %v1781
        %2021 = vmatpush1.msra.mxu0 %v1780
        %2022 = vmatprep.subr.mxu0 %v1779
        %2023 = vmatpush1.msra.mxu0 %v1778
        %2024 = vmatprep.subr.mxu0 %v1777
        %2025 = vmatpush1.msra.mxu0 %v1776
        %2026 = vmatprep.subr.mxu0 %v1775
        %2027 = vmatpush1.msra.mxu0 %v1774
        %2028 = vmatprep.subr.mxu0 %v1773
        %2029 = vmatpush1.msra.mxu0 %v1772
        %2030 = vmatprep.subr.mxu0 0.0
        %2031 = vmatpush2.msra.mxu0 0.0
        %2032 = vmatprep.subr.mxu0 0.0
        %2033 = vmatpush2.msra.mxu0 0.0
        %2034 = vmatprep.subr.mxu0 0.0
        %2035 = vmatpush2.msra.mxu0 0.0
        %2036 = vmatprep.subr.mxu0 0.0
        %2037 = vmatpush2.msra.mxu0 0.0
        %2038 = vmatprep.subr.mxu0 0.0
        %2039 = vmatpush2.msra.mxu0 0.0
        %2040 = vmatprep.subr.mxu0 0.0
        %2041 = vmatpush2.msra.mxu0 0.0
        %2042 = vmatprep.subr.mxu0 0.0
        %2043 = vmatpush2.msra.mxu0 0.0
        %2044 = vmatprep.subr.mxu0 0.0
        %2045 = vmatpush2.msra.mxu0 0.0
        %2046 = vmatprep.subr.mxu0 0.0
        %2047 = vmatpush2.msra.mxu0 0.0
        %2048 = vmatprep.subr.mxu0 0.0
        %2049 = vmatpush2.msra.mxu0 0.0
        %2050 = vmatprep.subr.mxu0 0.0
        %2051 = vmatpush2.msra.mxu0 0.0
        %2052 = vmatprep.subr.mxu0 0.0
        %2053 = vmatpush2.msra.mxu0 0.0
        %2054 = vmatprep.subr.mxu0 0.0
        %2055 = vmatpush2.msra.mxu0 0.0
        %2056 = vmatprep.subr.mxu0 0.0
        %2057 = vmatpush2.msra.mxu0 0.0
        %2058 = vmatprep.subr.mxu0 0.0
        %2059 = vmatpush2.msra.mxu0 0.0
        %2060 = vmatprep.subr.mxu0 0.0
        %2061 = vmatpush2.msra.mxu0 0.0
        %2062 = vmatprep.mubr.f32.mxu0 0.0
        %2063 = vmatmul.mubr.f32.gmra.mxu0 %v1764
        %v2064 = vpop.f32.mrf.mxu0
        %v2065 = vadd.f32 %v1988, %v2064
        %v2066 = vpop.f32.mrf.mxu0
        %v2067 = vadd.f32 %v1990, %v2066
        %2068 = vmatprep.mubr.f32.mxu0 0.0
        %2069 = vmatmul.mubr.f32.gmra.mxu0 %v1769
        %v2070 = vpop.f32.mrf.mxu0
        %v2071 = vadd.f32 %v1994, %v2070
        %v2072 = vpop.f32.mrf.mxu0
        %v2073 = vadd.f32 %v1996, %v2072
        %2074 = vdwg.mxu0
        %s2075 = scalar_lea.vmem [#allocation8], 32
        %v2076 = vld [vmem:[%s2075] sm:$0xff]
        %v2077 = vld [vmem:[%s2075 + $0x8] sm:$0xff]
        %v2079 = vsel %vm1690, %v2076, 0
        %v2082 = vsel %vm1690, %v2077, 0
        %2084 = vmatprep.subr.mxu0 0.0
        %2085 = vmatpush1.msra.mxu0 0.0
        %2086 = vmatprep.subr.mxu0 0.0
        %2087 = vmatpush1.msra.mxu0 0.0
        %2088 = vmatprep.subr.mxu0 0.0
        %2089 = vmatpush1.msra.mxu0 0.0
        %2090 = vmatprep.subr.mxu0 0.0
        %2091 = vmatpush1.msra.mxu0 0.0
        %2092 = vmatprep.subr.mxu0 0.0
        %2093 = vmatpush1.msra.mxu0 0.0
        %2094 = vmatprep.subr.mxu0 0.0
        %2095 = vmatpush1.msra.mxu0 0.0
        %2096 = vmatprep.subr.mxu0 0.0
        %2097 = vmatpush1.msra.mxu0 0.0
        %2098 = vmatprep.subr.mxu0 0.0
        %2099 = vmatpush1.msra.mxu0 0.0
        %2100 = vmatprep.subr.mxu0 0.0
        %2101 = vmatpush1.msra.mxu0 0.0
        %2102 = vmatprep.subr.mxu0 0.0
        %2103 = vmatpush1.msra.mxu0 0.0
        %2104 = vmatprep.subr.mxu0 0.0
        %2105 = vmatpush1.msra.mxu0 0.0
        %2106 = vmatprep.subr.mxu0 0.0
        %2107 = vmatpush1.msra.mxu0 0.0
        %2108 = vmatprep.subr.mxu0 0.0
        %2109 = vmatpush1.msra.mxu0 0.0
        %2110 = vmatprep.subr.mxu0 0.0
        %2111 = vmatpush1.msra.mxu0 0.0
        %2112 = vmatprep.subr.mxu0 0.0
        %2113 = vmatpush1.msra.mxu0 %v1685
        %2114 = vmatprep.subr.mxu0 0.0
        %2115 = vmatpush1.msra.mxu0 %v1680
        %2116 = vmatprep.subr.mxu0 0.0
        %2117 = vmatpush2.msra.mxu0 0.0
        %2118 = vmatprep.subr.mxu0 0.0
        %2119 = vmatpush2.msra.mxu0 0.0
        %2120 = vmatprep.subr.mxu0 0.0
        %2121 = vmatpush2.msra.mxu0 0.0
        %2122 = vmatprep.subr.mxu0 0.0
        %2123 = vmatpush2.msra.mxu0 0.0
        %2124 = vmatprep.subr.mxu0 0.0
        %2125 = vmatpush2.msra.mxu0 0.0
        %2126 = vmatprep.subr.mxu0 0.0
        %2127 = vmatpush2.msra.mxu0 0.0
        %2128 = vmatprep.subr.mxu0 0.0
        %2129 = vmatpush2.msra.mxu0 0.0
        %2130 = vmatprep.subr.mxu0 0.0
        %2131 = vmatpush2.msra.mxu0 0.0
        %2132 = vmatprep.subr.mxu0 0.0
        %2133 = vmatpush2.msra.mxu0 0.0
        %2134 = vmatprep.subr.mxu0 0.0
        %2135 = vmatpush2.msra.mxu0 0.0
        %2136 = vmatprep.subr.mxu0 0.0
        %2137 = vmatpush2.msra.mxu0 0.0
        %2138 = vmatprep.subr.mxu0 0.0
        %2139 = vmatpush2.msra.mxu0 0.0
        %2140 = vmatprep.subr.mxu0 0.0
        %2141 = vmatpush2.msra.mxu0 0.0
        %2142 = vmatprep.subr.mxu0 0.0
        %2143 = vmatpush2.msra.mxu0 0.0
        %2144 = vmatprep.subr.mxu0 0.0
        %2145 = vmatpush2.msra.mxu0 0.0
        %2146 = vmatprep.subr.mxu0 0.0
        %2147 = vmatpush2.msra.mxu0 0.0
        %2148 = vmatprep.mubr.f32.mxu0 0.0
        %2149 = vmatmul.mubr.f32.gmra.mxu0 %v2079
        %v2150 = vpop.f32.mrf.mxu0
        %v2151 = vadd.f32 0.0, %v2150
        %v2152 = vpop.f32.mrf.mxu0
        %2153 = vmatprep.mubr.f32.mxu0 0.0
        %2154 = vmatmul.mubr.f32.gmra.mxu0 %v2082
        %v2155 = vpop.f32.mrf.mxu0
        %v2156 = vadd.f32 0.0, %v2155
        %v2157 = vpop.f32.mrf.mxu0
        %2158 = vdwg.mxu0
        %s2159 = scalar_lea.vmem [#allocation10], 512
        %v2160 = vld [vmem:[%s2159] sm:$0xff]
        %v2161 = vld [vmem:[%s2159 + $0x8] sm:$0xff]
        %v2162 = vld [vmem:[%s2159 + $0x10] sm:$0xff]
        %v2163 = vld [vmem:[%s2159 + $0x18] sm:$0xff]
        %v2164 = vld [vmem:[%s2159 + $0x20] sm:$0xff]
        %v2165 = vld [vmem:[%s2159 + $0x28] sm:$0xff]
        %v2166 = vld [vmem:[%s2159 + $0x30] sm:$0xff]
        %v2167 = vld [vmem:[%s2159 + $0x38] sm:$0xff]
        %v2168 = vld [vmem:[%s2159 + $0x40] sm:$0xff]
        %v2169 = vld [vmem:[%s2159 + $0x48] sm:$0xff]
        %v2170 = vld [vmem:[%s2159 + $0x50] sm:$0xff]
        %v2171 = vld [vmem:[%s2159 + $0x58] sm:$0xff]
        %v2172 = vld [vmem:[%s2159 + $0x60] sm:$0xff]
        %v2173 = vld [vmem:[%s2159 + $0x68] sm:$0xff]
        %v2174 = vld [vmem:[%s2159 + $0x70] sm:$0xff]
        %v2175 = vld [vmem:[%s2159 + $0x78] sm:$0xff]
        %v2176 = vld [vmem:[%s2159 + $0x80] sm:$0xff]
        %v2177 = vld [vmem:[%s2159 + $0x88] sm:$0xff]
        %v2178 = vld [vmem:[%s2159 + $0x90] sm:$0xff]
        %v2179 = vld [vmem:[%s2159 + $0x98] sm:$0xff]
        %v2180 = vld [vmem:[%s2159 + $0xa0] sm:$0xff]
        %v2181 = vld [vmem:[%s2159 + $0xa8] sm:$0xff]
        %v2182 = vld [vmem:[%s2159 + $0xb0] sm:$0xff]
        %v2183 = vld [vmem:[%s2159 + $0xb8] sm:$0xff]
        %v2184 = vld [vmem:[%s2159 + $0xc0] sm:$0xff]
        %v2185 = vld [vmem:[%s2159 + $0xc8] sm:$0xff]
        %v2186 = vld [vmem:[%s2159 + $0xd0] sm:$0xff]
        %v2187 = vld [vmem:[%s2159 + $0xd8] sm:$0xff]
        %v2188 = vld [vmem:[%s2159 + $0xe0] sm:$0xff]
        %v2189 = vld [vmem:[%s2159 + $0xe8] sm:$0xff]
        %v2190 = vld [vmem:[%s2159 + $0xf0] sm:$0xff]
        %v2191 = vld [vmem:[%s2159 + $0xf8] sm:$0xff]
        %2192 = vmatprep.subr.mxu0 %v2191
        %2193 = vmatpush1.msra.mxu0 %v2190
        %2194 = vmatprep.subr.mxu0 %v2189
        %2195 = vmatpush1.msra.mxu0 %v2188
        %2196 = vmatprep.subr.mxu0 %v2187
        %2197 = vmatpush1.msra.mxu0 %v2186
        %2198 = vmatprep.subr.mxu0 %v2185
        %2199 = vmatpush1.msra.mxu0 %v2184
        %2200 = vmatprep.subr.mxu0 %v2183
        %2201 = vmatpush1.msra.mxu0 %v2182
        %2202 = vmatprep.subr.mxu0 %v2181
        %2203 = vmatpush1.msra.mxu0 %v2180
        %2204 = vmatprep.subr.mxu0 %v2179
        %2205 = vmatpush1.msra.mxu0 %v2178
        %2206 = vmatprep.subr.mxu0 %v2177
        %2207 = vmatpush1.msra.mxu0 %v2176
        %2208 = vmatprep.subr.mxu0 %v2175
        %2209 = vmatpush1.msra.mxu0 %v2174
        %2210 = vmatprep.subr.mxu0 %v2173
        %2211 = vmatpush1.msra.mxu0 %v2172
        %2212 = vmatprep.subr.mxu0 %v2171
        %2213 = vmatpush1.msra.mxu0 %v2170
        %2214 = vmatprep.subr.mxu0 %v2169
        %2215 = vmatpush1.msra.mxu0 %v2168
        %2216 = vmatprep.subr.mxu0 %v2167
        %2217 = vmatpush1.msra.mxu0 %v2166
        %2218 = vmatprep.subr.mxu0 %v2165
        %2219 = vmatpush1.msra.mxu0 %v2164
        %2220 = vmatprep.subr.mxu0 %v2163
        %2221 = vmatpush1.msra.mxu0 %v2162
        %2222 = vmatprep.subr.mxu0 %v2161
        %2223 = vmatpush1.msra.mxu0 %v2160
        %2224 = vmatprep.subr.mxu0 0.0
        %2225 = vmatpush2.msra.mxu0 0.0
        %2226 = vmatprep.subr.mxu0 0.0
        %2227 = vmatpush2.msra.mxu0 0.0
        %2228 = vmatprep.subr.mxu0 0.0
        %2229 = vmatpush2.msra.mxu0 0.0
        %2230 = vmatprep.subr.mxu0 0.0
        %2231 = vmatpush2.msra.mxu0 0.0
        %2232 = vmatprep.subr.mxu0 0.0
        %2233 = vmatpush2.msra.mxu0 0.0
        %2234 = vmatprep.subr.mxu0 0.0
        %2235 = vmatpush2.msra.mxu0 0.0
        %2236 = vmatprep.subr.mxu0 0.0
        %2237 = vmatpush2.msra.mxu0 0.0
        %2238 = vmatprep.subr.mxu0 0.0
        %2239 = vmatpush2.msra.mxu0 0.0
        %2240 = vmatprep.subr.mxu0 0.0
        %2241 = vmatpush2.msra.mxu0 0.0
        %2242 = vmatprep.subr.mxu0 0.0
        %2243 = vmatpush2.msra.mxu0 0.0
        %2244 = vmatprep.subr.mxu0 0.0
        %2245 = vmatpush2.msra.mxu0 0.0
        %2246 = vmatprep.subr.mxu0 0.0
        %2247 = vmatpush2.msra.mxu0 0.0
        %2248 = vmatprep.subr.mxu0 0.0
        %2249 = vmatpush2.msra.mxu0 0.0
        %2250 = vmatprep.subr.mxu0 0.0
        %2251 = vmatpush2.msra.mxu0 0.0
        %2252 = vmatprep.subr.mxu0 0.0
        %2253 = vmatpush2.msra.mxu0 0.0
        %2254 = vmatprep.subr.mxu0 0.0
        %2255 = vmatpush2.msra.mxu0 0.0
        %2256 = vmatprep.mubr.f32.mxu0 0.0
        %2257 = vmatmul.mubr.f32.gmra.mxu0 %v2151
        %v2258 = vpop.f32.mrf.mxu0
        %v2259 = vadd.f32 0.0, %v2258
        %v2260 = vpop.f32.mrf.mxu0
        %v2261 = vadd.f32 0.0, %v2260
        %2262 = vmatprep.mubr.f32.mxu0 0.0
        %2263 = vmatmul.mubr.f32.gmra.mxu0 %v2156
        %v2264 = vpop.f32.mrf.mxu0
        %v2265 = vadd.f32 0.0, %v2264
        %v2266 = vpop.f32.mrf.mxu0
        %v2267 = vadd.f32 0.0, %v2266
        %2268 = vdwg.mxu0
        %v2269 = vadd.f32 %v2065, %v2259
        %v2270 = vadd.f32 %v2067, %v2261
        %v2271 = vadd.f32 %v2071, %v2265
        %v2272 = vadd.f32 %v2073, %v2267
        %v2273 = vld [vmem:[#allocation11] sm:$0x3]
        %v2275 = vlaneseq
        %v2276 = vshrl.u32 %v2275, 7
        %v2277 = vsub.s32 0, %v2276
        %v2278 = vrot.slane %v2273, %v2277
        %v2279 = vlaneseq
        %v2280 = vshrl.u32 %v2279, 7
        %v2281 = vsub.s32 1, %v2280
        %v2282 = vrot.slane %v2273, %v2281
        %v2285 = vadd.f32 %v2269, %v2278
        %v2286 = vadd.f32 %v2270, %v2282
        %v2287 = vadd.f32 %v2271, %v2278
        %v2288 = vadd.f32 %v2272, %v2282
        %v2289 = vmax.f32 %v2285, 0.0
        %v2290 = vmax.f32 %v2286, 0.0
        %v2291 = vmax.f32 %v2287, 0.0
        %v2292 = vmax.f32 %v2288, 0.0
        %v2293 = vld [vmem:[%s9] sm:$0xff]
        %v2294 = vld [vmem:[#allocation13] sm:$0xff]
        %v2295 = vld [vmem:[#allocation13 + $0x8] sm:$0xff]
        %v2296 = vld [vmem:[#allocation13 + $0x10] sm:$0xff]
        %v2297 = vld [vmem:[#allocation13 + $0x18] sm:$0xff]
        %v2298 = vld [vmem:[#allocation13 + $0x20] sm:$0xff]
        %v2299 = vld [vmem:[#allocation13 + $0x28] sm:$0xff]
        %v2300 = vld [vmem:[#allocation13 + $0x30] sm:$0xff]
        %v2301 = vld [vmem:[#allocation13 + $0x38] sm:$0xff]
        %v2302 = vld [vmem:[#allocation13 + $0x40] sm:$0xff]
        %v2303 = vld [vmem:[#allocation13 + $0x48] sm:$0xff]
        %v2304 = vld [vmem:[#allocation13 + $0x50] sm:$0xff]
        %v2305 = vld [vmem:[#allocation13 + $0x58] sm:$0xff]
        %v2306 = vld [vmem:[#allocation13 + $0x60] sm:$0xff]
        %v2307 = vld [vmem:[#allocation13 + $0x68] sm:$0xff]
        %v2308 = vld [vmem:[#allocation13 + $0x70] sm:$0xff]
        %v2309 = vld [vmem:[#allocation13 + $0x78] sm:$0xff]
        %v2310 = vld [vmem:[#allocation13 + $0x80] sm:$0xff]
        %v2311 = vld [vmem:[#allocation13 + $0x88] sm:$0xff]
        %v2312 = vld [vmem:[#allocation13 + $0x90] sm:$0xff]
        %v2313 = vld [vmem:[#allocation13 + $0x98] sm:$0xff]
        %v2314 = vld [vmem:[#allocation13 + $0xa0] sm:$0xff]
        %v2315 = vld [vmem:[#allocation13 + $0xa8] sm:$0xff]
        %v2316 = vld [vmem:[#allocation13 + $0xb0] sm:$0xff]
        %v2317 = vld [vmem:[#allocation13 + $0xb8] sm:$0xff]
        %v2318 = vld [vmem:[#allocation13 + $0xc0] sm:$0xff]
        %v2319 = vld [vmem:[#allocation13 + $0xc8] sm:$0xff]
        %v2320 = vld [vmem:[#allocation13 + $0xd0] sm:$0xff]
        %v2321 = vld [vmem:[#allocation13 + $0xd8] sm:$0xff]
        %v2322 = vld [vmem:[#allocation13 + $0xe0] sm:$0xff]
        %v2323 = vld [vmem:[#allocation13 + $0xe8] sm:$0xff]
        %v2324 = vld [vmem:[#allocation13 + $0xf0] sm:$0xff]
        %v2325 = vld [vmem:[#allocation13 + $0xf8] sm:$0xff]
        %2326 = vmatprep.subr.mxu0 0.0
        %2327 = vmatpush1.msra.mxu0 %v2309
        %2328 = vmatprep.subr.mxu0 0.0
        %2329 = vmatpush1.msra.mxu0 %v2308
        %2330 = vmatprep.subr.mxu0 0.0
        %2331 = vmatpush1.msra.mxu0 %v2307
        %2332 = vmatprep.subr.mxu0 0.0
        %2333 = vmatpush1.msra.mxu0 %v2306
        %2334 = vmatprep.subr.mxu0 0.0
        %2335 = vmatpush1.msra.mxu0 %v2305
        %2336 = vmatprep.subr.mxu0 0.0
        %2337 = vmatpush1.msra.mxu0 %v2304
        %2338 = vmatprep.subr.mxu0 0.0
        %2339 = vmatpush1.msra.mxu0 %v2303
        %2340 = vmatprep.subr.mxu0 0.0
        %2341 = vmatpush1.msra.mxu0 %v2302
        %2342 = vmatprep.subr.mxu0 0.0
        %2343 = vmatpush1.msra.mxu0 %v2301
        %2344 = vmatprep.subr.mxu0 0.0
        %2345 = vmatpush1.msra.mxu0 %v2300
        %2346 = vmatprep.subr.mxu0 0.0
        %2347 = vmatpush1.msra.mxu0 %v2299
        %2348 = vmatprep.subr.mxu0 0.0
        %2349 = vmatpush1.msra.mxu0 %v2298
        %2350 = vmatprep.subr.mxu0 0.0
        %2351 = vmatpush1.msra.mxu0 %v2297
        %2352 = vmatprep.subr.mxu0 0.0
        %2353 = vmatpush1.msra.mxu0 %v2296
        %2354 = vmatprep.subr.mxu0 0.0
        %2355 = vmatpush1.msra.mxu0 %v2295
        %2356 = vmatprep.subr.mxu0 0.0
        %2357 = vmatpush1.msra.mxu0 %v2294
        %2358 = vmatprep.subr.mxu0 0.0
        %2359 = vmatpush2.msra.mxu0 %v2325
        %2360 = vmatprep.subr.mxu0 0.0
        %2361 = vmatpush2.msra.mxu0 %v2324
        %2362 = vmatprep.subr.mxu0 0.0
        %2363 = vmatpush2.msra.mxu0 %v2323
        %2364 = vmatprep.subr.mxu0 0.0
        %2365 = vmatpush2.msra.mxu0 %v2322
        %2366 = vmatprep.subr.mxu0 0.0
        %2367 = vmatpush2.msra.mxu0 %v2321
        %2368 = vmatprep.subr.mxu0 0.0
        %2369 = vmatpush2.msra.mxu0 %v2320
        %2370 = vmatprep.subr.mxu0 0.0
        %2371 = vmatpush2.msra.mxu0 %v2319
        %2372 = vmatprep.subr.mxu0 0.0
        %2373 = vmatpush2.msra.mxu0 %v2318
        %2374 = vmatprep.subr.mxu0 0.0
        %2375 = vmatpush2.msra.mxu0 %v2317
        %2376 = vmatprep.subr.mxu0 0.0
        %2377 = vmatpush2.msra.mxu0 %v2316
        %2378 = vmatprep.subr.mxu0 0.0
        %2379 = vmatpush2.msra.mxu0 %v2315
        %2380 = vmatprep.subr.mxu0 0.0
        %2381 = vmatpush2.msra.mxu0 %v2314
        %2382 = vmatprep.subr.mxu0 0.0
        %2383 = vmatpush2.msra.mxu0 %v2313
        %2384 = vmatprep.subr.mxu0 0.0
        %2385 = vmatpush2.msra.mxu0 %v2312
        %2386 = vmatprep.subr.mxu0 0.0
        %2387 = vmatpush2.msra.mxu0 %v2311
        %2388 = vmatprep.subr.mxu0 0.0
        %2389 = vmatpush2.msra.mxu0 %v2310
        %2390 = vmatprep.mubr.f32.mxu0 %v2290
        %2391 = vmatmul.mubr.f32.gmra.mxu0 %v2289
        %v2392 = vpop.f32.mrf.mxu0
        %v2393 = vadd.f32 0.0, %v2392
        %v2394 = vpop.f32.mrf.mxu0
        %2395 = vmatprep.mubr.f32.mxu0 %v2292
        %2396 = vmatmul.mubr.f32.gmra.mxu0 %v2291
        %v2397 = vpop.f32.mrf.mxu0
        %v2398 = vadd.f32 0.0, %v2397
        %v2399 = vpop.f32.mrf.mxu0
        %2400 = vdwg.mxu0
        %v2402 = vsel %vm1690, %v2293, 0
        %2404 = vmatprep.subr.mxu0 0.0
        %2405 = vmatpush1.msra.mxu0 0.0
        %2406 = vmatprep.subr.mxu0 0.0
        %2407 = vmatpush1.msra.mxu0 0.0
        %2408 = vmatprep.subr.mxu0 0.0
        %2409 = vmatpush1.msra.mxu0 0.0
        %2410 = vmatprep.subr.mxu0 0.0
        %2411 = vmatpush1.msra.mxu0 0.0
        %2412 = vmatprep.subr.mxu0 0.0
        %2413 = vmatpush1.msra.mxu0 0.0
        %2414 = vmatprep.subr.mxu0 0.0
        %2415 = vmatpush1.msra.mxu0 0.0
        %2416 = vmatprep.subr.mxu0 0.0
        %2417 = vmatpush1.msra.mxu0 0.0
        %2418 = vmatprep.subr.mxu0 0.0
        %2419 = vmatpush1.msra.mxu0 0.0
        %2420 = vmatprep.subr.mxu0 0.0
        %2421 = vmatpush1.msra.mxu0 0.0
        %2422 = vmatprep.subr.mxu0 0.0
        %2423 = vmatpush1.msra.mxu0 0.0
        %2424 = vmatprep.subr.mxu0 0.0
        %2425 = vmatpush1.msra.mxu0 0.0
        %2426 = vmatprep.subr.mxu0 0.0
        %2427 = vmatpush1.msra.mxu0 0.0
        %2428 = vmatprep.subr.mxu0 0.0
        %2429 = vmatpush1.msra.mxu0 0.0
        %2430 = vmatprep.subr.mxu0 0.0
        %2431 = vmatpush1.msra.mxu0 0.0
        %2432 = vmatprep.subr.mxu0 0.0
        %2433 = vmatpush1.msra.mxu0 %v2398
        %2434 = vmatprep.subr.mxu0 0.0
        %2435 = vmatpush1.msra.mxu0 %v2393
        %2436 = vmatprep.subr.mxu0 0.0
        %2437 = vmatpush2.msra.mxu0 0.0
        %2438 = vmatprep.subr.mxu0 0.0
        %2439 = vmatpush2.msra.mxu0 0.0
        %2440 = vmatprep.subr.mxu0 0.0
        %2441 = vmatpush2.msra.mxu0 0.0
        %2442 = vmatprep.subr.mxu0 0.0
        %2443 = vmatpush2.msra.mxu0 0.0
        %2444 = vmatprep.subr.mxu0 0.0
        %2445 = vmatpush2.msra.mxu0 0.0
        %2446 = vmatprep.subr.mxu0 0.0
        %2447 = vmatpush2.msra.mxu0 0.0
        %2448 = vmatprep.subr.mxu0 0.0
        %2449 = vmatpush2.msra.mxu0 0.0
        %2450 = vmatprep.subr.mxu0 0.0
        %2451 = vmatpush2.msra.mxu0 0.0
        %2452 = vmatprep.subr.mxu0 0.0
        %2453 = vmatpush2.msra.mxu0 0.0
        %2454 = vmatprep.subr.mxu0 0.0
        %2455 = vmatpush2.msra.mxu0 0.0
        %2456 = vmatprep.subr.mxu0 0.0
        %2457 = vmatpush2.msra.mxu0 0.0
        %2458 = vmatprep.subr.mxu0 0.0
        %2459 = vmatpush2.msra.mxu0 0.0
        %2460 = vmatprep.subr.mxu0 0.0
        %2461 = vmatpush2.msra.mxu0 0.0
        %2462 = vmatprep.subr.mxu0 0.0
        %2463 = vmatpush2.msra.mxu0 0.0
        %2464 = vmatprep.subr.mxu0 0.0
        %2465 = vmatpush2.msra.mxu0 0.0
        %2466 = vmatprep.subr.mxu0 0.0
        %2467 = vmatpush2.msra.mxu0 0.0
        %2468 = vmatprep.mubr.f32.mxu0 0.0
        %2469 = vmatmul.mubr.f32.gmra.mxu0 %v2402
        %v2470 = vpop.f32.mrf.mxu0
        %v2471 = vadd.f32 0.0, %v2470
        %v2472 = vpop.f32.mrf.mxu0
        %2473 = vdwg.mxu0
        %v2474 = vld [vmem:[%s11] sm:$0xff]
        %vm2475 = vcmask 64512
        %v2477 = vsel %vm2475, %v2474, 0
        %2479 = vmatprep.subr.mxu0 0.0
        %2480 = vmatpush1.msra.mxu0 0.0
        %2481 = vmatprep.subr.mxu0 0.0
        %2482 = vmatpush1.msra.mxu0 0.0
        %2483 = vmatprep.subr.mxu0 0.0
        %2484 = vmatpush1.msra.mxu0 0.0
        %2485 = vmatprep.subr.mxu0 0.0
        %2486 = vmatpush1.msra.mxu0 0.0
        %2487 = vmatprep.subr.mxu0 0.0
        %2488 = vmatpush1.msra.mxu0 0.0
        %2489 = vmatprep.subr.mxu0 0.0
        %2490 = vmatpush1.msra.mxu0 0.0
        %2491 = vmatprep.subr.mxu0 0.0
        %2492 = vmatpush1.msra.mxu0 0.0
        %2493 = vmatprep.subr.mxu0 0.0
        %2494 = vmatpush1.msra.mxu0 0.0
        %2495 = vmatprep.subr.mxu0 0.0
        %2496 = vmatpush1.msra.mxu0 0.0
        %2497 = vmatprep.subr.mxu0 0.0
        %2498 = vmatpush1.msra.mxu0 0.0
        %2499 = vmatprep.subr.mxu0 0.0
        %2500 = vmatpush1.msra.mxu0 0.0
        %2501 = vmatprep.subr.mxu0 0.0
        %2502 = vmatpush1.msra.mxu0 0.0
        %2503 = vmatprep.subr.mxu0 0.0
        %2504 = vmatpush1.msra.mxu0 0.0
        %2505 = vmatprep.subr.mxu0 0.0
        %2506 = vmatpush1.msra.mxu0 0.0
        %2507 = vmatprep.subr.mxu0 0.0
        %2508 = vmatpush1.msra.mxu0 0.0
        %2509 = vmatprep.subr.mxu0 0.0
        %2510 = vmatpush1.msra.mxu0 %v2471
        %2511 = vmatprep.subr.mxu0 0.0
        %2512 = vmatpush2.msra.mxu0 0.0
        %2513 = vmatprep.subr.mxu0 0.0
        %2514 = vmatpush2.msra.mxu0 0.0
        %2515 = vmatprep.subr.mxu0 0.0
        %2516 = vmatpush2.msra.mxu0 0.0
        %2517 = vmatprep.subr.mxu0 0.0
        %2518 = vmatpush2.msra.mxu0 0.0
        %2519 = vmatprep.subr.mxu0 0.0
        %2520 = vmatpush2.msra.mxu0 0.0
        %2521 = vmatprep.subr.mxu0 0.0
        %2522 = vmatpush2.msra.mxu0 0.0
        %2523 = vmatprep.subr.mxu0 0.0
        %2524 = vmatpush2.msra.mxu0 0.0
        %2525 = vmatprep.subr.mxu0 0.0
        %2526 = vmatpush2.msra.mxu0 0.0
        %2527 = vmatprep.subr.mxu0 0.0
        %2528 = vmatpush2.msra.mxu0 0.0
        %2529 = vmatprep.subr.mxu0 0.0
        %2530 = vmatpush2.msra.mxu0 0.0
        %2531 = vmatprep.subr.mxu0 0.0
        %2532 = vmatpush2.msra.mxu0 0.0
        %2533 = vmatprep.subr.mxu0 0.0
        %2534 = vmatpush2.msra.mxu0 0.0
        %2535 = vmatprep.subr.mxu0 0.0
        %2536 = vmatpush2.msra.mxu0 0.0
        %2537 = vmatprep.subr.mxu0 0.0
        %2538 = vmatpush2.msra.mxu0 0.0
        %2539 = vmatprep.subr.mxu0 0.0
        %2540 = vmatpush2.msra.mxu0 0.0
        %2541 = vmatprep.subr.mxu0 0.0
        %2542 = vmatpush2.msra.mxu0 0.0
        %2543 = vmatprep.mubr.f32.mxu0 0.0
        %2544 = vmatmul.mubr.f32.gmra.mxu0 %v2477
        %v2545 = vpop.f32.mrf.mxu0
        %v2546 = vadd.f32 0.0, %v2545
        %v2547 = vpop.f32.mrf.mxu0
        %2548 = vdwg.mxu0
        %v2549 = vld [vmem:[%s12] sm:$0xff]
        %v2550 = vld [vmem:[%s12 + $0x8] sm:$0xff]
        %v2551 = vld [vmem:[%s12 + $0x10] sm:$0xff]
        %v2552 = vld [vmem:[%s12 + $0x18] sm:$0xff]
        %v2553 = vld [vmem:[%s12 + $0x20] sm:$0xff]
        %v2554 = vld [vmem:[%s12 + $0x28] sm:$0xff]
        %v2555 = vld [vmem:[%s12 + $0x30] sm:$0xff]
        %v2556 = vld [vmem:[%s12 + $0x38] sm:$0xff]
        %v2557 = vld [vmem:[%s12 + $0x40] sm:$0xff]
        %v2558 = vld [vmem:[%s12 + $0x48] sm:$0xff]
        %v2559 = vld [vmem:[%s12 + $0x50] sm:$0xff]
        %v2560 = vld [vmem:[%s12 + $0x58] sm:$0xff]
        %v2561 = vld [vmem:[%s12 + $0x60] sm:$0xff]
        %v2562 = vld [vmem:[%s12 + $0x68] sm:$0xff]
        %v2563 = vld [vmem:[%s12 + $0x70] sm:$0xff]
        %v2564 = vld [vmem:[%s12 + $0x78] sm:$0xff]
        %s2565 = scalar_lea.vmem %s11, 8
        %v2566 = vld [vmem:[%s2565] sm:$0xff]
        %v2568 = vsel %vm2475, %v2566, 0
        %2570 = vmatprep.subr.mxu0 0.0
        %2571 = vmatpush1.msra.mxu0 0.0
        %2572 = vmatprep.subr.mxu0 0.0
        %2573 = vmatpush1.msra.mxu0 0.0
        %2574 = vmatprep.subr.mxu0 0.0
        %2575 = vmatpush1.msra.mxu0 0.0
        %2576 = vmatprep.subr.mxu0 0.0
        %2577 = vmatpush1.msra.mxu0 0.0
        %2578 = vmatprep.subr.mxu0 0.0
        %2579 = vmatpush1.msra.mxu0 0.0
        %2580 = vmatprep.subr.mxu0 0.0
        %2581 = vmatpush1.msra.mxu0 0.0
        %2582 = vmatprep.subr.mxu0 0.0
        %2583 = vmatpush1.msra.mxu0 0.0
        %2584 = vmatprep.subr.mxu0 0.0
        %2585 = vmatpush1.msra.mxu0 0.0
        %2586 = vmatprep.subr.mxu0 0.0
        %2587 = vmatpush1.msra.mxu0 0.0
        %2588 = vmatprep.subr.mxu0 0.0
        %2589 = vmatpush1.msra.mxu0 0.0
        %2590 = vmatprep.subr.mxu0 0.0
        %2591 = vmatpush1.msra.mxu0 0.0
        %2592 = vmatprep.subr.mxu0 0.0
        %2593 = vmatpush1.msra.mxu0 0.0
        %2594 = vmatprep.subr.mxu0 0.0
        %2595 = vmatpush1.msra.mxu0 0.0
        %2596 = vmatprep.subr.mxu0 0.0
        %2597 = vmatpush1.msra.mxu0 0.0
        %2598 = vmatprep.subr.mxu0 0.0
        %2599 = vmatpush1.msra.mxu0 0.0
        %2600 = vmatprep.subr.mxu0 0.0
        %2601 = vmatpush1.msra.mxu0 %v2471
        %2602 = vmatprep.subr.mxu0 0.0
        %2603 = vmatpush2.msra.mxu0 0.0
        %2604 = vmatprep.subr.mxu0 0.0
        %2605 = vmatpush2.msra.mxu0 0.0
        %2606 = vmatprep.subr.mxu0 0.0
        %2607 = vmatpush2.msra.mxu0 0.0
        %2608 = vmatprep.subr.mxu0 0.0
        %2609 = vmatpush2.msra.mxu0 0.0
        %2610 = vmatprep.subr.mxu0 0.0
        %2611 = vmatpush2.msra.mxu0 0.0
        %2612 = vmatprep.subr.mxu0 0.0
        %2613 = vmatpush2.msra.mxu0 0.0
        %2614 = vmatprep.subr.mxu0 0.0
        %2615 = vmatpush2.msra.mxu0 0.0
        %2616 = vmatprep.subr.mxu0 0.0
        %2617 = vmatpush2.msra.mxu0 0.0
        %2618 = vmatprep.subr.mxu0 0.0
        %2619 = vmatpush2.msra.mxu0 0.0
        %2620 = vmatprep.subr.mxu0 0.0
        %2621 = vmatpush2.msra.mxu0 0.0
        %2622 = vmatprep.subr.mxu0 0.0
        %2623 = vmatpush2.msra.mxu0 0.0
        %2624 = vmatprep.subr.mxu0 0.0
        %2625 = vmatpush2.msra.mxu0 0.0
        %2626 = vmatprep.subr.mxu0 0.0
        %2627 = vmatpush2.msra.mxu0 0.0
        %2628 = vmatprep.subr.mxu0 0.0
        %2629 = vmatpush2.msra.mxu0 0.0
        %2630 = vmatprep.subr.mxu0 0.0
        %2631 = vmatpush2.msra.mxu0 0.0
        %2632 = vmatprep.subr.mxu0 0.0
        %2633 = vmatpush2.msra.mxu0 0.0
        %2634 = vmatprep.mubr.f32.mxu0 0.0
        %2635 = vmatmul.mubr.f32.gmra.mxu0 %v2568
        %v2636 = vpop.f32.mrf.mxu0
        %v2637 = vadd.f32 0.0, %v2636
        %v2638 = vpop.f32.mrf.mxu0
        %2639 = vdwg.mxu0
        %s2640 = scalar_lea.vmem %s12, 128
        %v2641 = vld [vmem:[%s2640] sm:$0xff]
        %v2642 = vld [vmem:[%s2640 + $0x8] sm:$0xff]
        %v2643 = vld [vmem:[%s2640 + $0x10] sm:$0xff]
        %v2644 = vld [vmem:[%s2640 + $0x18] sm:$0xff]
        %v2645 = vld [vmem:[%s2640 + $0x20] sm:$0xff]
        %v2646 = vld [vmem:[%s2640 + $0x28] sm:$0xff]
        %v2647 = vld [vmem:[%s2640 + $0x30] sm:$0xff]
        %v2648 = vld [vmem:[%s2640 + $0x38] sm:$0xff]
        %v2649 = vld [vmem:[%s2640 + $0x40] sm:$0xff]
        %v2650 = vld [vmem:[%s2640 + $0x48] sm:$0xff]
        %v2651 = vld [vmem:[%s2640 + $0x50] sm:$0xff]
        %v2652 = vld [vmem:[%s2640 + $0x58] sm:$0xff]
        %v2653 = vld [vmem:[%s2640 + $0x60] sm:$0xff]
        %v2654 = vld [vmem:[%s2640 + $0x68] sm:$0xff]
        %v2655 = vld [vmem:[%s2640 + $0x70] sm:$0xff]
        %v2656 = vld [vmem:[%s2640 + $0x78] sm:$0xff]
        %2657 = vmatprep.subr.mxu0 0.0
        %2658 = vmatpush1.msra.mxu0 %v2656
        %2659 = vmatprep.subr.mxu0 0.0
        %2660 = vmatpush1.msra.mxu0 %v2655
        %2661 = vmatprep.subr.mxu0 0.0
        %2662 = vmatpush1.msra.mxu0 %v2654
        %2663 = vmatprep.subr.mxu0 0.0
        %2664 = vmatpush1.msra.mxu0 %v2653
        %2665 = vmatprep.subr.mxu0 0.0
        %2666 = vmatpush1.msra.mxu0 %v2652
        %2667 = vmatprep.subr.mxu0 0.0
        %2668 = vmatpush1.msra.mxu0 %v2651
        %2669 = vmatprep.subr.mxu0 0.0
        %2670 = vmatpush1.msra.mxu0 %v2650
        %2671 = vmatprep.subr.mxu0 0.0
        %2672 = vmatpush1.msra.mxu0 %v2649
        %2673 = vmatprep.subr.mxu0 0.0
        %2674 = vmatpush1.msra.mxu0 %v2648
        %2675 = vmatprep.subr.mxu0 0.0
        %2676 = vmatpush1.msra.mxu0 %v2647
        %2677 = vmatprep.subr.mxu0 0.0
        %2678 = vmatpush1.msra.mxu0 %v2646
        %2679 = vmatprep.subr.mxu0 0.0
        %2680 = vmatpush1.msra.mxu0 %v2645
        %2681 = vmatprep.subr.mxu0 0.0
        %2682 = vmatpush1.msra.mxu0 %v2644
        %2683 = vmatprep.subr.mxu0 0.0
        %2684 = vmatpush1.msra.mxu0 %v2643
        %2685 = vmatprep.subr.mxu0 0.0
        %2686 = vmatpush1.msra.mxu0 %v2642
        %2687 = vmatprep.subr.mxu0 0.0
        %2688 = vmatpush1.msra.mxu0 %v2641
        %2689 = vmatprep.subr.mxu0 0.0
        %2690 = vmatpush2.msra.mxu0 0.0
        %2691 = vmatprep.subr.mxu0 0.0
        %2692 = vmatpush2.msra.mxu0 0.0
        %2693 = vmatprep.subr.mxu0 0.0
        %2694 = vmatpush2.msra.mxu0 0.0
        %2695 = vmatprep.subr.mxu0 0.0
        %2696 = vmatpush2.msra.mxu0 0.0
        %2697 = vmatprep.subr.mxu0 0.0
        %2698 = vmatpush2.msra.mxu0 0.0
        %2699 = vmatprep.subr.mxu0 0.0
        %2700 = vmatpush2.msra.mxu0 0.0
        %2701 = vmatprep.subr.mxu0 0.0
        %2702 = vmatpush2.msra.mxu0 0.0
        %2703 = vmatprep.subr.mxu0 0.0
        %2704 = vmatpush2.msra.mxu0 0.0
        %2705 = vmatprep.subr.mxu0 0.0
        %2706 = vmatpush2.msra.mxu0 0.0
        %2707 = vmatprep.subr.mxu0 0.0
        %2708 = vmatpush2.msra.mxu0 0.0
        %2709 = vmatprep.subr.mxu0 0.0
        %2710 = vmatpush2.msra.mxu0 0.0
        %2711 = vmatprep.subr.mxu0 0.0
        %2712 = vmatpush2.msra.mxu0 0.0
        %2713 = vmatprep.subr.mxu0 0.0
        %2714 = vmatpush2.msra.mxu0 0.0
        %2715 = vmatprep.subr.mxu0 0.0
        %2716 = vmatpush2.msra.mxu0 0.0
        %2717 = vmatprep.subr.mxu0 0.0
        %2718 = vmatpush2.msra.mxu0 0.0
        %2719 = vmatprep.subr.mxu0 0.0
        %2720 = vmatpush2.msra.mxu0 0.0
        %2721 = vmatprep.mubr.f32.mxu0 0.0
        %2722 = vmatmul.mubr.f32.gmra.mxu0 %v2637
        %v2723 = vpop.f32.mrf.mxu0
        %v2724 = vadd.f32 0.0, %v2723
        %v2725 = vpop.f32.mrf.mxu0
        %2726 = vdwg.mxu0
        %2727 = vmatprep.subr.mxu0 0.0
        %2728 = vmatpush1.msra.mxu0 %v2564
        %2729 = vmatprep.subr.mxu0 0.0
        %2730 = vmatpush1.msra.mxu0 %v2563
        %2731 = vmatprep.subr.mxu0 0.0
        %2732 = vmatpush1.msra.mxu0 %v2562
        %2733 = vmatprep.subr.mxu0 0.0
        %2734 = vmatpush1.msra.mxu0 %v2561
        %2735 = vmatprep.subr.mxu0 0.0
        %2736 = vmatpush1.msra.mxu0 %v2560
        %2737 = vmatprep.subr.mxu0 0.0
        %2738 = vmatpush1.msra.mxu0 %v2559
        %2739 = vmatprep.subr.mxu0 0.0
        %2740 = vmatpush1.msra.mxu0 %v2558
        %2741 = vmatprep.subr.mxu0 0.0
        %2742 = vmatpush1.msra.mxu0 %v2557
        %2743 = vmatprep.subr.mxu0 0.0
        %2744 = vmatpush1.msra.mxu0 %v2556
        %2745 = vmatprep.subr.mxu0 0.0
        %2746 = vmatpush1.msra.mxu0 %v2555
        %2747 = vmatprep.subr.mxu0 0.0
        %2748 = vmatpush1.msra.mxu0 %v2554
        %2749 = vmatprep.subr.mxu0 0.0
        %2750 = vmatpush1.msra.mxu0 %v2553
        %2751 = vmatprep.subr.mxu0 0.0
        %2752 = vmatpush1.msra.mxu0 %v2552
        %2753 = vmatprep.subr.mxu0 0.0
        %2754 = vmatpush1.msra.mxu0 %v2551
        %2755 = vmatprep.subr.mxu0 0.0
        %2756 = vmatpush1.msra.mxu0 %v2550
        %2757 = vmatprep.subr.mxu0 0.0
        %2758 = vmatpush1.msra.mxu0 %v2549
        %2759 = vmatprep.subr.mxu0 0.0
        %2760 = vmatpush2.msra.mxu0 0.0
        %2761 = vmatprep.subr.mxu0 0.0
        %2762 = vmatpush2.msra.mxu0 0.0
        %2763 = vmatprep.subr.mxu0 0.0
        %2764 = vmatpush2.msra.mxu0 0.0
        %2765 = vmatprep.subr.mxu0 0.0
        %2766 = vmatpush2.msra.mxu0 0.0
        %2767 = vmatprep.subr.mxu0 0.0
        %2768 = vmatpush2.msra.mxu0 0.0
        %2769 = vmatprep.subr.mxu0 0.0
        %2770 = vmatpush2.msra.mxu0 0.0
        %2771 = vmatprep.subr.mxu0 0.0
        %2772 = vmatpush2.msra.mxu0 0.0
        %2773 = vmatprep.subr.mxu0 0.0
        %2774 = vmatpush2.msra.mxu0 0.0
        %2775 = vmatprep.subr.mxu0 0.0
        %2776 = vmatpush2.msra.mxu0 0.0
        %2777 = vmatprep.subr.mxu0 0.0
        %2778 = vmatpush2.msra.mxu0 0.0
        %2779 = vmatprep.subr.mxu0 0.0
        %2780 = vmatpush2.msra.mxu0 0.0
        %2781 = vmatprep.subr.mxu0 0.0
        %2782 = vmatpush2.msra.mxu0 0.0
        %2783 = vmatprep.subr.mxu0 0.0
        %2784 = vmatpush2.msra.mxu0 0.0
        %2785 = vmatprep.subr.mxu0 0.0
        %2786 = vmatpush2.msra.mxu0 0.0
        %2787 = vmatprep.subr.mxu0 0.0
        %2788 = vmatpush2.msra.mxu0 0.0
        %2789 = vmatprep.subr.mxu0 0.0
        %2790 = vmatpush2.msra.mxu0 0.0
        %2791 = vmatprep.mubr.f32.mxu0 0.0
        %2792 = vmatmul.mubr.f32.gmra.mxu0 %v2546
        %v2793 = vpop.f32.mrf.mxu0
        %v2794 = vadd.f32 %v2724, %v2793
        %v2795 = vpop.f32.mrf.mxu0
        %2796 = vdwg.mxu0
        %s2797 = scalar_lea.vmem %s11, 16
        %v2798 = vld [vmem:[%s2797] sm:$0xff]
        %v2800 = vsel %vm2475, %v2798, 0
        %2802 = vmatprep.subr.mxu0 0.0
        %2803 = vmatpush1.msra.mxu0 0.0
        %2804 = vmatprep.subr.mxu0 0.0
        %2805 = vmatpush1.msra.mxu0 0.0
        %2806 = vmatprep.subr.mxu0 0.0
        %2807 = vmatpush1.msra.mxu0 0.0
        %2808 = vmatprep.subr.mxu0 0.0
        %2809 = vmatpush1.msra.mxu0 0.0
        %2810 = vmatprep.subr.mxu0 0.0
        %2811 = vmatpush1.msra.mxu0 0.0
        %2812 = vmatprep.subr.mxu0 0.0
        %2813 = vmatpush1.msra.mxu0 0.0
        %2814 = vmatprep.subr.mxu0 0.0
        %2815 = vmatpush1.msra.mxu0 0.0
        %2816 = vmatprep.subr.mxu0 0.0
        %2817 = vmatpush1.msra.mxu0 0.0
        %2818 = vmatprep.subr.mxu0 0.0
        %2819 = vmatpush1.msra.mxu0 0.0
        %2820 = vmatprep.subr.mxu0 0.0
        %2821 = vmatpush1.msra.mxu0 0.0
        %2822 = vmatprep.subr.mxu0 0.0
        %2823 = vmatpush1.msra.mxu0 0.0
        %2824 = vmatprep.subr.mxu0 0.0
        %2825 = vmatpush1.msra.mxu0 0.0
        %2826 = vmatprep.subr.mxu0 0.0
        %2827 = vmatpush1.msra.mxu0 0.0
        %2828 = vmatprep.subr.mxu0 0.0
        %2829 = vmatpush1.msra.mxu0 0.0
        %2830 = vmatprep.subr.mxu0 0.0
        %2831 = vmatpush1.msra.mxu0 0.0
        %2832 = vmatprep.subr.mxu0 0.0
        %2833 = vmatpush1.msra.mxu0 %v2471
        %2834 = vmatprep.subr.mxu0 0.0
        %2835 = vmatpush2.msra.mxu0 0.0
        %2836 = vmatprep.subr.mxu0 0.0
        %2837 = vmatpush2.msra.mxu0 0.0
        %2838 = vmatprep.subr.mxu0 0.0
        %2839 = vmatpush2.msra.mxu0 0.0
        %2840 = vmatprep.subr.mxu0 0.0
        %2841 = vmatpush2.msra.mxu0 0.0
        %2842 = vmatprep.subr.mxu0 0.0
        %2843 = vmatpush2.msra.mxu0 0.0
        %2844 = vmatprep.subr.mxu0 0.0
        %2845 = vmatpush2.msra.mxu0 0.0
        %2846 = vmatprep.subr.mxu0 0.0
        %2847 = vmatpush2.msra.mxu0 0.0
        %2848 = vmatprep.subr.mxu0 0.0
        %2849 = vmatpush2.msra.mxu0 0.0
        %2850 = vmatprep.subr.mxu0 0.0
        %2851 = vmatpush2.msra.mxu0 0.0
        %2852 = vmatprep.subr.mxu0 0.0
        %2853 = vmatpush2.msra.mxu0 0.0
        %2854 = vmatprep.subr.mxu0 0.0
        %2855 = vmatpush2.msra.mxu0 0.0
        %2856 = vmatprep.subr.mxu0 0.0
        %2857 = vmatpush2.msra.mxu0 0.0
        %2858 = vmatprep.subr.mxu0 0.0
        %2859 = vmatpush2.msra.mxu0 0.0
        %2860 = vmatprep.subr.mxu0 0.0
        %2861 = vmatpush2.msra.mxu0 0.0
        %2862 = vmatprep.subr.mxu0 0.0
        %2863 = vmatpush2.msra.mxu0 0.0
        %2864 = vmatprep.subr.mxu0 0.0
        %2865 = vmatpush2.msra.mxu0 0.0
        %2866 = vmatprep.mubr.f32.mxu0 0.0
        %2867 = vmatmul.mubr.f32.gmra.mxu0 %v2800
        %v2868 = vpop.f32.mrf.mxu0
        %v2869 = vadd.f32 0.0, %v2868
        %v2870 = vpop.f32.mrf.mxu0
        %2871 = vdwg.mxu0
        %s2872 = scalar_lea.vmem %s12, 256
        %v2873 = vld [vmem:[%s2872] sm:$0xff]
        %v2874 = vld [vmem:[%s2872 + $0x8] sm:$0xff]
        %v2875 = vld [vmem:[%s2872 + $0x10] sm:$0xff]
        %v2876 = vld [vmem:[%s2872 + $0x18] sm:$0xff]
        %v2877 = vld [vmem:[%s2872 + $0x20] sm:$0xff]
        %v2878 = vld [vmem:[%s2872 + $0x28] sm:$0xff]
        %v2879 = vld [vmem:[%s2872 + $0x30] sm:$0xff]
        %v2880 = vld [vmem:[%s2872 + $0x38] sm:$0xff]
        %v2881 = vld [vmem:[%s2872 + $0x40] sm:$0xff]
        %v2882 = vld [vmem:[%s2872 + $0x48] sm:$0xff]
        %v2883 = vld [vmem:[%s2872 + $0x50] sm:$0xff]
        %v2884 = vld [vmem:[%s2872 + $0x58] sm:$0xff]
        %v2885 = vld [vmem:[%s2872 + $0x60] sm:$0xff]
        %v2886 = vld [vmem:[%s2872 + $0x68] sm:$0xff]
        %v2887 = vld [vmem:[%s2872 + $0x70] sm:$0xff]
        %v2888 = vld [vmem:[%s2872 + $0x78] sm:$0xff]
        %2889 = vmatprep.subr.mxu0 0.0
        %2890 = vmatpush1.msra.mxu0 %v2888
        %2891 = vmatprep.subr.mxu0 0.0
        %2892 = vmatpush1.msra.mxu0 %v2887
        %2893 = vmatprep.subr.mxu0 0.0
        %2894 = vmatpush1.msra.mxu0 %v2886
        %2895 = vmatprep.subr.mxu0 0.0
        %2896 = vmatpush1.msra.mxu0 %v2885
        %2897 = vmatprep.subr.mxu0 0.0
        %2898 = vmatpush1.msra.mxu0 %v2884
        %2899 = vmatprep.subr.mxu0 0.0
        %2900 = vmatpush1.msra.mxu0 %v2883
        %2901 = vmatprep.subr.mxu0 0.0
        %2902 = vmatpush1.msra.mxu0 %v2882
        %2903 = vmatprep.subr.mxu0 0.0
        %2904 = vmatpush1.msra.mxu0 %v2881
        %2905 = vmatprep.subr.mxu0 0.0
        %2906 = vmatpush1.msra.mxu0 %v2880
        %2907 = vmatprep.subr.mxu0 0.0
        %2908 = vmatpush1.msra.mxu0 %v2879
        %2909 = vmatprep.subr.mxu0 0.0
        %2910 = vmatpush1.msra.mxu0 %v2878
        %2911 = vmatprep.subr.mxu0 0.0
        %2912 = vmatpush1.msra.mxu0 %v2877
        %2913 = vmatprep.subr.mxu0 0.0
        %2914 = vmatpush1.msra.mxu0 %v2876
        %2915 = vmatprep.subr.mxu0 0.0
        %2916 = vmatpush1.msra.mxu0 %v2875
        %2917 = vmatprep.subr.mxu0 0.0
        %2918 = vmatpush1.msra.mxu0 %v2874
        %2919 = vmatprep.subr.mxu0 0.0
        %2920 = vmatpush1.msra.mxu0 %v2873
        %2921 = vmatprep.subr.mxu0 0.0
        %2922 = vmatpush2.msra.mxu0 0.0
        %2923 = vmatprep.subr.mxu0 0.0
        %2924 = vmatpush2.msra.mxu0 0.0
        %2925 = vmatprep.subr.mxu0 0.0
        %2926 = vmatpush2.msra.mxu0 0.0
        %2927 = vmatprep.subr.mxu0 0.0
        %2928 = vmatpush2.msra.mxu0 0.0
        %2929 = vmatprep.subr.mxu0 0.0
        %2930 = vmatpush2.msra.mxu0 0.0
        %2931 = vmatprep.subr.mxu0 0.0
        %2932 = vmatpush2.msra.mxu0 0.0
        %2933 = vmatprep.subr.mxu0 0.0
        %2934 = vmatpush2.msra.mxu0 0.0
        %2935 = vmatprep.subr.mxu0 0.0
        %2936 = vmatpush2.msra.mxu0 0.0
        %2937 = vmatprep.subr.mxu0 0.0
        %2938 = vmatpush2.msra.mxu0 0.0
        %2939 = vmatprep.subr.mxu0 0.0
        %2940 = vmatpush2.msra.mxu0 0.0
        %2941 = vmatprep.subr.mxu0 0.0
        %2942 = vmatpush2.msra.mxu0 0.0
        %2943 = vmatprep.subr.mxu0 0.0
        %2944 = vmatpush2.msra.mxu0 0.0
        %2945 = vmatprep.subr.mxu0 0.0
        %2946 = vmatpush2.msra.mxu0 0.0
        %2947 = vmatprep.subr.mxu0 0.0
        %2948 = vmatpush2.msra.mxu0 0.0
        %2949 = vmatprep.subr.mxu0 0.0
        %2950 = vmatpush2.msra.mxu0 0.0
        %2951 = vmatprep.subr.mxu0 0.0
        %2952 = vmatpush2.msra.mxu0 0.0
        %2953 = vmatprep.mubr.f32.mxu0 0.0
        %2954 = vmatmul.mubr.f32.gmra.mxu0 %v2869
        %v2955 = vpop.f32.mrf.mxu0
        %v2956 = vadd.f32 0.0, %v2955
        %v2957 = vpop.f32.mrf.mxu0
        %2958 = vdwg.mxu0
        %v2959 = vadd.f32 %v2794, %v2956
        %v2960 = vld [vmem:[#allocation14] sm:$0x1]
        %v2962 = vlaneseq
        %v2963 = vshrl.u32 %v2962, 7
        %v2964 = vsub.s32 0, %v2963
        %v2965 = vrot.slane %v2960, %v2964
        %v2967 = vadd.f32 %v2959, %v2965
        %v2968 = vmax.f32 %v2967, 0.0
        %v2969 = vld [vmem:[#allocation16] sm:$0xf]
        %v2970 = vld [vmem:[%s15] sm:$0xff]
        %v2971 = vld [vmem:[%s15 + $0x8] sm:$0xff]
        %v2972 = vld [vmem:[%s15 + $0x10] sm:$0xff]
        %v2973 = vld [vmem:[%s15 + $0x18] sm:$0xff]
        %v2974 = vld [vmem:[%s15 + $0x20] sm:$0xff]
        %v2975 = vld [vmem:[%s15 + $0x28] sm:$0xff]
        %v2976 = vld [vmem:[%s15 + $0x30] sm:$0xff]
        %v2977 = vld [vmem:[%s15 + $0x38] sm:$0xff]
        %v2978 = vld [vmem:[%s15 + $0x40] sm:$0xff]
        %v2979 = vld [vmem:[%s15 + $0x48] sm:$0xff]
        %v2980 = vld [vmem:[%s15 + $0x50] sm:$0xff]
        %v2981 = vld [vmem:[%s15 + $0x58] sm:$0xff]
        %v2982 = vld [vmem:[%s15 + $0x60] sm:$0xff]
        %v2983 = vld [vmem:[%s15 + $0x68] sm:$0xff]
        %v2984 = vld [vmem:[%s15 + $0x70] sm:$0xff]
        %v2985 = vld [vmem:[%s15 + $0x78] sm:$0xff]
        %2986 = vmatprep.subr.mxu0 0.0
        %2987 = vmatpush1.msra.mxu0 %v2985
        %2988 = vmatprep.subr.mxu0 0.0
        %2989 = vmatpush1.msra.mxu0 %v2984
        %2990 = vmatprep.subr.mxu0 0.0
        %2991 = vmatpush1.msra.mxu0 %v2983
        %2992 = vmatprep.subr.mxu0 0.0
        %2993 = vmatpush1.msra.mxu0 %v2982
        %2994 = vmatprep.subr.mxu0 0.0
        %2995 = vmatpush1.msra.mxu0 %v2981
        %2996 = vmatprep.subr.mxu0 0.0
        %2997 = vmatpush1.msra.mxu0 %v2980
        %2998 = vmatprep.subr.mxu0 0.0
        %2999 = vmatpush1.msra.mxu0 %v2979
        %3000 = vmatprep.subr.mxu0 0.0
        %3001 = vmatpush1.msra.mxu0 %v2978
        %3002 = vmatprep.subr.mxu0 0.0
        %3003 = vmatpush1.msra.mxu0 %v2977
        %3004 = vmatprep.subr.mxu0 0.0
        %3005 = vmatpush1.msra.mxu0 %v2976
        %3006 = vmatprep.subr.mxu0 0.0
        %3007 = vmatpush1.msra.mxu0 %v2975
        %3008 = vmatprep.subr.mxu0 0.0
        %3009 = vmatpush1.msra.mxu0 %v2974
        %3010 = vmatprep.subr.mxu0 0.0
        %3011 = vmatpush1.msra.mxu0 %v2973
        %3012 = vmatprep.subr.mxu0 0.0
        %3013 = vmatpush1.msra.mxu0 %v2972
        %3014 = vmatprep.subr.mxu0 0.0
        %3015 = vmatpush1.msra.mxu0 %v2971
        %3016 = vmatprep.subr.mxu0 0.0
        %3017 = vmatpush1.msra.mxu0 %v2970
        %3018 = vmatprep.subr.mxu0 0.0
        %3019 = vmatpush2.msra.mxu0 0.0
        %3020 = vmatprep.subr.mxu0 0.0
        %3021 = vmatpush2.msra.mxu0 0.0
        %3022 = vmatprep.subr.mxu0 0.0
        %3023 = vmatpush2.msra.mxu0 0.0
        %3024 = vmatprep.subr.mxu0 0.0
        %3025 = vmatpush2.msra.mxu0 0.0
        %3026 = vmatprep.subr.mxu0 0.0
        %3027 = vmatpush2.msra.mxu0 0.0
        %3028 = vmatprep.subr.mxu0 0.0
        %3029 = vmatpush2.msra.mxu0 0.0
        %3030 = vmatprep.subr.mxu0 0.0
        %3031 = vmatpush2.msra.mxu0 0.0
        %3032 = vmatprep.subr.mxu0 0.0
        %3033 = vmatpush2.msra.mxu0 0.0
        %3034 = vmatprep.subr.mxu0 0.0
        %3035 = vmatpush2.msra.mxu0 0.0
        %3036 = vmatprep.subr.mxu0 0.0
        %3037 = vmatpush2.msra.mxu0 0.0
        %3038 = vmatprep.subr.mxu0 0.0
        %3039 = vmatpush2.msra.mxu0 0.0
        %3040 = vmatprep.subr.mxu0 0.0
        %3041 = vmatpush2.msra.mxu0 0.0
        %3042 = vmatprep.subr.mxu0 0.0
        %3043 = vmatpush2.msra.mxu0 0.0
        %3044 = vmatprep.subr.mxu0 0.0
        %3045 = vmatpush2.msra.mxu0 0.0
        %3046 = vmatprep.subr.mxu0 0.0
        %3047 = vmatpush2.msra.mxu0 0.0
        %3048 = vmatprep.subr.mxu0 0.0
        %3049 = vmatpush2.msra.mxu0 0.0
        %3050 = vmatprep.mubr.f32.mxu0 0.0
        %3051 = vmatmul.mubr.f32.gmra.mxu0 %v2968
        %v3052 = vpop.f32.mrf.mxu0
        %v3053 = vadd.f32 0.0, %v3052
        %v3054 = vpop.f32.mrf.mxu0
        %3055 = vdwg.mxu0
        %v3057 = vsel %vm2475, %v2969, 0
        %3059 = vmatprep.subr.mxu0 0.0
        %3060 = vmatpush1.msra.mxu0 0.0
        %3061 = vmatprep.subr.mxu0 0.0
        %3062 = vmatpush1.msra.mxu0 0.0
        %3063 = vmatprep.subr.mxu0 0.0
        %3064 = vmatpush1.msra.mxu0 0.0
        %3065 = vmatprep.subr.mxu0 0.0
        %3066 = vmatpush1.msra.mxu0 0.0
        %3067 = vmatprep.subr.mxu0 0.0
        %3068 = vmatpush1.msra.mxu0 0.0
        %3069 = vmatprep.subr.mxu0 0.0
        %3070 = vmatpush1.msra.mxu0 0.0
        %3071 = vmatprep.subr.mxu0 0.0
        %3072 = vmatpush1.msra.mxu0 0.0
        %3073 = vmatprep.subr.mxu0 0.0
        %3074 = vmatpush1.msra.mxu0 0.0
        %3075 = vmatprep.subr.mxu0 0.0
        %3076 = vmatpush1.msra.mxu0 0.0
        %3077 = vmatprep.subr.mxu0 0.0
        %3078 = vmatpush1.msra.mxu0 0.0
        %3079 = vmatprep.subr.mxu0 0.0
        %3080 = vmatpush1.msra.mxu0 0.0
        %3081 = vmatprep.subr.mxu0 0.0
        %3082 = vmatpush1.msra.mxu0 0.0
        %3083 = vmatprep.subr.mxu0 0.0
        %3084 = vmatpush1.msra.mxu0 0.0
        %3085 = vmatprep.subr.mxu0 0.0
        %3086 = vmatpush1.msra.mxu0 0.0
        %3087 = vmatprep.subr.mxu0 0.0
        %3088 = vmatpush1.msra.mxu0 0.0
        %3089 = vmatprep.subr.mxu0 0.0
        %3090 = vmatpush1.msra.mxu0 %v3053
        %3091 = vmatprep.subr.mxu0 0.0
        %3092 = vmatpush2.msra.mxu0 0.0
        %3093 = vmatprep.subr.mxu0 0.0
        %3094 = vmatpush2.msra.mxu0 0.0
        %3095 = vmatprep.subr.mxu0 0.0
        %3096 = vmatpush2.msra.mxu0 0.0
        %3097 = vmatprep.subr.mxu0 0.0
        %3098 = vmatpush2.msra.mxu0 0.0
        %3099 = vmatprep.subr.mxu0 0.0
        %3100 = vmatpush2.msra.mxu0 0.0
        %3101 = vmatprep.subr.mxu0 0.0
        %3102 = vmatpush2.msra.mxu0 0.0
        %3103 = vmatprep.subr.mxu0 0.0
        %3104 = vmatpush2.msra.mxu0 0.0
        %3105 = vmatprep.subr.mxu0 0.0
        %3106 = vmatpush2.msra.mxu0 0.0
        %3107 = vmatprep.subr.mxu0 0.0
        %3108 = vmatpush2.msra.mxu0 0.0
        %3109 = vmatprep.subr.mxu0 0.0
        %3110 = vmatpush2.msra.mxu0 0.0
        %3111 = vmatprep.subr.mxu0 0.0
        %3112 = vmatpush2.msra.mxu0 0.0
        %3113 = vmatprep.subr.mxu0 0.0
        %3114 = vmatpush2.msra.mxu0 0.0
        %3115 = vmatprep.subr.mxu0 0.0
        %3116 = vmatpush2.msra.mxu0 0.0
        %3117 = vmatprep.subr.mxu0 0.0
        %3118 = vmatpush2.msra.mxu0 0.0
        %3119 = vmatprep.subr.mxu0 0.0
        %3120 = vmatpush2.msra.mxu0 0.0
        %3121 = vmatprep.subr.mxu0 0.0
        %3122 = vmatpush2.msra.mxu0 0.0
        %3123 = vmatprep.mubr.f32.mxu0 0.0
        %3124 = vmatmul.mubr.f32.gmra.mxu0 %v3057
        %v3125 = vpop.f32.mrf.mxu0
        %v3126 = vadd.f32 0.0, %v3125
        %v3127 = vpop.f32.mrf.mxu0
        %3128 = vdwg.mxu0
        %v3129 = vld [vmem:[%s16] sm:$0x1]
        %vm3130 = vcmask 31744
        %v3132 = vsel %vm3130, %v3129, 0
        %vm3134 = vcmask 1043456
        %v3136 = vsel %vm3134, %v3126, 0
        %3138 = vmatprep.subr.mxu0 0.0
        %3139 = vmatpush1.msra.mxu0 0.0
        %3140 = vmatprep.subr.mxu0 0.0
        %3141 = vmatpush1.msra.mxu0 0.0
        %3142 = vmatprep.subr.mxu0 0.0
        %3143 = vmatpush1.msra.mxu0 0.0
        %3144 = vmatprep.subr.mxu0 0.0
        %3145 = vmatpush1.msra.mxu0 0.0
        %3146 = vmatprep.subr.mxu0 0.0
        %3147 = vmatpush1.msra.mxu0 0.0
        %3148 = vmatprep.subr.mxu0 0.0
        %3149 = vmatpush1.msra.mxu0 0.0
        %3150 = vmatprep.subr.mxu0 0.0
        %3151 = vmatpush1.msra.mxu0 0.0
        %3152 = vmatprep.subr.mxu0 0.0
        %3153 = vmatpush1.msra.mxu0 0.0
        %3154 = vmatprep.subr.mxu0 0.0
        %3155 = vmatpush1.msra.mxu0 0.0
        %3156 = vmatprep.subr.mxu0 0.0
        %3157 = vmatpush1.msra.mxu0 0.0
        %3158 = vmatprep.subr.mxu0 0.0
        %3159 = vmatpush1.msra.mxu0 0.0
        %3160 = vmatprep.subr.mxu0 0.0
        %3161 = vmatpush1.msra.mxu0 0.0
        %3162 = vmatprep.subr.mxu0 0.0
        %3163 = vmatpush1.msra.mxu0 0.0
        %3164 = vmatprep.subr.mxu0 0.0
        %3165 = vmatpush1.msra.mxu0 0.0
        %3166 = vmatprep.subr.mxu0 0.0
        %3167 = vmatpush1.msra.mxu0 0.0
        %3168 = vmatprep.subr.mxu0 0.0
        %3169 = vmatpush1.msra.mxu0 %v3136
        %3170 = vmatprep.subr.mxu0 0.0
        %3171 = vmatpush2.msra.mxu0 0.0
        %3172 = vmatprep.subr.mxu0 0.0
        %3173 = vmatpush2.msra.mxu0 0.0
        %3174 = vmatprep.subr.mxu0 0.0
        %3175 = vmatpush2.msra.mxu0 0.0
        %3176 = vmatprep.subr.mxu0 0.0
        %3177 = vmatpush2.msra.mxu0 0.0
        %3178 = vmatprep.subr.mxu0 0.0
        %3179 = vmatpush2.msra.mxu0 0.0
        %3180 = vmatprep.subr.mxu0 0.0
        %3181 = vmatpush2.msra.mxu0 0.0
        %3182 = vmatprep.subr.mxu0 0.0
        %3183 = vmatpush2.msra.mxu0 0.0
        %3184 = vmatprep.subr.mxu0 0.0
        %3185 = vmatpush2.msra.mxu0 0.0
        %3186 = vmatprep.subr.mxu0 0.0
        %3187 = vmatpush2.msra.mxu0 0.0
        %3188 = vmatprep.subr.mxu0 0.0
        %3189 = vmatpush2.msra.mxu0 0.0
        %3190 = vmatprep.subr.mxu0 0.0
        %3191 = vmatpush2.msra.mxu0 0.0
        %3192 = vmatprep.subr.mxu0 0.0
        %3193 = vmatpush2.msra.mxu0 0.0
        %3194 = vmatprep.subr.mxu0 0.0
        %3195 = vmatpush2.msra.mxu0 0.0
        %3196 = vmatprep.subr.mxu0 0.0
        %3197 = vmatpush2.msra.mxu0 0.0
        %3198 = vmatprep.subr.mxu0 0.0
        %3199 = vmatpush2.msra.mxu0 0.0
        %3200 = vmatprep.subr.mxu0 0.0
        %3201 = vmatpush2.msra.mxu0 0.0
        %3202 = vmatprep.mubr.f32.mxu0 0.0
        %3203 = vmatmul.mubr.f32.gmra.mxu0 %v3132
        %v3204 = vpop.f32.mrf.mxu0
        %v3205 = vadd.f32 0.0, %v3204
        %v3206 = vpop.f32.mrf.mxu0
        %3207 = vdwg.mxu0
        %v3208 = vld [vmem:[%s17] sm:$0xff]
        %v3209 = vld [vmem:[%s17 + $0x8] sm:$0xff]
        %v3210 = vld [vmem:[%s17 + $0x10] sm:$0xff]
        %v3211 = vld [vmem:[%s17 + $0x18] sm:$0xff]
        %v3212 = vld [vmem:[%s17 + $0x20] sm:$0xff]
        %v3213 = vld [vmem:[%s17 + $0x28] sm:$0xff]
        %v3214 = vld [vmem:[%s17 + $0x30] sm:$0xff]
        %v3215 = vld [vmem:[%s17 + $0x38] sm:$0xff]
        %s3216 = scalar_lea.vmem %s16, 1
        %v3217 = vld [vmem:[%s3216] sm:$0x1]
        %v3219 = vsel %vm3130, %v3217, 0
        %3221 = vmatprep.subr.mxu0 0.0
        %3222 = vmatpush1.msra.mxu0 0.0
        %3223 = vmatprep.subr.mxu0 0.0
        %3224 = vmatpush1.msra.mxu0 0.0
        %3225 = vmatprep.subr.mxu0 0.0
        %3226 = vmatpush1.msra.mxu0 0.0
        %3227 = vmatprep.subr.mxu0 0.0
        %3228 = vmatpush1.msra.mxu0 0.0
        %3229 = vmatprep.subr.mxu0 0.0
        %3230 = vmatpush1.msra.mxu0 0.0
        %3231 = vmatprep.subr.mxu0 0.0
        %3232 = vmatpush1.msra.mxu0 0.0
        %3233 = vmatprep.subr.mxu0 0.0
        %3234 = vmatpush1.msra.mxu0 0.0
        %3235 = vmatprep.subr.mxu0 0.0
        %3236 = vmatpush1.msra.mxu0 0.0
        %3237 = vmatprep.subr.mxu0 0.0
        %3238 = vmatpush1.msra.mxu0 0.0
        %3239 = vmatprep.subr.mxu0 0.0
        %3240 = vmatpush1.msra.mxu0 0.0
        %3241 = vmatprep.subr.mxu0 0.0
        %3242 = vmatpush1.msra.mxu0 0.0
        %3243 = vmatprep.subr.mxu0 0.0
        %3244 = vmatpush1.msra.mxu0 0.0
        %3245 = vmatprep.subr.mxu0 0.0
        %3246 = vmatpush1.msra.mxu0 0.0
        %3247 = vmatprep.subr.mxu0 0.0
        %3248 = vmatpush1.msra.mxu0 0.0
        %3249 = vmatprep.subr.mxu0 0.0
        %3250 = vmatpush1.msra.mxu0 0.0
        %3251 = vmatprep.subr.mxu0 0.0
        %3252 = vmatpush1.msra.mxu0 %v3136
        %3253 = vmatprep.subr.mxu0 0.0
        %3254 = vmatpush2.msra.mxu0 0.0
        %3255 = vmatprep.subr.mxu0 0.0
        %3256 = vmatpush2.msra.mxu0 0.0
        %3257 = vmatprep.subr.mxu0 0.0
        %3258 = vmatpush2.msra.mxu0 0.0
        %3259 = vmatprep.subr.mxu0 0.0
        %3260 = vmatpush2.msra.mxu0 0.0
        %3261 = vmatprep.subr.mxu0 0.0
        %3262 = vmatpush2.msra.mxu0 0.0
        %3263 = vmatprep.subr.mxu0 0.0
        %3264 = vmatpush2.msra.mxu0 0.0
        %3265 = vmatprep.subr.mxu0 0.0
        %3266 = vmatpush2.msra.mxu0 0.0
        %3267 = vmatprep.subr.mxu0 0.0
        %3268 = vmatpush2.msra.mxu0 0.0
        %3269 = vmatprep.subr.mxu0 0.0
        %3270 = vmatpush2.msra.mxu0 0.0
        %3271 = vmatprep.subr.mxu0 0.0
        %3272 = vmatpush2.msra.mxu0 0.0
        %3273 = vmatprep.subr.mxu0 0.0
        %3274 = vmatpush2.msra.mxu0 0.0
        %3275 = vmatprep.subr.mxu0 0.0
        %3276 = vmatpush2.msra.mxu0 0.0
        %3277 = vmatprep.subr.mxu0 0.0
        %3278 = vmatpush2.msra.mxu0 0.0
        %3279 = vmatprep.subr.mxu0 0.0
        %3280 = vmatpush2.msra.mxu0 0.0
        %3281 = vmatprep.subr.mxu0 0.0
        %3282 = vmatpush2.msra.mxu0 0.0
        %3283 = vmatprep.subr.mxu0 0.0
        %3284 = vmatpush2.msra.mxu0 0.0
        %3285 = vmatprep.mubr.f32.mxu0 0.0
        %3286 = vmatmul.mubr.f32.gmra.mxu0 %v3219
        %v3287 = vpop.f32.mrf.mxu0
        %v3288 = vadd.f32 0.0, %v3287
        %v3289 = vpop.f32.mrf.mxu0
        %3290 = vdwg.mxu0
        %s3291 = scalar_lea.vmem %s17, 64
        %v3292 = vld [vmem:[%s3291] sm:$0xff]
        %v3293 = vld [vmem:[%s3291 + $0x8] sm:$0xff]
        %v3294 = vld [vmem:[%s3291 + $0x10] sm:$0xff]
        %v3295 = vld [vmem:[%s3291 + $0x18] sm:$0xff]
        %v3296 = vld [vmem:[%s3291 + $0x20] sm:$0xff]
        %v3297 = vld [vmem:[%s3291 + $0x28] sm:$0xff]
        %v3298 = vld [vmem:[%s3291 + $0x30] sm:$0xff]
        %v3299 = vld [vmem:[%s3291 + $0x38] sm:$0xff]
        %vm3300 = vcmask 523264
        %v3302 = vsel %vm3300, %v3288, 0
        %3304 = vmatprep.subr.mxu0 0.0
        %3305 = vmatpush1.msra.mxu0 0.0
        %3306 = vmatprep.subr.mxu0 0.0
        %3307 = vmatpush1.msra.mxu0 0.0
        %3308 = vmatprep.subr.mxu0 0.0
        %3309 = vmatpush1.msra.mxu0 0.0
        %3310 = vmatprep.subr.mxu0 0.0
        %3311 = vmatpush1.msra.mxu0 0.0
        %3312 = vmatprep.subr.mxu0 0.0
        %3313 = vmatpush1.msra.mxu0 0.0
        %3314 = vmatprep.subr.mxu0 0.0
        %3315 = vmatpush1.msra.mxu0 0.0
        %3316 = vmatprep.subr.mxu0 0.0
        %3317 = vmatpush1.msra.mxu0 0.0
        %3318 = vmatprep.subr.mxu0 0.0
        %3319 = vmatpush1.msra.mxu0 0.0
        %3320 = vmatprep.subr.mxu0 0.0
        %3321 = vmatpush1.msra.mxu0 %v3299
        %3322 = vmatprep.subr.mxu0 0.0
        %3323 = vmatpush1.msra.mxu0 %v3298
        %3324 = vmatprep.subr.mxu0 0.0
        %3325 = vmatpush1.msra.mxu0 %v3297
        %3326 = vmatprep.subr.mxu0 0.0
        %3327 = vmatpush1.msra.mxu0 %v3296
        %3328 = vmatprep.subr.mxu0 0.0
        %3329 = vmatpush1.msra.mxu0 %v3295
        %3330 = vmatprep.subr.mxu0 0.0
        %3331 = vmatpush1.msra.mxu0 %v3294
        %3332 = vmatprep.subr.mxu0 0.0
        %3333 = vmatpush1.msra.mxu0 %v3293
        %3334 = vmatprep.subr.mxu0 0.0
        %3335 = vmatpush1.msra.mxu0 %v3292
        %3336 = vmatprep.subr.mxu0 0.0
        %3337 = vmatpush2.msra.mxu0 0.0
        %3338 = vmatprep.subr.mxu0 0.0
        %3339 = vmatpush2.msra.mxu0 0.0
        %3340 = vmatprep.subr.mxu0 0.0
        %3341 = vmatpush2.msra.mxu0 0.0
        %3342 = vmatprep.subr.mxu0 0.0
        %3343 = vmatpush2.msra.mxu0 0.0
        %3344 = vmatprep.subr.mxu0 0.0
        %3345 = vmatpush2.msra.mxu0 0.0
        %3346 = vmatprep.subr.mxu0 0.0
        %3347 = vmatpush2.msra.mxu0 0.0
        %3348 = vmatprep.subr.mxu0 0.0
        %3349 = vmatpush2.msra.mxu0 0.0
        %3350 = vmatprep.subr.mxu0 0.0
        %3351 = vmatpush2.msra.mxu0 0.0
        %3352 = vmatprep.subr.mxu0 0.0
        %3353 = vmatpush2.msra.mxu0 0.0
        %3354 = vmatprep.subr.mxu0 0.0
        %3355 = vmatpush2.msra.mxu0 0.0
        %3356 = vmatprep.subr.mxu0 0.0
        %3357 = vmatpush2.msra.mxu0 0.0
        %3358 = vmatprep.subr.mxu0 0.0
        %3359 = vmatpush2.msra.mxu0 0.0
        %3360 = vmatprep.subr.mxu0 0.0
        %3361 = vmatpush2.msra.mxu0 0.0
        %3362 = vmatprep.subr.mxu0 0.0
        %3363 = vmatpush2.msra.mxu0 0.0
        %3364 = vmatprep.subr.mxu0 0.0
        %3365 = vmatpush2.msra.mxu0 0.0
        %3366 = vmatprep.subr.mxu0 0.0
        %3367 = vmatpush2.msra.mxu0 0.0
        %3368 = vmatprep.mubr.f32.mxu0 0.0
        %3369 = vmatmul.mubr.f32.gmra.mxu0 %v3302
        %v3370 = vpop.f32.mrf.mxu0
        %v3371 = vadd.f32 0.0, %v3370
        %v3372 = vpop.f32.mrf.mxu0
        %3373 = vdwg.mxu0
        %v3375 = vsel %vm3300, %v3205, 0
        %3377 = vmatprep.subr.mxu0 0.0
        %3378 = vmatpush1.msra.mxu0 0.0
        %3379 = vmatprep.subr.mxu0 0.0
        %3380 = vmatpush1.msra.mxu0 0.0
        %3381 = vmatprep.subr.mxu0 0.0
        %3382 = vmatpush1.msra.mxu0 0.0
        %3383 = vmatprep.subr.mxu0 0.0
        %3384 = vmatpush1.msra.mxu0 0.0
        %3385 = vmatprep.subr.mxu0 0.0
        %3386 = vmatpush1.msra.mxu0 0.0
        %3387 = vmatprep.subr.mxu0 0.0
        %3388 = vmatpush1.msra.mxu0 0.0
        %3389 = vmatprep.subr.mxu0 0.0
        %3390 = vmatpush1.msra.mxu0 0.0
        %3391 = vmatprep.subr.mxu0 0.0
        %3392 = vmatpush1.msra.mxu0 0.0
        %3393 = vmatprep.subr.mxu0 0.0
        %3394 = vmatpush1.msra.mxu0 %v3215
        %3395 = vmatprep.subr.mxu0 0.0
        %3396 = vmatpush1.msra.mxu0 %v3214
        %3397 = vmatprep.subr.mxu0 0.0
        %3398 = vmatpush1.msra.mxu0 %v3213
        %3399 = vmatprep.subr.mxu0 0.0
        %3400 = vmatpush1.msra.mxu0 %v3212
        %3401 = vmatprep.subr.mxu0 0.0
        %3402 = vmatpush1.msra.mxu0 %v3211
        %3403 = vmatprep.subr.mxu0 0.0
        %3404 = vmatpush1.msra.mxu0 %v3210
        %3405 = vmatprep.subr.mxu0 0.0
        %3406 = vmatpush1.msra.mxu0 %v3209
        %3407 = vmatprep.subr.mxu0 0.0
        %3408 = vmatpush1.msra.mxu0 %v3208
        %3409 = vmatprep.subr.mxu0 0.0
        %3410 = vmatpush2.msra.mxu0 0.0
        %3411 = vmatprep.subr.mxu0 0.0
        %3412 = vmatpush2.msra.mxu0 0.0
        %3413 = vmatprep.subr.mxu0 0.0
        %3414 = vmatpush2.msra.mxu0 0.0
        %3415 = vmatprep.subr.mxu0 0.0
        %3416 = vmatpush2.msra.mxu0 0.0
        %3417 = vmatprep.subr.mxu0 0.0
        %3418 = vmatpush2.msra.mxu0 0.0
        %3419 = vmatprep.subr.mxu0 0.0
        %3420 = vmatpush2.msra.mxu0 0.0
        %3421 = vmatprep.subr.mxu0 0.0
        %3422 = vmatpush2.msra.mxu0 0.0
        %3423 = vmatprep.subr.mxu0 0.0
        %3424 = vmatpush2.msra.mxu0 0.0
        %3425 = vmatprep.subr.mxu0 0.0
        %3426 = vmatpush2.msra.mxu0 0.0
        %3427 = vmatprep.subr.mxu0 0.0
        %3428 = vmatpush2.msra.mxu0 0.0
        %3429 = vmatprep.subr.mxu0 0.0
        %3430 = vmatpush2.msra.mxu0 0.0
        %3431 = vmatprep.subr.mxu0 0.0
        %3432 = vmatpush2.msra.mxu0 0.0
        %3433 = vmatprep.subr.mxu0 0.0
        %3434 = vmatpush2.msra.mxu0 0.0
        %3435 = vmatprep.subr.mxu0 0.0
        %3436 = vmatpush2.msra.mxu0 0.0
        %3437 = vmatprep.subr.mxu0 0.0
        %3438 = vmatpush2.msra.mxu0 0.0
        %3439 = vmatprep.subr.mxu0 0.0
        %3440 = vmatpush2.msra.mxu0 0.0
        %3441 = vmatprep.mubr.f32.mxu0 0.0
        %3442 = vmatmul.mubr.f32.gmra.mxu0 %v3375
        %v3443 = vpop.f32.mrf.mxu0
        %v3444 = vadd.f32 %v3371, %v3443
        %v3445 = vpop.f32.mrf.mxu0
        %3446 = vdwg.mxu0
        %s3447 = scalar_lea.vmem %s16, 2
        %v3448 = vld [vmem:[%s3447] sm:$0x1]
        %v3450 = vsel %vm3130, %v3448, 0
        %3452 = vmatprep.subr.mxu0 0.0
        %3453 = vmatpush1.msra.mxu0 0.0
        %3454 = vmatprep.subr.mxu0 0.0
        %3455 = vmatpush1.msra.mxu0 0.0
        %3456 = vmatprep.subr.mxu0 0.0
        %3457 = vmatpush1.msra.mxu0 0.0
        %3458 = vmatprep.subr.mxu0 0.0
        %3459 = vmatpush1.msra.mxu0 0.0
        %3460 = vmatprep.subr.mxu0 0.0
        %3461 = vmatpush1.msra.mxu0 0.0
        %3462 = vmatprep.subr.mxu0 0.0
        %3463 = vmatpush1.msra.mxu0 0.0
        %3464 = vmatprep.subr.mxu0 0.0
        %3465 = vmatpush1.msra.mxu0 0.0
        %3466 = vmatprep.subr.mxu0 0.0
        %3467 = vmatpush1.msra.mxu0 0.0
        %3468 = vmatprep.subr.mxu0 0.0
        %3469 = vmatpush1.msra.mxu0 0.0
        %3470 = vmatprep.subr.mxu0 0.0
        %3471 = vmatpush1.msra.mxu0 0.0
        %3472 = vmatprep.subr.mxu0 0.0
        %3473 = vmatpush1.msra.mxu0 0.0
        %3474 = vmatprep.subr.mxu0 0.0
        %3475 = vmatpush1.msra.mxu0 0.0
        %3476 = vmatprep.subr.mxu0 0.0
        %3477 = vmatpush1.msra.mxu0 0.0
        %3478 = vmatprep.subr.mxu0 0.0
        %3479 = vmatpush1.msra.mxu0 0.0
        %3480 = vmatprep.subr.mxu0 0.0
        %3481 = vmatpush1.msra.mxu0 0.0
        %3482 = vmatprep.subr.mxu0 0.0
        %3483 = vmatpush1.msra.mxu0 %v3136
        %3484 = vmatprep.subr.mxu0 0.0
        %3485 = vmatpush2.msra.mxu0 0.0
        %3486 = vmatprep.subr.mxu0 0.0
        %3487 = vmatpush2.msra.mxu0 0.0
        %3488 = vmatprep.subr.mxu0 0.0
        %3489 = vmatpush2.msra.mxu0 0.0
        %3490 = vmatprep.subr.mxu0 0.0
        %3491 = vmatpush2.msra.mxu0 0.0
        %3492 = vmatprep.subr.mxu0 0.0
        %3493 = vmatpush2.msra.mxu0 0.0
        %3494 = vmatprep.subr.mxu0 0.0
        %3495 = vmatpush2.msra.mxu0 0.0
        %3496 = vmatprep.subr.mxu0 0.0
        %3497 = vmatpush2.msra.mxu0 0.0
        %3498 = vmatprep.subr.mxu0 0.0
        %3499 = vmatpush2.msra.mxu0 0.0
        %3500 = vmatprep.subr.mxu0 0.0
        %3501 = vmatpush2.msra.mxu0 0.0
        %3502 = vmatprep.subr.mxu0 0.0
        %3503 = vmatpush2.msra.mxu0 0.0
        %3504 = vmatprep.subr.mxu0 0.0
        %3505 = vmatpush2.msra.mxu0 0.0
        %3506 = vmatprep.subr.mxu0 0.0
        %3507 = vmatpush2.msra.mxu0 0.0
        %3508 = vmatprep.subr.mxu0 0.0
        %3509 = vmatpush2.msra.mxu0 0.0
        %3510 = vmatprep.subr.mxu0 0.0
        %3511 = vmatpush2.msra.mxu0 0.0
        %3512 = vmatprep.subr.mxu0 0.0
        %3513 = vmatpush2.msra.mxu0 0.0
        %3514 = vmatprep.subr.mxu0 0.0
        %3515 = vmatpush2.msra.mxu0 0.0
        %3516 = vmatprep.mubr.f32.mxu0 0.0
        %3517 = vmatmul.mubr.f32.gmra.mxu0 %v3450
        %v3518 = vpop.f32.mrf.mxu0
        %v3519 = vadd.f32 0.0, %v3518
        %v3520 = vpop.f32.mrf.mxu0
        %3521 = vdwg.mxu0
        %s3522 = scalar_lea.vmem %s17, 128
        %v3523 = vld [vmem:[%s3522] sm:$0xff]
        %v3524 = vld [vmem:[%s3522 + $0x8] sm:$0xff]
        %v3525 = vld [vmem:[%s3522 + $0x10] sm:$0xff]
        %v3526 = vld [vmem:[%s3522 + $0x18] sm:$0xff]
        %v3527 = vld [vmem:[%s3522 + $0x20] sm:$0xff]
        %v3528 = vld [vmem:[%s3522 + $0x28] sm:$0xff]
        %v3529 = vld [vmem:[%s3522 + $0x30] sm:$0xff]
        %v3530 = vld [vmem:[%s3522 + $0x38] sm:$0xff]
        %v3532 = vsel %vm3300, %v3519, 0
        %3534 = vmatprep.subr.mxu0 0.0
        %3535 = vmatpush1.msra.mxu0 0.0
        %3536 = vmatprep.subr.mxu0 0.0
        %3537 = vmatpush1.msra.mxu0 0.0
        %3538 = vmatprep.subr.mxu0 0.0
        %3539 = vmatpush1.msra.mxu0 0.0
        %3540 = vmatprep.subr.mxu0 0.0
        %3541 = vmatpush1.msra.mxu0 0.0
        %3542 = vmatprep.subr.mxu0 0.0
        %3543 = vmatpush1.msra.mxu0 0.0
        %3544 = vmatprep.subr.mxu0 0.0
        %3545 = vmatpush1.msra.mxu0 0.0
        %3546 = vmatprep.subr.mxu0 0.0
        %3547 = vmatpush1.msra.mxu0 0.0
        %3548 = vmatprep.subr.mxu0 0.0
        %3549 = vmatpush1.msra.mxu0 0.0
        %3550 = vmatprep.subr.mxu0 0.0
        %3551 = vmatpush1.msra.mxu0 %v3530
        %3552 = vmatprep.subr.mxu0 0.0
        %3553 = vmatpush1.msra.mxu0 %v3529
        %3554 = vmatprep.subr.mxu0 0.0
        %3555 = vmatpush1.msra.mxu0 %v3528
        %3556 = vmatprep.subr.mxu0 0.0
        %3557 = vmatpush1.msra.mxu0 %v3527
        %3558 = vmatprep.subr.mxu0 0.0
        %3559 = vmatpush1.msra.mxu0 %v3526
        %3560 = vmatprep.subr.mxu0 0.0
        %3561 = vmatpush1.msra.mxu0 %v3525
        %3562 = vmatprep.subr.mxu0 0.0
        %3563 = vmatpush1.msra.mxu0 %v3524
        %3564 = vmatprep.subr.mxu0 0.0
        %3565 = vmatpush1.msra.mxu0 %v3523
        %3566 = vmatprep.subr.mxu0 0.0
        %3567 = vmatpush2.msra.mxu0 0.0
        %3568 = vmatprep.subr.mxu0 0.0
        %3569 = vmatpush2.msra.mxu0 0.0
        %3570 = vmatprep.subr.mxu0 0.0
        %3571 = vmatpush2.msra.mxu0 0.0
        %3572 = vmatprep.subr.mxu0 0.0
        %3573 = vmatpush2.msra.mxu0 0.0
        %3574 = vmatprep.subr.mxu0 0.0
        %3575 = vmatpush2.msra.mxu0 0.0
        %3576 = vmatprep.subr.mxu0 0.0
        %3577 = vmatpush2.msra.mxu0 0.0
        %3578 = vmatprep.subr.mxu0 0.0
        %3579 = vmatpush2.msra.mxu0 0.0
        %3580 = vmatprep.subr.mxu0 0.0
        %3581 = vmatpush2.msra.mxu0 0.0
        %3582 = vmatprep.subr.mxu0 0.0
        %3583 = vmatpush2.msra.mxu0 0.0
        %3584 = vmatprep.subr.mxu0 0.0
        %3585 = vmatpush2.msra.mxu0 0.0
        %3586 = vmatprep.subr.mxu0 0.0
        %3587 = vmatpush2.msra.mxu0 0.0
        %3588 = vmatprep.subr.mxu0 0.0
        %3589 = vmatpush2.msra.mxu0 0.0
        %3590 = vmatprep.subr.mxu0 0.0
        %3591 = vmatpush2.msra.mxu0 0.0
        %3592 = vmatprep.subr.mxu0 0.0
        %3593 = vmatpush2.msra.mxu0 0.0
        %3594 = vmatprep.subr.mxu0 0.0
        %3595 = vmatpush2.msra.mxu0 0.0
        %3596 = vmatprep.subr.mxu0 0.0
        %3597 = vmatpush2.msra.mxu0 0.0
        %3598 = vmatprep.mubr.f32.mxu0 0.0
        %3599 = vmatmul.mubr.f32.gmra.mxu0 %v3532
        %v3600 = vpop.f32.mrf.mxu0
        %v3601 = vadd.f32 0.0, %v3600
        %v3602 = vpop.f32.mrf.mxu0
        %3603 = vdwg.mxu0
        %v3604 = vadd.f32 %v3444, %v3601
        %s3605 = scalar_lea.vmem %s16, 3
        %v3606 = vld [vmem:[%s3605] sm:$0x1]
        %v3608 = vsel %vm3130, %v3606, 0
        %3610 = vmatprep.subr.mxu0 0.0
        %3611 = vmatpush1.msra.mxu0 0.0
        %3612 = vmatprep.subr.mxu0 0.0
        %3613 = vmatpush1.msra.mxu0 0.0
        %3614 = vmatprep.subr.mxu0 0.0
        %3615 = vmatpush1.msra.mxu0 0.0
        %3616 = vmatprep.subr.mxu0 0.0
        %3617 = vmatpush1.msra.mxu0 0.0
        %3618 = vmatprep.subr.mxu0 0.0
        %3619 = vmatpush1.msra.mxu0 0.0
        %3620 = vmatprep.subr.mxu0 0.0
        %3621 = vmatpush1.msra.mxu0 0.0
        %3622 = vmatprep.subr.mxu0 0.0
        %3623 = vmatpush1.msra.mxu0 0.0
        %3624 = vmatprep.subr.mxu0 0.0
        %3625 = vmatpush1.msra.mxu0 0.0
        %3626 = vmatprep.subr.mxu0 0.0
        %3627 = vmatpush1.msra.mxu0 0.0
        %3628 = vmatprep.subr.mxu0 0.0
        %3629 = vmatpush1.msra.mxu0 0.0
        %3630 = vmatprep.subr.mxu0 0.0
        %3631 = vmatpush1.msra.mxu0 0.0
        %3632 = vmatprep.subr.mxu0 0.0
        %3633 = vmatpush1.msra.mxu0 0.0
        %3634 = vmatprep.subr.mxu0 0.0
        %3635 = vmatpush1.msra.mxu0 0.0
        %3636 = vmatprep.subr.mxu0 0.0
        %3637 = vmatpush1.msra.mxu0 0.0
        %3638 = vmatprep.subr.mxu0 0.0
        %3639 = vmatpush1.msra.mxu0 0.0
        %3640 = vmatprep.subr.mxu0 0.0
        %3641 = vmatpush1.msra.mxu0 %v3136
        %3642 = vmatprep.subr.mxu0 0.0
        %3643 = vmatpush2.msra.mxu0 0.0
        %3644 = vmatprep.subr.mxu0 0.0
        %3645 = vmatpush2.msra.mxu0 0.0
        %3646 = vmatprep.subr.mxu0 0.0
        %3647 = vmatpush2.msra.mxu0 0.0
        %3648 = vmatprep.subr.mxu0 0.0
        %3649 = vmatpush2.msra.mxu0 0.0
        %3650 = vmatprep.subr.mxu0 0.0
        %3651 = vmatpush2.msra.mxu0 0.0
        %3652 = vmatprep.subr.mxu0 0.0
        %3653 = vmatpush2.msra.mxu0 0.0
        %3654 = vmatprep.subr.mxu0 0.0
        %3655 = vmatpush2.msra.mxu0 0.0
        %3656 = vmatprep.subr.mxu0 0.0
        %3657 = vmatpush2.msra.mxu0 0.0
        %3658 = vmatprep.subr.mxu0 0.0
        %3659 = vmatpush2.msra.mxu0 0.0
        %3660 = vmatprep.subr.mxu0 0.0
        %3661 = vmatpush2.msra.mxu0 0.0
        %3662 = vmatprep.subr.mxu0 0.0
        %3663 = vmatpush2.msra.mxu0 0.0
        %3664 = vmatprep.subr.mxu0 0.0
        %3665 = vmatpush2.msra.mxu0 0.0
        %3666 = vmatprep.subr.mxu0 0.0
        %3667 = vmatpush2.msra.mxu0 0.0
        %3668 = vmatprep.subr.mxu0 0.0
        %3669 = vmatpush2.msra.mxu0 0.0
        %3670 = vmatprep.subr.mxu0 0.0
        %3671 = vmatpush2.msra.mxu0 0.0
        %3672 = vmatprep.subr.mxu0 0.0
        %3673 = vmatpush2.msra.mxu0 0.0
        %3674 = vmatprep.mubr.f32.mxu0 0.0
        %3675 = vmatmul.mubr.f32.gmra.mxu0 %v3608
        %v3676 = vpop.f32.mrf.mxu0
        %v3677 = vadd.f32 0.0, %v3676
        %v3678 = vpop.f32.mrf.mxu0
        %3679 = vdwg.mxu0
        %s3680 = scalar_lea.vmem %s17, 192
        %v3681 = vld [vmem:[%s3680] sm:$0xff]
        %v3682 = vld [vmem:[%s3680 + $0x8] sm:$0xff]
        %v3683 = vld [vmem:[%s3680 + $0x10] sm:$0xff]
        %v3684 = vld [vmem:[%s3680 + $0x18] sm:$0xff]
        %v3685 = vld [vmem:[%s3680 + $0x20] sm:$0xff]
        %v3686 = vld [vmem:[%s3680 + $0x28] sm:$0xff]
        %v3687 = vld [vmem:[%s3680 + $0x30] sm:$0xff]
        %v3688 = vld [vmem:[%s3680 + $0x38] sm:$0xff]
        %v3690 = vsel %vm3300, %v3677, 0
        %3692 = vmatprep.subr.mxu0 0.0
        %3693 = vmatpush1.msra.mxu0 0.0
        %3694 = vmatprep.subr.mxu0 0.0
        %3695 = vmatpush1.msra.mxu0 0.0
        %3696 = vmatprep.subr.mxu0 0.0
        %3697 = vmatpush1.msra.mxu0 0.0
        %3698 = vmatprep.subr.mxu0 0.0
        %3699 = vmatpush1.msra.mxu0 0.0
        %3700 = vmatprep.subr.mxu0 0.0
        %3701 = vmatpush1.msra.mxu0 0.0
        %3702 = vmatprep.subr.mxu0 0.0
        %3703 = vmatpush1.msra.mxu0 0.0
        %3704 = vmatprep.subr.mxu0 0.0
        %3705 = vmatpush1.msra.mxu0 0.0
        %3706 = vmatprep.subr.mxu0 0.0
        %3707 = vmatpush1.msra.mxu0 0.0
        %3708 = vmatprep.subr.mxu0 0.0
        %3709 = vmatpush1.msra.mxu0 %v3688
        %3710 = vmatprep.subr.mxu0 0.0
        %3711 = vmatpush1.msra.mxu0 %v3687
        %3712 = vmatprep.subr.mxu0 0.0
        %3713 = vmatpush1.msra.mxu0 %v3686
        %3714 = vmatprep.subr.mxu0 0.0
        %3715 = vmatpush1.msra.mxu0 %v3685
        %3716 = vmatprep.subr.mxu0 0.0
        %3717 = vmatpush1.msra.mxu0 %v3684
        %3718 = vmatprep.subr.mxu0 0.0
        %3719 = vmatpush1.msra.mxu0 %v3683
        %3720 = vmatprep.subr.mxu0 0.0
        %3721 = vmatpush1.msra.mxu0 %v3682
        %3722 = vmatprep.subr.mxu0 0.0
        %3723 = vmatpush1.msra.mxu0 %v3681
        %3724 = vmatprep.subr.mxu0 0.0
        %3725 = vmatpush2.msra.mxu0 0.0
        %3726 = vmatprep.subr.mxu0 0.0
        %3727 = vmatpush2.msra.mxu0 0.0
        %3728 = vmatprep.subr.mxu0 0.0
        %3729 = vmatpush2.msra.mxu0 0.0
        %3730 = vmatprep.subr.mxu0 0.0
        %3731 = vmatpush2.msra.mxu0 0.0
        %3732 = vmatprep.subr.mxu0 0.0
        %3733 = vmatpush2.msra.mxu0 0.0
        %3734 = vmatprep.subr.mxu0 0.0
        %3735 = vmatpush2.msra.mxu0 0.0
        %3736 = vmatprep.subr.mxu0 0.0
        %3737 = vmatpush2.msra.mxu0 0.0
        %3738 = vmatprep.subr.mxu0 0.0
        %3739 = vmatpush2.msra.mxu0 0.0
        %3740 = vmatprep.subr.mxu0 0.0
        %3741 = vmatpush2.msra.mxu0 0.0
        %3742 = vmatprep.subr.mxu0 0.0
        %3743 = vmatpush2.msra.mxu0 0.0
        %3744 = vmatprep.subr.mxu0 0.0
        %3745 = vmatpush2.msra.mxu0 0.0
        %3746 = vmatprep.subr.mxu0 0.0
        %3747 = vmatpush2.msra.mxu0 0.0
        %3748 = vmatprep.subr.mxu0 0.0
        %3749 = vmatpush2.msra.mxu0 0.0
        %3750 = vmatprep.subr.mxu0 0.0
        %3751 = vmatpush2.msra.mxu0 0.0
        %3752 = vmatprep.subr.mxu0 0.0
        %3753 = vmatpush2.msra.mxu0 0.0
        %3754 = vmatprep.subr.mxu0 0.0
        %3755 = vmatpush2.msra.mxu0 0.0
        %3756 = vmatprep.mubr.f32.mxu0 0.0
        %3757 = vmatmul.mubr.f32.gmra.mxu0 %v3690
        %v3758 = vpop.f32.mrf.mxu0
        %v3759 = vadd.f32 0.0, %v3758
        %v3760 = vpop.f32.mrf.mxu0
        %3761 = vdwg.mxu0
        %v3762 = vadd.f32 %v3604, %v3759
        %v3763 = vld [vmem:[%s18] sm:$0x1]
        %v3764 = vadd.f32 %v3762, %v3763
        %v3765 = vmax.f32 %v3764, 0.0
        %v3766 = vld [vmem:[%s19] sm:$0xff]
        %v3767 = vld [vmem:[%s19 + $0x8] sm:$0xff]
        %v3768 = vld [vmem:[%s20] sm:$0x1]
        %v3770 = vsel %vm1690, %v3765, 0
        %3772 = vmatprep.subr.mxu0 0.0
        %3773 = vmatpush1.msra.mxu0 0.0
        %3774 = vmatprep.subr.mxu0 0.0
        %3775 = vmatpush1.msra.mxu0 0.0
        %3776 = vmatprep.subr.mxu0 0.0
        %3777 = vmatpush1.msra.mxu0 0.0
        %3778 = vmatprep.subr.mxu0 0.0
        %3779 = vmatpush1.msra.mxu0 0.0
        %3780 = vmatprep.subr.mxu0 0.0
        %3781 = vmatpush1.msra.mxu0 0.0
        %3782 = vmatprep.subr.mxu0 0.0
        %3783 = vmatpush1.msra.mxu0 0.0
        %3784 = vmatprep.subr.mxu0 0.0
        %3785 = vmatpush1.msra.mxu0 0.0
        %3786 = vmatprep.subr.mxu0 0.0
        %3787 = vmatpush1.msra.mxu0 0.0
        %3788 = vmatprep.subr.mxu0 0.0
        %3789 = vmatpush1.msra.mxu0 0.0
        %3790 = vmatprep.subr.mxu0 0.0
        %3791 = vmatpush1.msra.mxu0 0.0
        %3792 = vmatprep.subr.mxu0 0.0
        %3793 = vmatpush1.msra.mxu0 0.0
        %3794 = vmatprep.subr.mxu0 0.0
        %3795 = vmatpush1.msra.mxu0 0.0
        %3796 = vmatprep.subr.mxu0 0.0
        %3797 = vmatpush1.msra.mxu0 0.0
        %3798 = vmatprep.subr.mxu0 0.0
        %3799 = vmatpush1.msra.mxu0 0.0
        %3800 = vmatprep.subr.mxu0 0.0
        %3801 = vmatpush1.msra.mxu0 %v3767
        %3802 = vmatprep.subr.mxu0 0.0
        %3803 = vmatpush1.msra.mxu0 %v3766
        %3804 = vmatprep.subr.mxu0 0.0
        %3805 = vmatpush2.msra.mxu0 0.0
        %3806 = vmatprep.subr.mxu0 0.0
        %3807 = vmatpush2.msra.mxu0 0.0
        %3808 = vmatprep.subr.mxu0 0.0
        %3809 = vmatpush2.msra.mxu0 0.0
        %3810 = vmatprep.subr.mxu0 0.0
        %3811 = vmatpush2.msra.mxu0 0.0
        %3812 = vmatprep.subr.mxu0 0.0
        %3813 = vmatpush2.msra.mxu0 0.0
        %3814 = vmatprep.subr.mxu0 0.0
        %3815 = vmatpush2.msra.mxu0 0.0
        %3816 = vmatprep.subr.mxu0 0.0
        %3817 = vmatpush2.msra.mxu0 0.0
        %3818 = vmatprep.subr.mxu0 0.0
        %3819 = vmatpush2.msra.mxu0 0.0
        %3820 = vmatprep.subr.mxu0 0.0
        %3821 = vmatpush2.msra.mxu0 0.0
        %3822 = vmatprep.subr.mxu0 0.0
        %3823 = vmatpush2.msra.mxu0 0.0
        %3824 = vmatprep.subr.mxu0 0.0
        %3825 = vmatpush2.msra.mxu0 0.0
        %3826 = vmatprep.subr.mxu0 0.0
        %3827 = vmatpush2.msra.mxu0 0.0
        %3828 = vmatprep.subr.mxu0 0.0
        %3829 = vmatpush2.msra.mxu0 0.0
        %3830 = vmatprep.subr.mxu0 0.0
        %3831 = vmatpush2.msra.mxu0 0.0
        %3832 = vmatprep.subr.mxu0 0.0
        %3833 = vmatpush2.msra.mxu0 0.0
        %3834 = vmatprep.subr.mxu0 0.0
        %3835 = vmatpush2.msra.mxu0 0.0
        %3836 = vmatprep.mubr.f32.mxu0 0.0
        %3837 = vmatmul.mubr.f32.gmra.mxu0 %v3770
        %v3838 = vpop.f32.mrf.mxu0
        %v3839 = vadd.f32 %v3768, %v3838
        %v3840 = vpop.f32.mrf.mxu0
        %3841 = vdwg.mxu0
        %vm3842 = vcmask 81920
        %3843 = vst.msk [vmem:[%s771] sm:$0x1] %vm3842, %v3839
        %s3844 = sand.u32 %s494, 1
        %s3845 = scalar_lea.sflag [#allocation4], %s3844
        %s3846 = sand.u32 %s494, 1
        %s3847 = scalar_lea.vmem [#allocation17], %s3846
        // Predicated region
        $region141: #{soli_cnn_taskb1_forward_prepared.1} parent=103 // pred_check
          %p3848 = pneg %p504
        $region142: #{soli_cnn_taskb1_forward_prepared.1} parent=103 // pred_check_branch
          %3850 = sbr.rel (%p3848) target = $region144
        $region143: #{soli_cnn_taskb1_forward_prepared.1} parent=103 // pred_region
          %s3852 = ssub.s32 16, 16
          %3853 = vsyncadd %s3845, %s3852
          %s3854 = smul.addr %s40, 16
          %s3855 = scalar_lea.hbm %s21, %s3854
          %s3857 = sshll.u32 %s3847, 4
          %s3858 = int_to_ptr.vmem [resolvable:$true] %s3857
          %3860 = dma.vmem_to_hbm [thread:$0]  %s3858, 16, %s3855, %s3845
        $region144: #{soli_cnn_taskb1_forward_prepared.1} parent=103 // pred_fallthru
          _
      $region104: #{soli_cnn_taskb1_forward_prepared.1} parent=5 // pred_fallthru
        _
      %p3861 = scmp.le.s32.totalorder 2, %s35
      // Predicated region
      $region145: #{soli_cnn_taskb1_forward_prepared.1} parent=5 // pred_check
        %p3862 = pneg %p3861
      $region146: #{soli_cnn_taskb1_forward_prepared.1} parent=5 // pred_check_branch
        %3864 = sbr.rel (%p3862) target = $region148
      $region147: #{soli_cnn_taskb1_forward_prepared.1} parent=5 // pred_region
        %s3865 = ssub.s32 %s35, 2
        // Predicated region
        $region149: #{soli_cnn_taskb1_forward_prepared.1} parent=147 // pred_check
          %p3866 = pneg %p510
        $region150: #{soli_cnn_taskb1_forward_prepared.1} parent=147 // pred_check_branch
          %3868 = sbr.rel (%p3866) target = $region152
        $region151: #{soli_cnn_taskb1_forward_prepared.1} parent=147 // pred_region
          %s3869 = sand.u32 %s495, 1
          %s3870 = scalar_lea.sflag [#allocation4], %s3869
          %s3871 = sand.u32 %s495, 1
          %s3872 = scalar_lea.vmem [#allocation17], %s3871
          %3873 = dma.done %s3870, 16
        $region152: #{soli_cnn_taskb1_forward_prepared.1} parent=147 // pred_fallthru
          _
      $region148: #{soli_cnn_taskb1_forward_prepared.1} parent=5 // pred_fallthru
        _
    $region6: #{soli_cnn_taskb1_forward_prepared.1} parent=1 // loop_footer
      %s39 = sadd.s32 1, %s35
    $region7: #{soli_cnn_taskb1_forward_prepared.1} parent=1 // loop_footer_branch
      %34 = sbr.rel target = $region3
    $region8: #{soli_cnn_taskb1_forward_prepared.1} parent=1 // loop_exit
      _
    %3874 = vsyncpa [#allocation3], 1
    %s3875 = scalar_lea.sflag [#allocation3], 1
    %3876 = vsyncpa %s3875, 1
    %3877 = vsyncpa [#allocation6], 1
    %3878 = vsyncpa [#allocation9], 1
    %3879 = vsyncpa [#allocation12], 1
    %3880 = vsyncpa [#allocation15], 1
    %3881 = vsyncpa [#allocation4], 1
    %s3882 = scalar_lea.sflag [#allocation4], 1
    %3883 = vsyncpa %s3882, 1

</llo_original>
